<compile_context>
chip_gen: v6e
topology: v6e:2x2x1
jax: 0.10.0
libtpu: 0.0.40
codegen_flags: <defaults>
</compile_context>

<pallas_src>
import functools

import jax
import jax.numpy as jnp
from jax import lax
from jax.experimental import pallas as pl
from jax.experimental.pallas import tpu as pltpu

COND_DIM = 6        # BioMime uses 6 physiological conditions
LATENT = 16         # cfg.Model.Generator.Latent (synthetic choice)
HIDDEN = 128        # hidden width of the synthetic conditional decoder
FEAT_PAD = 128      # lane-padded width of the packed [conds | z | 0] input
OUT_T, OUT_C = 320, 96
OUT_DIM = OUT_T * OUT_C          # 30720 = 240 * 128
TILE_N = 7680                    # 60 * 128 lanes per tile -> 4 grid steps


# ----------------------------------------------------------------------------
# Fused kernel: cond scaling + latent injection + 2-layer MLP encoder
#               (recomputed per step from resident blocks) + tiled projection.
# ----------------------------------------------------------------------------
def _fused_kernel(x_ref, w1_ref, b1_ref, w2_ref, b2_ref, w3_ref, b3_ref,
                  o_ref):
    # x_ref: (n_mus, FEAT_PAD) = [conds | z | zero-pad], resident block.
    # Scale ONLY the conds lanes: conds * 0.5 + 0.5; z / padding untouched.
    lane = lax.broadcasted_iota(jnp.int32, x_ref.shape, 1)
    x = x_ref[...]
    x = jnp.where(lane < COND_DIM, x * 0.5 + 0.5, x)

    # Tiny encoder (2 matmuls of ~(8,128)@(128,128)): cheaper to recompute
    # per tile than to round-trip h through HBM / a second pallas_call.
    h1 = jnp.maximum(
        jnp.dot(x, w1_ref[...], preferred_element_type=jnp.float32)
        + b1_ref[...],
        0.0,
    )
    h2 = jnp.maximum(
        jnp.dot(h1, w2_ref[...], preferred_element_type=jnp.float32)
        + b2_ref[...],
        0.0,
    )

    # Hot path: bf16 x bf16 -> f32 accumulate on the MXU; bias + tanh in f32.
    o_ref[...] = jnp.tanh(
        jnp.dot(h2.astype(jnp.bfloat16), w3_ref[...],
                preferred_element_type=jnp.float32)
        + b3_ref[...]
    )


# ----------------------------------------------------------------------------
# Parameters
# ----------------------------------------------------------------------------
def init_params(key):
    """Deterministic synthetic generator parameters."""
    k1, k2, k3, k4 = jax.random.split(key, 4)
    # Combined first-layer weight over the packed [conds | z | pad] input.
    # Rows beyond COND_DIM+LATENT are zero, so lane padding contributes
    # nothing (and the '+0.5' shift is confined to real conds lanes anyway).
    w1 = jnp.zeros((FEAT_PAD, HIDDEN), jnp.float32)
    w1 = w1.at[:COND_DIM, :].set(
        jax.random.normal(k1, (COND_DIM, HIDDEN), jnp.float32) * 0.2)
    w1 = w1.at[COND_DIM:COND_DIM + LATENT, :].set(
        jax.random.normal(k2, (LATENT, HIDDEN), jnp.float32) * 0.2)
    b1 = jnp.zeros((1, HIDDEN), jnp.float32)
    w2 = jax.random.normal(k3, (HIDDEN, HIDDEN), jnp.float32) * 0.1
    b2 = jnp.zeros((1, HIDDEN), jnp.float32)
    # Projection weight stored in bf16: the decoder is HBM-bound, so halving
    # the streamed bytes ~halves wall time; accumulation stays f32.
    w3 = (jax.random.normal(k4, (HIDDEN, OUT_DIM), jnp.float32) * 0.05
          ).astype(jnp.bfloat16)
    b3 = jnp.zeros((1, OUT_DIM), jnp.float32)
    return dict(w1=w1, b1=b1, w2=w2, b2=b2, w3=w3, b3=b3)


# ----------------------------------------------------------------------------
# Wrapper
# ----------------------------------------------------------------------------
@functools.partial(jax.jit, static_argnames=())
def biomime_forward(conds, z, params):
    """Equivalent of BiomimeMuapGenerator.forward.

    Args:
      conds: (n_mus, COND_DIM) float32 conditioning inputs.
      z:     (1, LATENT) float32 fixed latent (repeated over n_mus).
    Returns:
      (n_mus, 320, 96) float32 MUAPs.
    """
    n_mus = conds.shape[0]

    # Pack [conds | z | zero-pad] into one lane-aligned slab (tiny: n_mus x
    # 512 B). Keeps the encoder's first matmul a single aligned MXU op.
    x = jnp.zeros((n_mus, FEAT_PAD), jnp.float32)
    x = x.at[:, :COND_DIM].set(conds.astype(jnp.float32))
    x = x.at[:, COND_DIM:COND_DIM + LATENT].set(
        jnp.broadcast_to(z.astype(jnp.float32), (n_mus, LATENT)))

    n_tiles = OUT_DIM // TILE_N    # 4 -> even split across v7x's 2 TCs

    # Mem-bound cost hint so XLA overlaps the packing / reshape glue.
    w3_bytes = HIDDEN * OUT_DIM * 2          # bf16 weight stream
    out_bytes = n_mus * OUT_DIM * 4          # f32 output
    small_bytes = (n_mus * FEAT_PAD + 2 * HIDDEN * HIDDEN + OUT_DIM) * 4
    cost = pl.CostEstimate(
        flops=2 * n_mus * HIDDEN * OUT_DIM
              + n_tiles * 2 * n_mus * (FEAT_PAD + HIDDEN) * HIDDEN,
        transcendentals=n_mus * OUT_DIM,
        bytes_accessed=w3_bytes + out_bytes + small_bytes,
    )

    flat = pl.pallas_call(
        _fused_kernel,
        out_shape=jax.ShapeDtypeStruct((n_mus, OUT_DIM), jnp.float32),
        grid_spec=pltpu.PrefetchScalarGridSpec(
            num_scalar_prefetch=0,
            grid=(n_tiles,),
            in_specs=[
                pl.BlockSpec((n_mus, FEAT_PAD), lambda j: (0, 0)),   # x
                pl.BlockSpec((FEAT_PAD, HIDDEN), lambda j: (0, 0)),  # w1
                pl.BlockSpec((1, HIDDEN), lambda j: (0, 0)),         # b1
                pl.BlockSpec((HIDDEN, HIDDEN), lambda j: (0, 0)),    # w2
                pl.BlockSpec((1, HIDDEN), lambda j: (0, 0)),         # b2
                pl.BlockSpec((HIDDEN, TILE_N), lambda j: (0, j)),    # w3 (bf16)
                pl.BlockSpec((1, TILE_N), lambda j: (0, j)),         # b3
            ],
            out_specs=pl.BlockSpec((n_mus, TILE_N), lambda j: (0, j)),
        ),
        compiler_params=pltpu.CompilerParams(
            dimension_semantics=("parallel",)),
        cost_estimate=cost,
    )(x, params["w1"], params["b1"], params["w2"], params["b2"],
      params["w3"], params["b3"])

    # Row-major reshape, matching torch .reshape semantics. Kept for the
    # (n_mus, 320, 96) module contract; if a downstream consumer can take the
    # lane-dense (n_mus, 30720) layout, skip this to avoid the 96-lane
    # relayout.
    return flat.reshape(n_mus, OUT_T, OUT_C)


# ----------------------------------------------------------------------------
# Main
# ----------------------------------------------------------------------------
if __name__ == "__main__":
    key = jax.random.PRNGKey(0)
    k_cond, k_z, k_param = jax.random.split(key, 3)

    n_mus = 8
    # Conditioning inputs in [-1, 1]; the module maps them to [0, 1] internally.
    conds = jax.random.uniform(k_cond, (n_mus, COND_DIM),
                               minval=-1.0, maxval=1.0, dtype=jnp.float32)
    # Fixed latent zi ~ N(0, 1), shape (1, Latent), repeated over n_mus.
    zi = jax.random.normal(k_z, (1, LATENT), jnp.float32)

    params = init_params(k_param)

    muaps = biomime_forward(conds, zi, params)
    muaps = jax.block_until_ready(muaps)

    assert muaps.shape == (n_mus, 320, 96), muaps.shape
    assert muaps.dtype == jnp.float32
    assert bool(jnp.all(jnp.isfinite(muaps)))

    print("KERNEL_OK")
</pallas_src>

<mosaic_0001>
module attributes {stable_mosaic.version = 11 : i64} {
  func.func @_fused_kernel(%arg0: i32, %arg1: memref<8x128xf32, #tpu.memory_space<vmem>>, %arg2: memref<128x128xf32, #tpu.memory_space<vmem>>, %arg3: memref<1x128xf32, #tpu.memory_space<vmem>>, %arg4: memref<128x128xf32, #tpu.memory_space<vmem>>, %arg5: memref<1x128xf32, #tpu.memory_space<vmem>>, %arg6: memref<128x7680xbf16, #tpu.memory_space<vmem>>, %arg7: memref<1x7680xf32, #tpu.memory_space<vmem>>, %arg8: memref<8x7680xf32, #tpu.memory_space<vmem>>) attributes {dimension_semantics = [#tpu.dimension_semantics<parallel>], iteration_bounds = array<i64: 4>, scalar_prefetch = 0 : i64, scratch_operands = 0 : i64, tpu.core_type = #tpu.core_type<tc>, window_params = [{pipeline_mode = #tpu.pipeline_mode<synchronous>, transform_indices = @transform_0, window_bounds = array<i64: 8, 128>}, {pipeline_mode = #tpu.pipeline_mode<synchronous>, transform_indices = @transform_1, window_bounds = array<i64: 128, 128>}, {pipeline_mode = #tpu.pipeline_mode<synchronous>, transform_indices = @transform_2, window_bounds = array<i64: 1, 128>}, {pipeline_mode = #tpu.pipeline_mode<synchronous>, transform_indices = @transform_3, window_bounds = array<i64: 128, 128>}, {pipeline_mode = #tpu.pipeline_mode<synchronous>, transform_indices = @transform_4, window_bounds = array<i64: 1, 128>}, {transform_indices = @transform_5, window_bounds = array<i64: 128, 7680>}, {transform_indices = @transform_6, window_bounds = array<i64: 1, 7680>}, {transform_indices = @transform_7, window_bounds = array<i64: 8, 7680>}]} {
    %0 = tpu.iota {dimensions = array<i32: 1>} : vector<8x128xi32>
    %c0 = arith.constant 0 : index
    %c0_0 = arith.constant 0 : index
    %1 = vector.load %arg1[%c0, %c0_0] : memref<8x128xf32, #tpu.memory_space<vmem>>, vector<8x128xf32>
    %c6_i32 = arith.constant 6 : i32
    %2 = vector.broadcast %c6_i32 : i32 to vector<8x128xi32>
    %3 = arith.cmpi slt, %0, %2 : vector<8x128xi32>
    %cst = arith.constant 5.000000e-01 : f32
    %4 = vector.broadcast %cst : f32 to vector<8x128xf32>
    %5 = arith.mulf %1, %4 : vector<8x128xf32>
    %cst_1 = arith.constant 5.000000e-01 : f32
    %6 = vector.broadcast %cst_1 : f32 to vector<8x128xf32>
    %7 = arith.addf %5, %6 : vector<8x128xf32>
    %8 = arith.select %3, %7, %1 : vector<8x128xi1>, vector<8x128xf32>
    %c0_2 = arith.constant 0 : index
    %c0_3 = arith.constant 0 : index
    %9 = vector.load %arg2[%c0_2, %c0_3] : memref<128x128xf32, #tpu.memory_space<vmem>>, vector<128x128xf32>
    %cst_4 = arith.constant dense<0.000000e+00> : vector<8x128xf32>
    %10 = tpu.matmul %8, %9, %cst_4 {dimension_numbers = #tpu.dot_dimension_numbers<[1], [0], [0], [1], [0, 0, 1, 1], [], []>} : vector<8x128xf32>, vector<128x128xf32>, vector<8x128xf32> -> vector<8x128xf32>
    %c0_5 = arith.constant 0 : index
    %c0_6 = arith.constant 0 : index
    %11 = vector.load %arg3[%c0_5, %c0_6] : memref<1x128xf32, #tpu.memory_space<vmem>>, vector<1x128xf32>
    %12 = vector.broadcast %11 : vector<1x128xf32> to vector<8x128xf32>
    %13 = arith.addf %10, %12 : vector<8x128xf32>
    %cst_7 = arith.constant 0.000000e+00 : f32
    %14 = vector.broadcast %cst_7 : f32 to vector<8x128xf32>
    %15 = arith.maximumf %13, %14 : vector<8x128xf32>
    %c0_8 = arith.constant 0 : index
    %c0_9 = arith.constant 0 : index
    %16 = vector.load %arg4[%c0_8, %c0_9] : memref<128x128xf32, #tpu.memory_space<vmem>>, vector<128x128xf32>
    %cst_10 = arith.constant dense<0.000000e+00> : vector<8x128xf32>
    %17 = tpu.matmul %15, %16, %cst_10 {dimension_numbers = #tpu.dot_dimension_numbers<[1], [0], [0], [1], [0, 0, 1, 1], [], []>} : vector<8x128xf32>, vector<128x128xf32>, vector<8x128xf32> -> vector<8x128xf32>
    %c0_11 = arith.constant 0 : index
    %c0_12 = arith.constant 0 : index
    %18 = vector.load %arg5[%c0_11, %c0_12] : memref<1x128xf32, #tpu.memory_space<vmem>>, vector<1x128xf32>
    %19 = vector.broadcast %18 : vector<1x128xf32> to vector<8x128xf32>
    %20 = arith.addf %17, %19 : vector<8x128xf32>
    %cst_13 = arith.constant 0.000000e+00 : f32
    %21 = vector.broadcast %cst_13 : f32 to vector<8x128xf32>
    %22 = arith.maximumf %20, %21 : vector<8x128xf32>
    %23 = arith.truncf %22 : vector<8x128xf32> to vector<8x128xbf16>
    %c0_14 = arith.constant 0 : index
    %c0_15 = arith.constant 0 : index
    %24 = vector.load %arg6[%c0_14, %c0_15] : memref<128x7680xbf16, #tpu.memory_space<vmem>>, vector<128x7680xbf16>
    %cst_16 = arith.constant dense<0.000000e+00> : vector<8x7680xf32>
    %25 = tpu.matmul %23, %24, %cst_16 {dimension_numbers = #tpu.dot_dimension_numbers<[1], [0], [0], [1], [0, 0, 1, 1], [], []>} : vector<8x128xbf16>, vector<128x7680xbf16>, vector<8x7680xf32> -> vector<8x7680xf32>
    %c0_17 = arith.constant 0 : index
    %c0_18 = arith.constant 0 : index
    %26 = vector.load %arg7[%c0_17, %c0_18] : memref<1x7680xf32, #tpu.memory_space<vmem>>, vector<1x7680xf32>
    %27 = vector.broadcast %26 : vector<1x7680xf32> to vector<8x7680xf32>
    %28 = arith.addf %25, %27 : vector<8x7680xf32>
    %29 = math.tanh %28 : vector<8x7680xf32>
    %c0_19 = arith.constant 0 : index
    %c0_20 = arith.constant 0 : index
    %30 = vector.load %arg8[%c0_19, %c0_20] : memref<8x7680xf32, #tpu.memory_space<vmem>>, vector<8x7680xf32>
    tpu.vector_store %arg8[%c0_19, %c0_20], %29 {strides = array<i32>} : memref<8x7680xf32, #tpu.memory_space<vmem>>, vector<8x7680xf32>,
    return
  }
  func.func @transform_0(%arg0: i32) -> (i32, i32) {
    %c0_i32 = arith.constant 0 : i32
    %c0_i32_0 = arith.constant 0 : i32
    %c0_i32_1 = arith.constant 0 : i32
    return %c0_i32, %c0_i32_0 : i32, i32
  }
  func.func @transform_1(%arg0: i32) -> (i32, i32) {
    %c0_i32 = arith.constant 0 : i32
    %c0_i32_0 = arith.constant 0 : i32
    %c0_i32_1 = arith.constant 0 : i32
    return %c0_i32, %c0_i32_0 : i32, i32
  }
  func.func @transform_2(%arg0: i32) -> (i32, i32) {
    %c0_i32 = arith.constant 0 : i32
    %c0_i32_0 = arith.constant 0 : i32
    %c0_i32_1 = arith.constant 0 : i32
    return %c0_i32, %c0_i32_0 : i32, i32
  }
  func.func @transform_3(%arg0: i32) -> (i32, i32) {
    %c0_i32 = arith.constant 0 : i32
    %c0_i32_0 = arith.constant 0 : i32
    %c0_i32_1 = arith.constant 0 : i32
    return %c0_i32, %c0_i32_0 : i32, i32
  }
  func.func @transform_4(%arg0: i32) -> (i32, i32) {
    %c0_i32 = arith.constant 0 : i32
    %c0_i32_0 = arith.constant 0 : i32
    %c0_i32_1 = arith.constant 0 : i32
    return %c0_i32, %c0_i32_0 : i32, i32
  }
  func.func @transform_5(%arg0: i32) -> (i32, i32) {
    %c0_i32 = arith.constant 0 : i32
    %c0_i32_0 = arith.constant 0 : i32
    return %c0_i32, %arg0 : i32, i32
  }
  func.func @transform_6(%arg0: i32) -> (i32, i32) {
    %c0_i32 = arith.constant 0 : i32
    %c0_i32_0 = arith.constant 0 : i32
    return %c0_i32, %arg0 : i32, i32
  }
  func.func @transform_7(%arg0: i32) -> (i32, i32) {
    %c0_i32 = arith.constant 0 : i32
    %c0_i32_0 = arith.constant 0 : i32
    return %c0_i32, %arg0 : i32, i32
  }
}

</mosaic_0001>

<llo_original>
// kernel: biomime_forward.1
$region0: #{biomime_forward.1}
  #allocation0 [shape = 'u32[]', space=smem, size = 0x4, offset = 0x4, fixed_abs, tag = 'smem constant byte address 0x4 - core index']
  #allocation1 [shape = 'u32[144,128]{1,0:T(1,128)}', space=vmem, size = 0x12000, scoped, tag = 'internal scratch']
  %s0 = inlined_call_operand.vmem [shape: f32[8,128], index: 0, kind: input, shape index: {}]
  %s1 = inlined_call_operand.hbm [shape: f32[128,128], index: 1, kind: input, shape index: {}]
  %s2 = inlined_call_operand.hbm [shape: f32[1,128], index: 2, kind: input, shape index: {}]
  %s3 = inlined_call_operand.hbm [shape: f32[128,128], index: 3, kind: input, shape index: {}]
  %s4 = inlined_call_operand.hbm [shape: f32[1,128], index: 4, kind: input, shape index: {}]
  %s5 = inlined_call_operand.hbm [shape: bf16[128,30720], index: 5, kind: input, shape index: {}]
  %s6 = inlined_call_operand.hbm [shape: f32[1,30720], index: 6, kind: input, shape index: {}]
  %s7 = inlined_call_operand.vmem [shape: f32[8,30720], index: 7, kind: output, shape index: {}]
  %s8 = sld [smem:[#allocation0]]
  $region85: #{biomime_forward.1} parent=0
    _
  %s10 = ssub.s32 1, %s8
  %s11 = scalar_select 0, %s10, %s8
  $region1: #{biomime_forward.1} parent=0
    #allocation2 [shape = 'u8[65536]{0}', space=vmem, size = 0x10000, scoped, tag = 'input window, operand 1, single buffered']
    #allocation3 [shape = 's32[2]{0}', space=sflag, size = 0x8, scoped, tag = 'scoped memory for biomime_forward.1']
    #allocation4 [shape = 'u8[512]{0}', space=vmem, size = 0x400, scoped, tag = 'input window, operand 2, single buffered']
    #allocation5 [shape = 's32[1]{0}', space=sflag, size = 0x4, scoped, tag = 'scoped memory for biomime_forward.1']
    #allocation6 [shape = 'u8[65536]{0}', space=vmem, size = 0x10000, scoped, tag = 'input window, operand 3, single buffered']
    #allocation7 [shape = 'u8[512]{0}', space=vmem, size = 0x400, scoped, tag = 'input window, operand 4, single buffered']
    #allocation8 [shape = 's32[1]{0}', space=sflag, size = 0x4, scoped, tag = 'scoped memory for biomime_forward.1']
    #allocation9 [shape = 'u8[3932160]{0}', space=vmem, size = 0x3c0000, scoped, tag = 'input window, operand 5']
    #allocation10 [shape = 'u8[61440]{0}', space=vmem, size = 0xf000, scoped, tag = 'input window, operand 6']
    %12 = vsyncpa [#allocation3], 0
    %13 = vsyncpa [#allocation5], 0
    %14 = vsyncpa [#allocation8], 0
    loop: start=0, step=1, limit=6
    $region2: #{biomime_forward.1} parent=1 // loop_pre_header
      _
    $region3: #{biomime_forward.1} parent=1 // loop_header
      %s16 = sphi 0, %s20
      %p17 = scmp.ge.s32.totalorder %s16, 6
      %s24 = sphi 0, %s24
      %s26 = sphi 0, %s24
      %s27 = sphi 0, %s26
      %s41 = sphi 0, %s27
      %s45 = sphi 0, %s45
      %s47 = sphi 0, %s45
      %s48 = sphi 0, %s47
      %s62 = sphi 0, %s48
      %s66 = sphi 0, %s66
      %s68 = sphi 0, %s66
      %s69 = sphi 0, %s68
      %s83 = sphi 0, %s69
      %s87 = sphi 0, %s87
      %s89 = sphi 0, %s87
      %s90 = sphi 0, %s89
      %s104 = sphi 0, %s90
      %s108 = sphi 0, %s108
      %s110 = sphi 0, %s108
      %s111 = sphi 0, %s110
      %s125 = sphi 0, %s111
      %s131 = sphi 0, %s133
      %s134 = sphi 0, %s131
      %s135 = sphi 0, %s134
      %s151 = sphi 0, %s135
      %s157 = sphi 0, %s159
      %s160 = sphi 0, %s157
      %s161 = sphi 0, %s160
      %s177 = sphi 0, %s161
      %s183 = sphi 0, %s185
      %s186 = sphi 0, %s183
      %s187 = sphi 0, %s186
      %s203 = sphi 0, %s187
    $region4: #{biomime_forward.1} parent=1 // loop_header_branch
      %19 = sbr.rel (%p17) target = $region8
    $region5: #{biomime_forward.1} parent=1 // loop_body
      %s21 = ssub.s32 %s16, 1
      %s22 = ssub.s32 %s16, 2
      %s23 = sadd.s32 %s16, 1
      %s25 = sadd.s32 %s24, 1
      %p28 = scmp.eq.s32.totalorder %s16, 3
      %p29 = scmp.ne.s32.totalorder %s24, %s26
      %p30 = scmp.eq.s32.totalorder %s16, 0
      %p31 = por %p29, %p30
      %p32 = scmp.ne.s32.totalorder %s24, %s26
      %p33 = scmp.eq.s32.totalorder %s21, 3
      %p34 = por %p32, %p33
      %p35 = scmp.ne.s32.totalorder %s26, %s27
      %p36 = scmp.eq.s32.totalorder %s21, 0
      %p37 = por %p35, %p36
      %p38 = scmp.ne.s32.totalorder %s26, %s27
      %p39 = scmp.eq.s32.totalorder %s22, 3
      %p40 = por %p38, %p39
      %p42 = scmp.ne.s32.totalorder %s27, %s41
      %p43 = scmp.eq.s32.totalorder %s22, 0
      %p44 = por %p42, %p43
      %s46 = sadd.s32 %s45, 1
      %p49 = scmp.eq.s32.totalorder %s16, 3
      %p50 = scmp.ne.s32.totalorder %s45, %s47
      %p51 = scmp.eq.s32.totalorder %s16, 0
      %p52 = por %p50, %p51
      %p53 = scmp.ne.s32.totalorder %s45, %s47
      %p54 = scmp.eq.s32.totalorder %s21, 3
      %p55 = por %p53, %p54
      %p56 = scmp.ne.s32.totalorder %s47, %s48
      %p57 = scmp.eq.s32.totalorder %s21, 0
      %p58 = por %p56, %p57
      %p59 = scmp.ne.s32.totalorder %s47, %s48
      %p60 = scmp.eq.s32.totalorder %s22, 3
      %p61 = por %p59, %p60
      %p63 = scmp.ne.s32.totalorder %s48, %s62
      %p64 = scmp.eq.s32.totalorder %s22, 0
      %p65 = por %p63, %p64
      %s67 = sadd.s32 %s66, 1
      %p70 = scmp.eq.s32.totalorder %s16, 3
      %p71 = scmp.ne.s32.totalorder %s66, %s68
      %p72 = scmp.eq.s32.totalorder %s16, 0
      %p73 = por %p71, %p72
      %p74 = scmp.ne.s32.totalorder %s66, %s68
      %p75 = scmp.eq.s32.totalorder %s21, 3
      %p76 = por %p74, %p75
      %p77 = scmp.ne.s32.totalorder %s68, %s69
      %p78 = scmp.eq.s32.totalorder %s21, 0
      %p79 = por %p77, %p78
      %p80 = scmp.ne.s32.totalorder %s68, %s69
      %p81 = scmp.eq.s32.totalorder %s22, 3
      %p82 = por %p80, %p81
      %p84 = scmp.ne.s32.totalorder %s69, %s83
      %p85 = scmp.eq.s32.totalorder %s22, 0
      %p86 = por %p84, %p85
      %s88 = sadd.s32 %s87, 1
      %p91 = scmp.eq.s32.totalorder %s16, 3
      %p92 = scmp.ne.s32.totalorder %s87, %s89
      %p93 = scmp.eq.s32.totalorder %s16, 0
      %p94 = por %p92, %p93
      %p95 = scmp.ne.s32.totalorder %s87, %s89
      %p96 = scmp.eq.s32.totalorder %s21, 3
      %p97 = por %p95, %p96
      %p98 = scmp.ne.s32.totalorder %s89, %s90
      %p99 = scmp.eq.s32.totalorder %s21, 0
      %p100 = por %p98, %p99
      %p101 = scmp.ne.s32.totalorder %s89, %s90
      %p102 = scmp.eq.s32.totalorder %s22, 3
      %p103 = por %p101, %p102
      %p105 = scmp.ne.s32.totalorder %s90, %s104
      %p106 = scmp.eq.s32.totalorder %s22, 0
      %p107 = por %p105, %p106
      %s109 = sadd.s32 %s108, 1
      %p112 = scmp.eq.s32.totalorder %s16, 3
      %p113 = scmp.ne.s32.totalorder %s108, %s110
      %p114 = scmp.eq.s32.totalorder %s16, 0
      %p115 = por %p113, %p114
      %p116 = scmp.ne.s32.totalorder %s108, %s110
      %p117 = scmp.eq.s32.totalorder %s21, 3
      %p118 = por %p116, %p117
      %p119 = scmp.ne.s32.totalorder %s110, %s111
      %p120 = scmp.eq.s32.totalorder %s21, 0
      %p121 = por %p119, %p120
      %p122 = scmp.ne.s32.totalorder %s110, %s111
      %p123 = scmp.eq.s32.totalorder %s22, 3
      %p124 = por %p122, %p123
      %p126 = scmp.ne.s32.totalorder %s111, %s125
      %p127 = scmp.eq.s32.totalorder %s22, 0
      %p128 = por %p126, %p127
      %s129 = ssub.s32 %s16, %s23
      %p130 = scmp.eq.s32.totalorder %s129, 0
      %s132 = sadd.s32 %s131, 1
      %s133 = scalar_select %p130, %s131, %s132
      %p136 = pneg %p130
      %p137 = scmp.eq.s32.totalorder %s16, 3
      %p138 = por %p136, %p137
      %p139 = scmp.ne.s32.totalorder %s131, %s134
      %p140 = scmp.eq.s32.totalorder %s16, 0
      %p141 = por %p139, %p140
      %p142 = scmp.ne.s32.totalorder %s131, %s134
      %p143 = scmp.eq.s32.totalorder %s21, 3
      %p144 = por %p142, %p143
      %p145 = scmp.ne.s32.totalorder %s134, %s135
      %p146 = scmp.eq.s32.totalorder %s21, 0
      %p147 = por %p145, %p146
      %p148 = scmp.ne.s32.totalorder %s134, %s135
      %p149 = scmp.eq.s32.totalorder %s22, 3
      %p150 = por %p148, %p149
      %p152 = scmp.ne.s32.totalorder %s135, %s151
      %p153 = scmp.eq.s32.totalorder %s22, 0
      %p154 = por %p152, %p153
      %s155 = ssub.s32 %s16, %s23
      %p156 = scmp.eq.s32.totalorder %s155, 0
      %s158 = sadd.s32 %s157, 1
      %s159 = scalar_select %p156, %s157, %s158
      %p162 = pneg %p156
      %p163 = scmp.eq.s32.totalorder %s16, 3
      %p164 = por %p162, %p163
      %p165 = scmp.ne.s32.totalorder %s157, %s160
      %p166 = scmp.eq.s32.totalorder %s16, 0
      %p167 = por %p165, %p166
      %p168 = scmp.ne.s32.totalorder %s157, %s160
      %p169 = scmp.eq.s32.totalorder %s21, 3
      %p170 = por %p168, %p169
      %p171 = scmp.ne.s32.totalorder %s160, %s161
      %p172 = scmp.eq.s32.totalorder %s21, 0
      %p173 = por %p171, %p172
      %p174 = scmp.ne.s32.totalorder %s160, %s161
      %p175 = scmp.eq.s32.totalorder %s22, 3
      %p176 = por %p174, %p175
      %p178 = scmp.ne.s32.totalorder %s161, %s177
      %p179 = scmp.eq.s32.totalorder %s22, 0
      %p180 = por %p178, %p179
      %s181 = ssub.s32 %s16, %s23
      %p182 = scmp.eq.s32.totalorder %s181, 0
      %s184 = sadd.s32 %s183, 1
      %s185 = scalar_select %p182, %s183, %s184
      %p188 = pneg %p182
      %p189 = scmp.eq.s32.totalorder %s16, 3
      %p190 = por %p188, %p189
      %p191 = scmp.ne.s32.totalorder %s183, %s186
      %p192 = scmp.eq.s32.totalorder %s16, 0
      %p193 = por %p191, %p192
      %p194 = scmp.ne.s32.totalorder %s183, %s186
      %p195 = scmp.eq.s32.totalorder %s21, 3
      %p196 = por %p194, %p195
      %p197 = scmp.ne.s32.totalorder %s186, %s187
      %p198 = scmp.eq.s32.totalorder %s21, 0
      %p199 = por %p197, %p198
      %p200 = scmp.ne.s32.totalorder %s186, %s187
      %p201 = scmp.eq.s32.totalorder %s22, 3
      %p202 = por %p200, %p201
      %p204 = scmp.ne.s32.totalorder %s187, %s203
      %p205 = scmp.eq.s32.totalorder %s22, 0
      %p206 = por %p204, %p205
      %p207 = scmp.le.s32.totalorder 1, %s16
      %p208 = scmp.lt.s32.totalorder %s16, 5
      %p209 = pnand %p207, %p208
      %p210 = pneg %p209
      // Predicated region
      $region9: #{biomime_forward.1} parent=5 // pred_check
        _
      $region10: #{biomime_forward.1} parent=5 // pred_check_branch
        %212 = sbr.rel (%p209) target = $region12
      $region11: #{biomime_forward.1} parent=5 // pred_region
        %s213 = ssub.s32 %s16, 1
        // Predicated region
        $region13: #{biomime_forward.1} parent=11 // pred_check
          %p214 = pneg %p37
        $region14: #{biomime_forward.1} parent=11 // pred_check_branch
          %216 = sbr.rel (%p214) target = $region16
        $region15: #{biomime_forward.1} parent=11 // pred_region
          _
        $region16: #{biomime_forward.1} parent=11 // pred_fallthru
          _
        // Predicated region
        $region17: #{biomime_forward.1} parent=11 // pred_check
          %p217 = pneg %p58
        $region18: #{biomime_forward.1} parent=11 // pred_check_branch
          %219 = sbr.rel (%p217) target = $region20
        $region19: #{biomime_forward.1} parent=11 // pred_region
          %s221 = ssub.s32 2048, 2048
          %222 = vsyncadd [#allocation3], %s221
          %s223 = sshll.u32 [#allocation2], 4
          %s224 = int_to_ptr.vmem [resolvable:$true] %s223
          %229 = dma.hbm_to_vmem [thread:$0]  %s1, 2048, %s224, [#allocation3], 128, 128, 8
        $region20: #{biomime_forward.1} parent=11 // pred_fallthru
          _
        // Predicated region
        $region21: #{biomime_forward.1} parent=11 // pred_check
          %p230 = pneg %p79
        $region22: #{biomime_forward.1} parent=11 // pred_check_branch
          %232 = sbr.rel (%p230) target = $region24
        $region23: #{biomime_forward.1} parent=11 // pred_region
          %s234 = ssub.s32 16, 16
          %235 = vsyncadd [#allocation5], %s234
          %s237 = sshll.u32 [#allocation4], 4
          %s238 = int_to_ptr.vmem [resolvable:$true] %s237
          %240 = dma.hbm_to_vmem [thread:$0]  %s2, 16, %s238, [#allocation5]
        $region24: #{biomime_forward.1} parent=11 // pred_fallthru
          _
        // Predicated region
        $region25: #{biomime_forward.1} parent=11 // pred_check
          %p241 = pneg %p100
        $region26: #{biomime_forward.1} parent=11 // pred_check_branch
          %243 = sbr.rel (%p241) target = $region28
        $region27: #{biomime_forward.1} parent=11 // pred_region
          %s245 = ssub.s32 2048, 2048
          %246 = vsyncadd [#allocation5], %s245
          %s247 = sshll.u32 [#allocation6], 4
          %s248 = int_to_ptr.vmem [resolvable:$true] %s247
          %253 = dma.hbm_to_vmem [thread:$0]  %s3, 2048, %s248, [#allocation5], 128, 128, 8
        $region28: #{biomime_forward.1} parent=11 // pred_fallthru
          _
        // Predicated region
        $region29: #{biomime_forward.1} parent=11 // pred_check
          %p254 = pneg %p121
        $region30: #{biomime_forward.1} parent=11 // pred_check_branch
          %256 = sbr.rel (%p254) target = $region32
        $region31: #{biomime_forward.1} parent=11 // pred_region
          %s258 = ssub.s32 16, 16
          %259 = vsyncadd [#allocation8], %s258
          %s261 = sshll.u32 [#allocation7], 4
          %s262 = int_to_ptr.vmem [resolvable:$true] %s261
          %264 = dma.hbm_to_vmem [thread:$0]  %s4, 16, %s262, [#allocation8]
        $region32: #{biomime_forward.1} parent=11 // pred_fallthru
          _
      $region12: #{biomime_forward.1} parent=5 // pred_fallthru
        _
      %p265 = scmp.lt.s32.totalorder %s16, 4
      // Predicated region
      $region33: #{biomime_forward.1} parent=5 // pred_check
        %p266 = pneg %p265
      $region34: #{biomime_forward.1} parent=5 // pred_check_branch
        %268 = sbr.rel (%p266) target = $region36
      $region35: #{biomime_forward.1} parent=5 // pred_region
        // Predicated region
        $region37: #{biomime_forward.1} parent=35 // pred_check
          %p269 = pneg %p141
        $region38: #{biomime_forward.1} parent=35 // pred_check_branch
          %271 = sbr.rel (%p269) target = $region40
        $region39: #{biomime_forward.1} parent=35 // pred_region
          %s272 = sand.u32 %s16, 1
          %s273 = scalar_lea.sflag [#allocation3], %s272
          %s274 = sand.u32 %s131, 1
          %s275 = smul.addr %s274, 3840
          %s276 = scalar_lea.vmem [#allocation9], %s275
          %s277 = smul.u32 60, %s16
          %s279 = ssub.s32 61440, 61440
          %280 = vsyncadd %s273, %s279
          %s281 = smul.addr %s277, 64
          %s282 = scalar_lea.hbm %s5, %s281
          %s283 = sshll.u32 %s276, 4
          %s284 = int_to_ptr.vmem [resolvable:$true] %s283
          %289 = dma.hbm_to_vmem [thread:$0]  %s282, 61440, %s284, %s273, 15360, 3840, 240
        $region40: #{biomime_forward.1} parent=35 // pred_fallthru
          _
        // Predicated region
        $region41: #{biomime_forward.1} parent=35 // pred_check
          %p290 = pneg %p167
        $region42: #{biomime_forward.1} parent=35 // pred_check_branch
          %292 = sbr.rel (%p290) target = $region44
        $region43: #{biomime_forward.1} parent=35 // pred_region
          %s293 = sand.u32 %s16, 1
          %s294 = scalar_lea.sflag [#allocation3], %s293
          %s295 = sand.u32 %s157, 1
          %s296 = smul.addr %s295, 60
          %s297 = scalar_lea.vmem [#allocation10], %s296
          %s298 = smul.u32 60, %s16
          %s300 = ssub.s32 960, 960
          %301 = vsyncadd %s294, %s300
          %s302 = smul.addr %s298, 16
          %s303 = scalar_lea.hbm %s6, %s302
          %s305 = sshll.u32 %s297, 4
          %s306 = int_to_ptr.vmem [resolvable:$true] %s305
          %308 = dma.hbm_to_vmem [thread:$0]  %s303, 960, %s306, %s294
        $region44: #{biomime_forward.1} parent=35 // pred_fallthru
          _
      $region36: #{biomime_forward.1} parent=5 // pred_fallthru
        _
      %p309 = scmp.le.s32.totalorder 1, %s16
      %p310 = scmp.lt.s32.totalorder %s16, 5
      %p311 = pnand %p309, %p310
      %p312 = pneg %p311
      // Predicated region
      $region45: #{biomime_forward.1} parent=5 // pred_check
        _
      $region46: #{biomime_forward.1} parent=5 // pred_check_branch
        %314 = sbr.rel (%p311) target = $region48
      $region47: #{biomime_forward.1} parent=5 // pred_region
        %s315 = ssub.s32 %s16, 1
        // Predicated region
        $region49: #{biomime_forward.1} parent=47 // pred_check
          %p316 = pneg %p58
        $region50: #{biomime_forward.1} parent=47 // pred_check_branch
          %318 = sbr.rel (%p316) target = $region52
        $region51: #{biomime_forward.1} parent=47 // pred_region
          %319 = dma.done [#allocation3], 2048
        $region52: #{biomime_forward.1} parent=47 // pred_fallthru
          _
        // Predicated region
        $region53: #{biomime_forward.1} parent=47 // pred_check
          %p320 = pneg %p79
        $region54: #{biomime_forward.1} parent=47 // pred_check_branch
          %322 = sbr.rel (%p320) target = $region56
        $region55: #{biomime_forward.1} parent=47 // pred_region
          %323 = dma.done [#allocation5], 16
        $region56: #{biomime_forward.1} parent=47 // pred_fallthru
          _
        // Predicated region
        $region57: #{biomime_forward.1} parent=47 // pred_check
          %p324 = pneg %p100
        $region58: #{biomime_forward.1} parent=47 // pred_check_branch
          %326 = sbr.rel (%p324) target = $region60
        $region59: #{biomime_forward.1} parent=47 // pred_region
          %327 = dma.done [#allocation5], 2048
        $region60: #{biomime_forward.1} parent=47 // pred_fallthru
          _
        // Predicated region
        $region61: #{biomime_forward.1} parent=47 // pred_check
          %p328 = pneg %p121
        $region62: #{biomime_forward.1} parent=47 // pred_check_branch
          %330 = sbr.rel (%p328) target = $region64
        $region63: #{biomime_forward.1} parent=47 // pred_region
          %331 = dma.done [#allocation8], 16
        $region64: #{biomime_forward.1} parent=47 // pred_fallthru
          _
        %s332 = sand.u32 %s21, 1
        %s333 = scalar_lea.sflag [#allocation3], %s332
        %s334 = sand.u32 %s134, 1
        %s335 = smul.addr %s334, 3840
        %s336 = scalar_lea.vmem [#allocation9], %s335
        // Predicated region
        $region65: #{biomime_forward.1} parent=47 // pred_check
          %p337 = pneg %p147
        $region66: #{biomime_forward.1} parent=47 // pred_check_branch
          %339 = sbr.rel (%p337) target = $region68
        $region67: #{biomime_forward.1} parent=47 // pred_region
          %340 = dma.done %s333, 61440
        $region68: #{biomime_forward.1} parent=47 // pred_fallthru
          _
        %s341 = sand.u32 %s21, 1
        %s342 = scalar_lea.sflag [#allocation3], %s341
        %s343 = sand.u32 %s160, 1
        %s344 = smul.addr %s343, 60
        %s345 = scalar_lea.vmem [#allocation10], %s344
        // Predicated region
        $region69: #{biomime_forward.1} parent=47 // pred_check
          %p346 = pneg %p173
        $region70: #{biomime_forward.1} parent=47 // pred_check_branch
          %348 = sbr.rel (%p346) target = $region72
        $region71: #{biomime_forward.1} parent=47 // pred_region
          %349 = dma.done %s342, 960
        $region72: #{biomime_forward.1} parent=47 // pred_fallthru
          _
        %p350 = pneg %p37
        %p351 = pneg %p34
        %p352 = pneg %p58
        %p353 = pneg %p55
        %p354 = pneg %p79
        %p355 = pneg %p76
        %p356 = pneg %p100
        %p357 = pneg %p97
        %p358 = pneg %p121
        %p359 = pneg %p118
        %s360 = sand.u32 %s21, 1
        %s361 = scalar_lea.sflag [#allocation3], %s360
        %s362 = sand.u32 %s134, 1
        %s363 = smul.addr %s362, 3840
        %s364 = scalar_lea.vmem [#allocation9], %s363
        %p365 = pneg %p147
        %p366 = pneg %p144
        %s367 = sand.u32 %s21, 1
        %s368 = scalar_lea.sflag [#allocation3], %s367
        %s369 = sand.u32 %s160, 1
        %s370 = smul.addr %s369, 60
        %s371 = scalar_lea.vmem [#allocation10], %s370
        %p372 = pneg %p173
        %p373 = pneg %p170
        %p374 = pneg %p199
        %p375 = pneg %p196
        %s376 = smul.u32 60, %s21
        %p377 = scmp.lt.s32.totalorder %s376, 239
        %s378 = scalar_select %p377, %s376, 239
        %s379 = smul.addr %s378, 8
        %s380 = scalar_lea.vmem %s7, %s379
        %s381 = smul.u32 60, %s21
        %s382 = smul.u32 60, %s21
        %s383 = smul.u32 60, %s21
        %p384 = scmp.lt.s32.totalorder %s383, 239
        %s385 = scalar_select %p384, %s383, 239
        %s386 = smul.addr %s385, 8
        %s387 = scalar_lea.vmem %s7, %s386
        %s388 = smul.u32 60, %s21
        %v390 = vlaneseq
        %v391 = vand.u32 %v390, 127
        %v392 = vld [vmem:[%s0] sm:$0xff]
        %vm393 = vcmp.lt.s32.totalorder %v391, 6
        %v394 = vmul.f32 %v392, 0.5
        %v395 = vadd.f32 %v394, 0.5
        %v396 = vsel %vm393, %v395, %v392
        %v397 = vld [vmem:[#allocation2] sm:$0xff]
        %v398 = vld [vmem:[#allocation2 + $0x8] sm:$0xff]
        %v399 = vld [vmem:[#allocation2 + $0x10] sm:$0xff]
        %v400 = vld [vmem:[#allocation2 + $0x18] sm:$0xff]
        %v401 = vld [vmem:[#allocation2 + $0x20] sm:$0xff]
        %v402 = vld [vmem:[#allocation2 + $0x28] sm:$0xff]
        %v403 = vld [vmem:[#allocation2 + $0x30] sm:$0xff]
        %v404 = vld [vmem:[#allocation2 + $0x38] sm:$0xff]
        %v405 = vld [vmem:[#allocation2 + $0x40] sm:$0xff]
        %v406 = vld [vmem:[#allocation2 + $0x48] sm:$0xff]
        %v407 = vld [vmem:[#allocation2 + $0x50] sm:$0xff]
        %v408 = vld [vmem:[#allocation2 + $0x58] sm:$0xff]
        %v409 = vld [vmem:[#allocation2 + $0x60] sm:$0xff]
        %v410 = vld [vmem:[#allocation2 + $0x68] sm:$0xff]
        %v411 = vld [vmem:[#allocation2 + $0x70] sm:$0xff]
        %v412 = vld [vmem:[#allocation2 + $0x78] sm:$0xff]
        %v413 = vld [vmem:[#allocation4] sm:$0x1]
        %v415 = vlaneseq
        %v416 = vshrl.u32 %v415, 7
        %v417 = vsub.s32 0, %v416
        %v418 = vrot.slane %v413, %v417
        %420 = vmatprep.subr.mxu0 0.0
        %421 = vmatpush1.msra.mxu0 %v412
        %422 = vmatprep.subr.mxu0 0.0
        %423 = vmatpush1.msra.mxu0 %v411
        %424 = vmatprep.subr.mxu0 0.0
        %425 = vmatpush1.msra.mxu0 %v410
        %426 = vmatprep.subr.mxu0 0.0
        %427 = vmatpush1.msra.mxu0 %v409
        %428 = vmatprep.subr.mxu0 0.0
        %429 = vmatpush1.msra.mxu0 %v408
        %430 = vmatprep.subr.mxu0 0.0
        %431 = vmatpush1.msra.mxu0 %v407
        %432 = vmatprep.subr.mxu0 0.0
        %433 = vmatpush1.msra.mxu0 %v406
        %434 = vmatprep.subr.mxu0 0.0
        %435 = vmatpush1.msra.mxu0 %v405
        %436 = vmatprep.subr.mxu0 0.0
        %437 = vmatpush1.msra.mxu0 %v404
        %438 = vmatprep.subr.mxu0 0.0
        %439 = vmatpush1.msra.mxu0 %v403
        %440 = vmatprep.subr.mxu0 0.0
        %441 = vmatpush1.msra.mxu0 %v402
        %442 = vmatprep.subr.mxu0 0.0
        %443 = vmatpush1.msra.mxu0 %v401
        %444 = vmatprep.subr.mxu0 0.0
        %445 = vmatpush1.msra.mxu0 %v400
        %446 = vmatprep.subr.mxu0 0.0
        %447 = vmatpush1.msra.mxu0 %v399
        %448 = vmatprep.subr.mxu0 0.0
        %449 = vmatpush1.msra.mxu0 %v398
        %450 = vmatprep.subr.mxu0 0.0
        %451 = vmatpush1.msra.mxu0 %v397
        %452 = vmatprep.subr.mxu0 0.0
        %453 = vmatpush2.msra.mxu0 0.0
        %454 = vmatprep.subr.mxu0 0.0
        %455 = vmatpush2.msra.mxu0 0.0
        %456 = vmatprep.subr.mxu0 0.0
        %457 = vmatpush2.msra.mxu0 0.0
        %458 = vmatprep.subr.mxu0 0.0
        %459 = vmatpush2.msra.mxu0 0.0
        %460 = vmatprep.subr.mxu0 0.0
        %461 = vmatpush2.msra.mxu0 0.0
        %462 = vmatprep.subr.mxu0 0.0
        %463 = vmatpush2.msra.mxu0 0.0
        %464 = vmatprep.subr.mxu0 0.0
        %465 = vmatpush2.msra.mxu0 0.0
        %466 = vmatprep.subr.mxu0 0.0
        %467 = vmatpush2.msra.mxu0 0.0
        %468 = vmatprep.subr.mxu0 0.0
        %469 = vmatpush2.msra.mxu0 0.0
        %470 = vmatprep.subr.mxu0 0.0
        %471 = vmatpush2.msra.mxu0 0.0
        %472 = vmatprep.subr.mxu0 0.0
        %473 = vmatpush2.msra.mxu0 0.0
        %474 = vmatprep.subr.mxu0 0.0
        %475 = vmatpush2.msra.mxu0 0.0
        %476 = vmatprep.subr.mxu0 0.0
        %477 = vmatpush2.msra.mxu0 0.0
        %478 = vmatprep.subr.mxu0 0.0
        %479 = vmatpush2.msra.mxu0 0.0
        %480 = vmatprep.subr.mxu0 0.0
        %481 = vmatpush2.msra.mxu0 0.0
        %482 = vmatprep.subr.mxu0 0.0
        %483 = vmatpush2.msra.mxu0 0.0
        %484 = vmatprep.mubr.f32.mxu0 0.0
        %485 = vmatmul.mubr.f32.gmra.mxu0 %v396
        %v486 = vpop.f32.mrf.mxu0
        %v487 = vadd.f32 %v418, %v486
        %v488 = vpop.f32.mrf.mxu0
        %489 = vdwg.mxu0
        %v490 = vmax.f32 %v487, 0.0
        %v491 = vld [vmem:[#allocation6] sm:$0xff]
        %v492 = vld [vmem:[#allocation6 + $0x8] sm:$0xff]
        %v493 = vld [vmem:[#allocation6 + $0x10] sm:$0xff]
        %v494 = vld [vmem:[#allocation6 + $0x18] sm:$0xff]
        %v495 = vld [vmem:[#allocation6 + $0x20] sm:$0xff]
        %v496 = vld [vmem:[#allocation6 + $0x28] sm:$0xff]
        %v497 = vld [vmem:[#allocation6 + $0x30] sm:$0xff]
        %v498 = vld [vmem:[#allocation6 + $0x38] sm:$0xff]
        %v499 = vld [vmem:[#allocation6 + $0x40] sm:$0xff]
        %v500 = vld [vmem:[#allocation6 + $0x48] sm:$0xff]
        %v501 = vld [vmem:[#allocation6 + $0x50] sm:$0xff]
        %v502 = vld [vmem:[#allocation6 + $0x58] sm:$0xff]
        %v503 = vld [vmem:[#allocation6 + $0x60] sm:$0xff]
        %v504 = vld [vmem:[#allocation6 + $0x68] sm:$0xff]
        %v505 = vld [vmem:[#allocation6 + $0x70] sm:$0xff]
        %v506 = vld [vmem:[#allocation6 + $0x78] sm:$0xff]
        %v507 = vld [vmem:[#allocation7] sm:$0x1]
        %v509 = vlaneseq
        %v510 = vshrl.u32 %v509, 7
        %v511 = vsub.s32 0, %v510
        %v512 = vrot.slane %v507, %v511
        %514 = vmatprep.subr.mxu0 0.0
        %515 = vmatpush1.msra.mxu0 %v506
        %516 = vmatprep.subr.mxu0 0.0
        %517 = vmatpush1.msra.mxu0 %v505
        %518 = vmatprep.subr.mxu0 0.0
        %519 = vmatpush1.msra.mxu0 %v504
        %520 = vmatprep.subr.mxu0 0.0
        %521 = vmatpush1.msra.mxu0 %v503
        %522 = vmatprep.subr.mxu0 0.0
        %523 = vmatpush1.msra.mxu0 %v502
        %524 = vmatprep.subr.mxu0 0.0
        %525 = vmatpush1.msra.mxu0 %v501
        %526 = vmatprep.subr.mxu0 0.0
        %527 = vmatpush1.msra.mxu0 %v500
        %528 = vmatprep.subr.mxu0 0.0
        %529 = vmatpush1.msra.mxu0 %v499
        %530 = vmatprep.subr.mxu0 0.0
        %531 = vmatpush1.msra.mxu0 %v498
        %532 = vmatprep.subr.mxu0 0.0
        %533 = vmatpush1.msra.mxu0 %v497
        %534 = vmatprep.subr.mxu0 0.0
        %535 = vmatpush1.msra.mxu0 %v496
        %536 = vmatprep.subr.mxu0 0.0
        %537 = vmatpush1.msra.mxu0 %v495
        %538 = vmatprep.subr.mxu0 0.0
        %539 = vmatpush1.msra.mxu0 %v494
        %540 = vmatprep.subr.mxu0 0.0
        %541 = vmatpush1.msra.mxu0 %v493
        %542 = vmatprep.subr.mxu0 0.0
        %543 = vmatpush1.msra.mxu0 %v492
        %544 = vmatprep.subr.mxu0 0.0
        %545 = vmatpush1.msra.mxu0 %v491
        %546 = vmatprep.subr.mxu0 0.0
        %547 = vmatpush2.msra.mxu0 0.0
        %548 = vmatprep.subr.mxu0 0.0
        %549 = vmatpush2.msra.mxu0 0.0
        %550 = vmatprep.subr.mxu0 0.0
        %551 = vmatpush2.msra.mxu0 0.0
        %552 = vmatprep.subr.mxu0 0.0
        %553 = vmatpush2.msra.mxu0 0.0
        %554 = vmatprep.subr.mxu0 0.0
        %555 = vmatpush2.msra.mxu0 0.0
        %556 = vmatprep.subr.mxu0 0.0
        %557 = vmatpush2.msra.mxu0 0.0
        %558 = vmatprep.subr.mxu0 0.0
        %559 = vmatpush2.msra.mxu0 0.0
        %560 = vmatprep.subr.mxu0 0.0
        %561 = vmatpush2.msra.mxu0 0.0
        %562 = vmatprep.subr.mxu0 0.0
        %563 = vmatpush2.msra.mxu0 0.0
        %564 = vmatprep.subr.mxu0 0.0
        %565 = vmatpush2.msra.mxu0 0.0
        %566 = vmatprep.subr.mxu0 0.0
        %567 = vmatpush2.msra.mxu0 0.0
        %568 = vmatprep.subr.mxu0 0.0
        %569 = vmatpush2.msra.mxu0 0.0
        %570 = vmatprep.subr.mxu0 0.0
        %571 = vmatpush2.msra.mxu0 0.0
        %572 = vmatprep.subr.mxu0 0.0
        %573 = vmatpush2.msra.mxu0 0.0
        %574 = vmatprep.subr.mxu0 0.0
        %575 = vmatpush2.msra.mxu0 0.0
        %576 = vmatprep.subr.mxu0 0.0
        %577 = vmatpush2.msra.mxu0 0.0
        %578 = vmatprep.mubr.f32.mxu0 0.0
        %579 = vmatmul.mubr.f32.gmra.mxu0 %v490
        %v580 = vpop.f32.mrf.mxu0
        %v581 = vadd.f32 %v512, %v580
        %v582 = vpop.f32.mrf.mxu0
        %583 = vdwg.mxu0
        %v584 = vmax.f32 %v581, 0.0
        %v585 = vpack.c.bf16 %v584, %v584
        %v586 = vld [vmem:[%s336] sm:$0xff]
        %v587 = vld [vmem:[%s336 + $0x8] sm:$0xff]
        %v588 = vld [vmem:[%s336 + $0x10] sm:$0xff]
        %v589 = vld [vmem:[%s336 + $0x18] sm:$0xff]
        %v590 = vld [vmem:[%s336 + $0x20] sm:$0xff]
        %v591 = vld [vmem:[%s336 + $0x28] sm:$0xff]
        %v592 = vld [vmem:[%s336 + $0x30] sm:$0xff]
        %v593 = vld [vmem:[%s336 + $0x38] sm:$0xff]
        %v594 = vld [vmem:[%s336 + $0x40] sm:$0xff]
        %v595 = vld [vmem:[%s336 + $0x48] sm:$0xff]
        %v596 = vld [vmem:[%s336 + $0x50] sm:$0xff]
        %v597 = vld [vmem:[%s336 + $0x58] sm:$0xff]
        %v598 = vld [vmem:[%s336 + $0x60] sm:$0xff]
        %v599 = vld [vmem:[%s336 + $0x68] sm:$0xff]
        %v600 = vld [vmem:[%s336 + $0x70] sm:$0xff]
        %v601 = vld [vmem:[%s336 + $0x78] sm:$0xff]
        %v602 = vld [vmem:[%s336 + $0x80] sm:$0xff]
        %v603 = vld [vmem:[%s336 + $0x88] sm:$0xff]
        %v604 = vld [vmem:[%s336 + $0x90] sm:$0xff]
        %v605 = vld [vmem:[%s336 + $0x98] sm:$0xff]
        %v606 = vld [vmem:[%s336 + $0xa0] sm:$0xff]
        %v607 = vld [vmem:[%s336 + $0xa8] sm:$0xff]
        %v608 = vld [vmem:[%s336 + $0xb0] sm:$0xff]
        %v609 = vld [vmem:[%s336 + $0xb8] sm:$0xff]
        %v610 = vld [vmem:[%s336 + $0xc0] sm:$0xff]
        %v611 = vld [vmem:[%s336 + $0xc8] sm:$0xff]
        %v612 = vld [vmem:[%s336 + $0xd0] sm:$0xff]
        %v613 = vld [vmem:[%s336 + $0xd8] sm:$0xff]
        %v614 = vld [vmem:[%s336 + $0xe0] sm:$0xff]
        %v615 = vld [vmem:[%s336 + $0xe8] sm:$0xff]
        %v616 = vld [vmem:[%s336 + $0xf0] sm:$0xff]
        %v617 = vld [vmem:[%s336 + $0xf8] sm:$0xff]
        %v618 = vld [vmem:[%s336 + $0x100] sm:$0xff]
        %v619 = vld [vmem:[%s336 + $0x108] sm:$0xff]
        %v620 = vld [vmem:[%s336 + $0x110] sm:$0xff]
        %v621 = vld [vmem:[%s336 + $0x118] sm:$0xff]
        %v622 = vld [vmem:[%s336 + $0x120] sm:$0xff]
        %v623 = vld [vmem:[%s336 + $0x128] sm:$0xff]
        %v624 = vld [vmem:[%s336 + $0x130] sm:$0xff]
        %v625 = vld [vmem:[%s336 + $0x138] sm:$0xff]
        %v626 = vld [vmem:[%s336 + $0x140] sm:$0xff]
        %v627 = vld [vmem:[%s336 + $0x148] sm:$0xff]
        %v628 = vld [vmem:[%s336 + $0x150] sm:$0xff]
        %v629 = vld [vmem:[%s336 + $0x158] sm:$0xff]
        %v630 = vld [vmem:[%s336 + $0x160] sm:$0xff]
        %v631 = vld [vmem:[%s336 + $0x168] sm:$0xff]
        %v632 = vld [vmem:[%s336 + $0x170] sm:$0xff]
        %v633 = vld [vmem:[%s336 + $0x178] sm:$0xff]
        %v634 = vld [vmem:[%s336 + $0x180] sm:$0xff]
        %v635 = vld [vmem:[%s336 + $0x188] sm:$0xff]
        %v636 = vld [vmem:[%s336 + $0x190] sm:$0xff]
        %v637 = vld [vmem:[%s336 + $0x198] sm:$0xff]
        %v638 = vld [vmem:[%s336 + $0x1a0] sm:$0xff]
        %v639 = vld [vmem:[%s336 + $0x1a8] sm:$0xff]
        %v640 = vld [vmem:[%s336 + $0x1b0] sm:$0xff]
        %v641 = vld [vmem:[%s336 + $0x1b8] sm:$0xff]
        %v642 = vld [vmem:[%s336 + $0x1c0] sm:$0xff]
        %v643 = vld [vmem:[%s336 + $0x1c8] sm:$0xff]
        %v644 = vld [vmem:[%s336 + $0x1d0] sm:$0xff]
        %v645 = vld [vmem:[%s336 + $0x1d8] sm:$0xff]
        %v646 = vld [vmem:[%s336 + $0x1e0] sm:$0xff]
        %v647 = vld [vmem:[%s336 + $0x1e8] sm:$0xff]
        %v648 = vld [vmem:[%s336 + $0x1f0] sm:$0xff]
        %v649 = vld [vmem:[%s336 + $0x1f8] sm:$0xff]
        %v650 = vld [vmem:[%s336 + $0x200] sm:$0xff]
        %v651 = vld [vmem:[%s336 + $0x208] sm:$0xff]
        %v652 = vld [vmem:[%s336 + $0x210] sm:$0xff]
        %v653 = vld [vmem:[%s336 + $0x218] sm:$0xff]
        %v654 = vld [vmem:[%s336 + $0x220] sm:$0xff]
        %v655 = vld [vmem:[%s336 + $0x228] sm:$0xff]
        %v656 = vld [vmem:[%s336 + $0x230] sm:$0xff]
        %v657 = vld [vmem:[%s336 + $0x238] sm:$0xff]
        %v658 = vld [vmem:[%s336 + $0x240] sm:$0xff]
        %v659 = vld [vmem:[%s336 + $0x248] sm:$0xff]
        %v660 = vld [vmem:[%s336 + $0x250] sm:$0xff]
        %v661 = vld [vmem:[%s336 + $0x258] sm:$0xff]
        %v662 = vld [vmem:[%s336 + $0x260] sm:$0xff]
        %v663 = vld [vmem:[%s336 + $0x268] sm:$0xff]
        %v664 = vld [vmem:[%s336 + $0x270] sm:$0xff]
        %v665 = vld [vmem:[%s336 + $0x278] sm:$0xff]
        %v666 = vld [vmem:[%s336 + $0x280] sm:$0xff]
        %v667 = vld [vmem:[%s336 + $0x288] sm:$0xff]
        %v668 = vld [vmem:[%s336 + $0x290] sm:$0xff]
        %v669 = vld [vmem:[%s336 + $0x298] sm:$0xff]
        %v670 = vld [vmem:[%s336 + $0x2a0] sm:$0xff]
        %v671 = vld [vmem:[%s336 + $0x2a8] sm:$0xff]
        %v672 = vld [vmem:[%s336 + $0x2b0] sm:$0xff]
        %v673 = vld [vmem:[%s336 + $0x2b8] sm:$0xff]
        %v674 = vld [vmem:[%s336 + $0x2c0] sm:$0xff]
        %v675 = vld [vmem:[%s336 + $0x2c8] sm:$0xff]
        %v676 = vld [vmem:[%s336 + $0x2d0] sm:$0xff]
        %v677 = vld [vmem:[%s336 + $0x2d8] sm:$0xff]
        %v678 = vld [vmem:[%s336 + $0x2e0] sm:$0xff]
        %v679 = vld [vmem:[%s336 + $0x2e8] sm:$0xff]
        %v680 = vld [vmem:[%s336 + $0x2f0] sm:$0xff]
        %v681 = vld [vmem:[%s336 + $0x2f8] sm:$0xff]
        %v682 = vld [vmem:[%s336 + $0x300] sm:$0xff]
        %v683 = vld [vmem:[%s336 + $0x308] sm:$0xff]
        %v684 = vld [vmem:[%s336 + $0x310] sm:$0xff]
        %v685 = vld [vmem:[%s336 + $0x318] sm:$0xff]
        %v686 = vld [vmem:[%s336 + $0x320] sm:$0xff]
        %v687 = vld [vmem:[%s336 + $0x328] sm:$0xff]
        %v688 = vld [vmem:[%s336 + $0x330] sm:$0xff]
        %v689 = vld [vmem:[%s336 + $0x338] sm:$0xff]
        %v690 = vld [vmem:[%s336 + $0x340] sm:$0xff]
        %v691 = vld [vmem:[%s336 + $0x348] sm:$0xff]
        %v692 = vld [vmem:[%s336 + $0x350] sm:$0xff]
        %v693 = vld [vmem:[%s336 + $0x358] sm:$0xff]
        %v694 = vld [vmem:[%s336 + $0x360] sm:$0xff]
        %v695 = vld [vmem:[%s336 + $0x368] sm:$0xff]
        %v696 = vld [vmem:[%s336 + $0x370] sm:$0xff]
        %v697 = vld [vmem:[%s336 + $0x378] sm:$0xff]
        %v698 = vld [vmem:[%s336 + $0x380] sm:$0xff]
        %v699 = vld [vmem:[%s336 + $0x388] sm:$0xff]
        %v700 = vld [vmem:[%s336 + $0x390] sm:$0xff]
        %v701 = vld [vmem:[%s336 + $0x398] sm:$0xff]
        %v702 = vld [vmem:[%s336 + $0x3a0] sm:$0xff]
        %v703 = vld [vmem:[%s336 + $0x3a8] sm:$0xff]
        %v704 = vld [vmem:[%s336 + $0x3b0] sm:$0xff]
        %v705 = vld [vmem:[%s336 + $0x3b8] sm:$0xff]
        %v706 = vld [vmem:[%s336 + $0x3c0] sm:$0xff]
        %v707 = vld [vmem:[%s336 + $0x3c8] sm:$0xff]
        %v708 = vld [vmem:[%s336 + $0x3d0] sm:$0xff]
        %v709 = vld [vmem:[%s336 + $0x3d8] sm:$0xff]
        %v710 = vld [vmem:[%s336 + $0x3e0] sm:$0xff]
        %v711 = vld [vmem:[%s336 + $0x3e8] sm:$0xff]
        %v712 = vld [vmem:[%s336 + $0x3f0] sm:$0xff]
        %v713 = vld [vmem:[%s336 + $0x3f8] sm:$0xff]
        %v714 = vld [vmem:[%s336 + $0x400] sm:$0xff]
        %v715 = vld [vmem:[%s336 + $0x408] sm:$0xff]
        %v716 = vld [vmem:[%s336 + $0x410] sm:$0xff]
        %v717 = vld [vmem:[%s336 + $0x418] sm:$0xff]
        %v718 = vld [vmem:[%s336 + $0x420] sm:$0xff]
        %v719 = vld [vmem:[%s336 + $0x428] sm:$0xff]
        %v720 = vld [vmem:[%s336 + $0x430] sm:$0xff]
        %v721 = vld [vmem:[%s336 + $0x438] sm:$0xff]
        %v722 = vld [vmem:[%s336 + $0x440] sm:$0xff]
        %v723 = vld [vmem:[%s336 + $0x448] sm:$0xff]
        %v724 = vld [vmem:[%s336 + $0x450] sm:$0xff]
        %v725 = vld [vmem:[%s336 + $0x458] sm:$0xff]
        %v726 = vld [vmem:[%s336 + $0x460] sm:$0xff]
        %v727 = vld [vmem:[%s336 + $0x468] sm:$0xff]
        %v728 = vld [vmem:[%s336 + $0x470] sm:$0xff]
        %v729 = vld [vmem:[%s336 + $0x478] sm:$0xff]
        %v730 = vld [vmem:[%s336 + $0x480] sm:$0xff]
        %v731 = vld [vmem:[%s336 + $0x488] sm:$0xff]
        %v732 = vld [vmem:[%s336 + $0x490] sm:$0xff]
        %v733 = vld [vmem:[%s336 + $0x498] sm:$0xff]
        %v734 = vld [vmem:[%s336 + $0x4a0] sm:$0xff]
        %v735 = vld [vmem:[%s336 + $0x4a8] sm:$0xff]
        %v736 = vld [vmem:[%s336 + $0x4b0] sm:$0xff]
        %v737 = vld [vmem:[%s336 + $0x4b8] sm:$0xff]
        %v738 = vld [vmem:[%s336 + $0x4c0] sm:$0xff]
        %v739 = vld [vmem:[%s336 + $0x4c8] sm:$0xff]
        %v740 = vld [vmem:[%s336 + $0x4d0] sm:$0xff]
        %v741 = vld [vmem:[%s336 + $0x4d8] sm:$0xff]
        %v742 = vld [vmem:[%s336 + $0x4e0] sm:$0xff]
        %v743 = vld [vmem:[%s336 + $0x4e8] sm:$0xff]
        %v744 = vld [vmem:[%s336 + $0x4f0] sm:$0xff]
        %v745 = vld [vmem:[%s336 + $0x4f8] sm:$0xff]
        %v746 = vld [vmem:[%s336 + $0x500] sm:$0xff]
        %v747 = vld [vmem:[%s336 + $0x508] sm:$0xff]
        %v748 = vld [vmem:[%s336 + $0x510] sm:$0xff]
        %v749 = vld [vmem:[%s336 + $0x518] sm:$0xff]
        %v750 = vld [vmem:[%s336 + $0x520] sm:$0xff]
        %v751 = vld [vmem:[%s336 + $0x528] sm:$0xff]
        %v752 = vld [vmem:[%s336 + $0x530] sm:$0xff]
        %v753 = vld [vmem:[%s336 + $0x538] sm:$0xff]
        %v754 = vld [vmem:[%s336 + $0x540] sm:$0xff]
        %v755 = vld [vmem:[%s336 + $0x548] sm:$0xff]
        %v756 = vld [vmem:[%s336 + $0x550] sm:$0xff]
        %v757 = vld [vmem:[%s336 + $0x558] sm:$0xff]
        %v758 = vld [vmem:[%s336 + $0x560] sm:$0xff]
        %v759 = vld [vmem:[%s336 + $0x568] sm:$0xff]
        %v760 = vld [vmem:[%s336 + $0x570] sm:$0xff]
        %v761 = vld [vmem:[%s336 + $0x578] sm:$0xff]
        %v762 = vld [vmem:[%s336 + $0x580] sm:$0xff]
        %v763 = vld [vmem:[%s336 + $0x588] sm:$0xff]
        %v764 = vld [vmem:[%s336 + $0x590] sm:$0xff]
        %v765 = vld [vmem:[%s336 + $0x598] sm:$0xff]
        %v766 = vld [vmem:[%s336 + $0x5a0] sm:$0xff]
        %v767 = vld [vmem:[%s336 + $0x5a8] sm:$0xff]
        %v768 = vld [vmem:[%s336 + $0x5b0] sm:$0xff]
        %v769 = vld [vmem:[%s336 + $0x5b8] sm:$0xff]
        %v770 = vld [vmem:[%s336 + $0x5c0] sm:$0xff]
        %v771 = vld [vmem:[%s336 + $0x5c8] sm:$0xff]
        %v772 = vld [vmem:[%s336 + $0x5d0] sm:$0xff]
        %v773 = vld [vmem:[%s336 + $0x5d8] sm:$0xff]
        %v774 = vld [vmem:[%s336 + $0x5e0] sm:$0xff]
        %v775 = vld [vmem:[%s336 + $0x5e8] sm:$0xff]
        %v776 = vld [vmem:[%s336 + $0x5f0] sm:$0xff]
        %v777 = vld [vmem:[%s336 + $0x5f8] sm:$0xff]
        %v778 = vld [vmem:[%s336 + $0x600] sm:$0xff]
        %v779 = vld [vmem:[%s336 + $0x608] sm:$0xff]
        %v780 = vld [vmem:[%s336 + $0x610] sm:$0xff]
        %v781 = vld [vmem:[%s336 + $0x618] sm:$0xff]
        %v782 = vld [vmem:[%s336 + $0x620] sm:$0xff]
        %v783 = vld [vmem:[%s336 + $0x628] sm:$0xff]
        %v784 = vld [vmem:[%s336 + $0x630] sm:$0xff]
        %v785 = vld [vmem:[%s336 + $0x638] sm:$0xff]
        %v786 = vld [vmem:[%s336 + $0x640] sm:$0xff]
        %v787 = vld [vmem:[%s336 + $0x648] sm:$0xff]
        %v788 = vld [vmem:[%s336 + $0x650] sm:$0xff]
        %v789 = vld [vmem:[%s336 + $0x658] sm:$0xff]
        %v790 = vld [vmem:[%s336 + $0x660] sm:$0xff]
        %v791 = vld [vmem:[%s336 + $0x668] sm:$0xff]
        %v792 = vld [vmem:[%s336 + $0x670] sm:$0xff]
        %v793 = vld [vmem:[%s336 + $0x678] sm:$0xff]
        %v794 = vld [vmem:[%s336 + $0x680] sm:$0xff]
        %v795 = vld [vmem:[%s336 + $0x688] sm:$0xff]
        %v796 = vld [vmem:[%s336 + $0x690] sm:$0xff]
        %v797 = vld [vmem:[%s336 + $0x698] sm:$0xff]
        %v798 = vld [vmem:[%s336 + $0x6a0] sm:$0xff]
        %v799 = vld [vmem:[%s336 + $0x6a8] sm:$0xff]
        %v800 = vld [vmem:[%s336 + $0x6b0] sm:$0xff]
        %v801 = vld [vmem:[%s336 + $0x6b8] sm:$0xff]
        %v802 = vld [vmem:[%s336 + $0x6c0] sm:$0xff]
        %v803 = vld [vmem:[%s336 + $0x6c8] sm:$0xff]
        %v804 = vld [vmem:[%s336 + $0x6d0] sm:$0xff]
        %v805 = vld [vmem:[%s336 + $0x6d8] sm:$0xff]
        %v806 = vld [vmem:[%s336 + $0x6e0] sm:$0xff]
        %v807 = vld [vmem:[%s336 + $0x6e8] sm:$0xff]
        %v808 = vld [vmem:[%s336 + $0x6f0] sm:$0xff]
        %v809 = vld [vmem:[%s336 + $0x6f8] sm:$0xff]
        %v810 = vld [vmem:[%s336 + $0x700] sm:$0xff]
        %v811 = vld [vmem:[%s336 + $0x708] sm:$0xff]
        %v812 = vld [vmem:[%s336 + $0x710] sm:$0xff]
        %v813 = vld [vmem:[%s336 + $0x718] sm:$0xff]
        %v814 = vld [vmem:[%s336 + $0x720] sm:$0xff]
        %v815 = vld [vmem:[%s336 + $0x728] sm:$0xff]
        %v816 = vld [vmem:[%s336 + $0x730] sm:$0xff]
        %v817 = vld [vmem:[%s336 + $0x738] sm:$0xff]
        %v818 = vld [vmem:[%s336 + $0x740] sm:$0xff]
        %v819 = vld [vmem:[%s336 + $0x748] sm:$0xff]
        %v820 = vld [vmem:[%s336 + $0x750] sm:$0xff]
        %v821 = vld [vmem:[%s336 + $0x758] sm:$0xff]
        %v822 = vld [vmem:[%s336 + $0x760] sm:$0xff]
        %v823 = vld [vmem:[%s336 + $0x768] sm:$0xff]
        %v824 = vld [vmem:[%s336 + $0x770] sm:$0xff]
        %v825 = vld [vmem:[%s336 + $0x778] sm:$0xff]
        %v826 = vld [vmem:[%s336 + $0x780] sm:$0xff]
        %v827 = vld [vmem:[%s336 + $0x788] sm:$0xff]
        %v828 = vld [vmem:[%s336 + $0x790] sm:$0xff]
        %v829 = vld [vmem:[%s336 + $0x798] sm:$0xff]
        %v830 = vld [vmem:[%s336 + $0x7a0] sm:$0xff]
        %v831 = vld [vmem:[%s336 + $0x7a8] sm:$0xff]
        %v832 = vld [vmem:[%s336 + $0x7b0] sm:$0xff]
        %v833 = vld [vmem:[%s336 + $0x7b8] sm:$0xff]
        %v834 = vld [vmem:[%s336 + $0x7c0] sm:$0xff]
        %v835 = vld [vmem:[%s336 + $0x7c8] sm:$0xff]
        %v836 = vld [vmem:[%s336 + $0x7d0] sm:$0xff]
        %v837 = vld [vmem:[%s336 + $0x7d8] sm:$0xff]
        %v838 = vld [vmem:[%s336 + $0x7e0] sm:$0xff]
        %v839 = vld [vmem:[%s336 + $0x7e8] sm:$0xff]
        %v840 = vld [vmem:[%s336 + $0x7f0] sm:$0xff]
        %v841 = vld [vmem:[%s336 + $0x7f8] sm:$0xff]
        %v842 = vld [vmem:[%s336 + $0x800] sm:$0xff]
        %v843 = vld [vmem:[%s336 + $0x808] sm:$0xff]
        %v844 = vld [vmem:[%s336 + $0x810] sm:$0xff]
        %v845 = vld [vmem:[%s336 + $0x818] sm:$0xff]
        %v846 = vld [vmem:[%s336 + $0x820] sm:$0xff]
        %v847 = vld [vmem:[%s336 + $0x828] sm:$0xff]
        %v848 = vld [vmem:[%s336 + $0x830] sm:$0xff]
        %v849 = vld [vmem:[%s336 + $0x838] sm:$0xff]
        %v850 = vld [vmem:[%s336 + $0x840] sm:$0xff]
        %v851 = vld [vmem:[%s336 + $0x848] sm:$0xff]
        %v852 = vld [vmem:[%s336 + $0x850] sm:$0xff]
        %v853 = vld [vmem:[%s336 + $0x858] sm:$0xff]
        %v854 = vld [vmem:[%s336 + $0x860] sm:$0xff]
        %v855 = vld [vmem:[%s336 + $0x868] sm:$0xff]
        %v856 = vld [vmem:[%s336 + $0x870] sm:$0xff]
        %v857 = vld [vmem:[%s336 + $0x878] sm:$0xff]
        %v858 = vld [vmem:[%s336 + $0x880] sm:$0xff]
        %v859 = vld [vmem:[%s336 + $0x888] sm:$0xff]
        %v860 = vld [vmem:[%s336 + $0x890] sm:$0xff]
        %v861 = vld [vmem:[%s336 + $0x898] sm:$0xff]
        %v862 = vld [vmem:[%s336 + $0x8a0] sm:$0xff]
        %v863 = vld [vmem:[%s336 + $0x8a8] sm:$0xff]
        %v864 = vld [vmem:[%s336 + $0x8b0] sm:$0xff]
        %v865 = vld [vmem:[%s336 + $0x8b8] sm:$0xff]
        %v866 = vld [vmem:[%s336 + $0x8c0] sm:$0xff]
        %v867 = vld [vmem:[%s336 + $0x8c8] sm:$0xff]
        %v868 = vld [vmem:[%s336 + $0x8d0] sm:$0xff]
        %v869 = vld [vmem:[%s336 + $0x8d8] sm:$0xff]
        %v870 = vld [vmem:[%s336 + $0x8e0] sm:$0xff]
        %v871 = vld [vmem:[%s336 + $0x8e8] sm:$0xff]
        %v872 = vld [vmem:[%s336 + $0x8f0] sm:$0xff]
        %v873 = vld [vmem:[%s336 + $0x8f8] sm:$0xff]
        %v874 = vld [vmem:[%s336 + $0x900] sm:$0xff]
        %v875 = vld [vmem:[%s336 + $0x908] sm:$0xff]
        %v876 = vld [vmem:[%s336 + $0x910] sm:$0xff]
        %v877 = vld [vmem:[%s336 + $0x918] sm:$0xff]
        %v878 = vld [vmem:[%s336 + $0x920] sm:$0xff]
        %v879 = vld [vmem:[%s336 + $0x928] sm:$0xff]
        %v880 = vld [vmem:[%s336 + $0x930] sm:$0xff]
        %v881 = vld [vmem:[%s336 + $0x938] sm:$0xff]
        %v882 = vld [vmem:[%s336 + $0x940] sm:$0xff]
        %v883 = vld [vmem:[%s336 + $0x948] sm:$0xff]
        %v884 = vld [vmem:[%s336 + $0x950] sm:$0xff]
        %v885 = vld [vmem:[%s336 + $0x958] sm:$0xff]
        %v886 = vld [vmem:[%s336 + $0x960] sm:$0xff]
        %v887 = vld [vmem:[%s336 + $0x968] sm:$0xff]
        %v888 = vld [vmem:[%s336 + $0x970] sm:$0xff]
        %v889 = vld [vmem:[%s336 + $0x978] sm:$0xff]
        %v890 = vld [vmem:[%s336 + $0x980] sm:$0xff]
        %v891 = vld [vmem:[%s336 + $0x988] sm:$0xff]
        %v892 = vld [vmem:[%s336 + $0x990] sm:$0xff]
        %v893 = vld [vmem:[%s336 + $0x998] sm:$0xff]
        %v894 = vld [vmem:[%s336 + $0x9a0] sm:$0xff]
        %v895 = vld [vmem:[%s336 + $0x9a8] sm:$0xff]
        %v896 = vld [vmem:[%s336 + $0x9b0] sm:$0xff]
        %v897 = vld [vmem:[%s336 + $0x9b8] sm:$0xff]
        %v898 = vld [vmem:[%s336 + $0x9c0] sm:$0xff]
        %v899 = vld [vmem:[%s336 + $0x9c8] sm:$0xff]
        %v900 = vld [vmem:[%s336 + $0x9d0] sm:$0xff]
        %v901 = vld [vmem:[%s336 + $0x9d8] sm:$0xff]
        %v902 = vld [vmem:[%s336 + $0x9e0] sm:$0xff]
        %v903 = vld [vmem:[%s336 + $0x9e8] sm:$0xff]
        %v904 = vld [vmem:[%s336 + $0x9f0] sm:$0xff]
        %v905 = vld [vmem:[%s336 + $0x9f8] sm:$0xff]
        %v906 = vld [vmem:[%s336 + $0xa00] sm:$0xff]
        %v907 = vld [vmem:[%s336 + $0xa08] sm:$0xff]
        %v908 = vld [vmem:[%s336 + $0xa10] sm:$0xff]
        %v909 = vld [vmem:[%s336 + $0xa18] sm:$0xff]
        %v910 = vld [vmem:[%s336 + $0xa20] sm:$0xff]
        %v911 = vld [vmem:[%s336 + $0xa28] sm:$0xff]
        %v912 = vld [vmem:[%s336 + $0xa30] sm:$0xff]
        %v913 = vld [vmem:[%s336 + $0xa38] sm:$0xff]
        %v914 = vld [vmem:[%s336 + $0xa40] sm:$0xff]
        %v915 = vld [vmem:[%s336 + $0xa48] sm:$0xff]
        %v916 = vld [vmem:[%s336 + $0xa50] sm:$0xff]
        %v917 = vld [vmem:[%s336 + $0xa58] sm:$0xff]
        %v918 = vld [vmem:[%s336 + $0xa60] sm:$0xff]
        %v919 = vld [vmem:[%s336 + $0xa68] sm:$0xff]
        %v920 = vld [vmem:[%s336 + $0xa70] sm:$0xff]
        %v921 = vld [vmem:[%s336 + $0xa78] sm:$0xff]
        %v922 = vld [vmem:[%s336 + $0xa80] sm:$0xff]
        %v923 = vld [vmem:[%s336 + $0xa88] sm:$0xff]
        %v924 = vld [vmem:[%s336 + $0xa90] sm:$0xff]
        %v925 = vld [vmem:[%s336 + $0xa98] sm:$0xff]
        %v926 = vld [vmem:[%s336 + $0xaa0] sm:$0xff]
        %v927 = vld [vmem:[%s336 + $0xaa8] sm:$0xff]
        %v928 = vld [vmem:[%s336 + $0xab0] sm:$0xff]
        %v929 = vld [vmem:[%s336 + $0xab8] sm:$0xff]
        %v930 = vld [vmem:[%s336 + $0xac0] sm:$0xff]
        %v931 = vld [vmem:[%s336 + $0xac8] sm:$0xff]
        %v932 = vld [vmem:[%s336 + $0xad0] sm:$0xff]
        %v933 = vld [vmem:[%s336 + $0xad8] sm:$0xff]
        %v934 = vld [vmem:[%s336 + $0xae0] sm:$0xff]
        %v935 = vld [vmem:[%s336 + $0xae8] sm:$0xff]
        %v936 = vld [vmem:[%s336 + $0xaf0] sm:$0xff]
        %v937 = vld [vmem:[%s336 + $0xaf8] sm:$0xff]
        %v938 = vld [vmem:[%s336 + $0xb00] sm:$0xff]
        %v939 = vld [vmem:[%s336 + $0xb08] sm:$0xff]
        %v940 = vld [vmem:[%s336 + $0xb10] sm:$0xff]
        %v941 = vld [vmem:[%s336 + $0xb18] sm:$0xff]
        %v942 = vld [vmem:[%s336 + $0xb20] sm:$0xff]
        %v943 = vld [vmem:[%s336 + $0xb28] sm:$0xff]
        %v944 = vld [vmem:[%s336 + $0xb30] sm:$0xff]
        %v945 = vld [vmem:[%s336 + $0xb38] sm:$0xff]
        %v946 = vld [vmem:[%s336 + $0xb40] sm:$0xff]
        %v947 = vld [vmem:[%s336 + $0xb48] sm:$0xff]
        %v948 = vld [vmem:[%s336 + $0xb50] sm:$0xff]
        %v949 = vld [vmem:[%s336 + $0xb58] sm:$0xff]
        %v950 = vld [vmem:[%s336 + $0xb60] sm:$0xff]
        %v951 = vld [vmem:[%s336 + $0xb68] sm:$0xff]
        %v952 = vld [vmem:[%s336 + $0xb70] sm:$0xff]
        %v953 = vld [vmem:[%s336 + $0xb78] sm:$0xff]
        %v954 = vld [vmem:[%s336 + $0xb80] sm:$0xff]
        %v955 = vld [vmem:[%s336 + $0xb88] sm:$0xff]
        %v956 = vld [vmem:[%s336 + $0xb90] sm:$0xff]
        %v957 = vld [vmem:[%s336 + $0xb98] sm:$0xff]
        %v958 = vld [vmem:[%s336 + $0xba0] sm:$0xff]
        %v959 = vld [vmem:[%s336 + $0xba8] sm:$0xff]
        %v960 = vld [vmem:[%s336 + $0xbb0] sm:$0xff]
        %v961 = vld [vmem:[%s336 + $0xbb8] sm:$0xff]
        %v962 = vld [vmem:[%s336 + $0xbc0] sm:$0xff]
        %v963 = vld [vmem:[%s336 + $0xbc8] sm:$0xff]
        %v964 = vld [vmem:[%s336 + $0xbd0] sm:$0xff]
        %v965 = vld [vmem:[%s336 + $0xbd8] sm:$0xff]
        %v966 = vld [vmem:[%s336 + $0xbe0] sm:$0xff]
        %v967 = vld [vmem:[%s336 + $0xbe8] sm:$0xff]
        %v968 = vld [vmem:[%s336 + $0xbf0] sm:$0xff]
        %v969 = vld [vmem:[%s336 + $0xbf8] sm:$0xff]
        %v970 = vld [vmem:[%s336 + $0xc00] sm:$0xff]
        %v971 = vld [vmem:[%s336 + $0xc08] sm:$0xff]
        %v972 = vld [vmem:[%s336 + $0xc10] sm:$0xff]
        %v973 = vld [vmem:[%s336 + $0xc18] sm:$0xff]
        %v974 = vld [vmem:[%s336 + $0xc20] sm:$0xff]
        %v975 = vld [vmem:[%s336 + $0xc28] sm:$0xff]
        %v976 = vld [vmem:[%s336 + $0xc30] sm:$0xff]
        %v977 = vld [vmem:[%s336 + $0xc38] sm:$0xff]
        %v978 = vld [vmem:[%s336 + $0xc40] sm:$0xff]
        %v979 = vld [vmem:[%s336 + $0xc48] sm:$0xff]
        %v980 = vld [vmem:[%s336 + $0xc50] sm:$0xff]
        %v981 = vld [vmem:[%s336 + $0xc58] sm:$0xff]
        %v982 = vld [vmem:[%s336 + $0xc60] sm:$0xff]
        %v983 = vld [vmem:[%s336 + $0xc68] sm:$0xff]
        %v984 = vld [vmem:[%s336 + $0xc70] sm:$0xff]
        %v985 = vld [vmem:[%s336 + $0xc78] sm:$0xff]
        %v986 = vld [vmem:[%s336 + $0xc80] sm:$0xff]
        %v987 = vld [vmem:[%s336 + $0xc88] sm:$0xff]
        %v988 = vld [vmem:[%s336 + $0xc90] sm:$0xff]
        %v989 = vld [vmem:[%s336 + $0xc98] sm:$0xff]
        %v990 = vld [vmem:[%s336 + $0xca0] sm:$0xff]
        %v991 = vld [vmem:[%s336 + $0xca8] sm:$0xff]
        %v992 = vld [vmem:[%s336 + $0xcb0] sm:$0xff]
        %v993 = vld [vmem:[%s336 + $0xcb8] sm:$0xff]
        %v994 = vld [vmem:[%s336 + $0xcc0] sm:$0xff]
        %v995 = vld [vmem:[%s336 + $0xcc8] sm:$0xff]
        %v996 = vld [vmem:[%s336 + $0xcd0] sm:$0xff]
        %v997 = vld [vmem:[%s336 + $0xcd8] sm:$0xff]
        %v998 = vld [vmem:[%s336 + $0xce0] sm:$0xff]
        %v999 = vld [vmem:[%s336 + $0xce8] sm:$0xff]
        %v1000 = vld [vmem:[%s336 + $0xcf0] sm:$0xff]
        %v1001 = vld [vmem:[%s336 + $0xcf8] sm:$0xff]
        %v1002 = vld [vmem:[%s336 + $0xd00] sm:$0xff]
        %v1003 = vld [vmem:[%s336 + $0xd08] sm:$0xff]
        %v1004 = vld [vmem:[%s336 + $0xd10] sm:$0xff]
        %v1005 = vld [vmem:[%s336 + $0xd18] sm:$0xff]
        %v1006 = vld [vmem:[%s336 + $0xd20] sm:$0xff]
        %v1007 = vld [vmem:[%s336 + $0xd28] sm:$0xff]
        %v1008 = vld [vmem:[%s336 + $0xd30] sm:$0xff]
        %v1009 = vld [vmem:[%s336 + $0xd38] sm:$0xff]
        %v1010 = vld [vmem:[%s336 + $0xd40] sm:$0xff]
        %v1011 = vld [vmem:[%s336 + $0xd48] sm:$0xff]
        %v1012 = vld [vmem:[%s336 + $0xd50] sm:$0xff]
        %v1013 = vld [vmem:[%s336 + $0xd58] sm:$0xff]
        %v1014 = vld [vmem:[%s336 + $0xd60] sm:$0xff]
        %v1015 = vld [vmem:[%s336 + $0xd68] sm:$0xff]
        %v1016 = vld [vmem:[%s336 + $0xd70] sm:$0xff]
        %v1017 = vld [vmem:[%s336 + $0xd78] sm:$0xff]
        %v1018 = vld [vmem:[%s336 + $0xd80] sm:$0xff]
        %v1019 = vld [vmem:[%s336 + $0xd88] sm:$0xff]
        %v1020 = vld [vmem:[%s336 + $0xd90] sm:$0xff]
        %v1021 = vld [vmem:[%s336 + $0xd98] sm:$0xff]
        %v1022 = vld [vmem:[%s336 + $0xda0] sm:$0xff]
        %v1023 = vld [vmem:[%s336 + $0xda8] sm:$0xff]
        %v1024 = vld [vmem:[%s336 + $0xdb0] sm:$0xff]
        %v1025 = vld [vmem:[%s336 + $0xdb8] sm:$0xff]
        %v1026 = vld [vmem:[%s336 + $0xdc0] sm:$0xff]
        %v1027 = vld [vmem:[%s336 + $0xdc8] sm:$0xff]
        %v1028 = vld [vmem:[%s336 + $0xdd0] sm:$0xff]
        %v1029 = vld [vmem:[%s336 + $0xdd8] sm:$0xff]
        %v1030 = vld [vmem:[%s336 + $0xde0] sm:$0xff]
        %v1031 = vld [vmem:[%s336 + $0xde8] sm:$0xff]
        %v1032 = vld [vmem:[%s336 + $0xdf0] sm:$0xff]
        %v1033 = vld [vmem:[%s336 + $0xdf8] sm:$0xff]
        %v1034 = vld [vmem:[%s336 + $0xe00] sm:$0xff]
        %v1035 = vld [vmem:[%s336 + $0xe08] sm:$0xff]
        %v1036 = vld [vmem:[%s336 + $0xe10] sm:$0xff]
        %v1037 = vld [vmem:[%s336 + $0xe18] sm:$0xff]
        %v1038 = vld [vmem:[%s336 + $0xe20] sm:$0xff]
        %v1039 = vld [vmem:[%s336 + $0xe28] sm:$0xff]
        %v1040 = vld [vmem:[%s336 + $0xe30] sm:$0xff]
        %v1041 = vld [vmem:[%s336 + $0xe38] sm:$0xff]
        %v1042 = vld [vmem:[%s336 + $0xe40] sm:$0xff]
        %v1043 = vld [vmem:[%s336 + $0xe48] sm:$0xff]
        %v1044 = vld [vmem:[%s336 + $0xe50] sm:$0xff]
        %v1045 = vld [vmem:[%s336 + $0xe58] sm:$0xff]
        %v1046 = vld [vmem:[%s336 + $0xe60] sm:$0xff]
        %v1047 = vld [vmem:[%s336 + $0xe68] sm:$0xff]
        %v1048 = vld [vmem:[%s336 + $0xe70] sm:$0xff]
        %v1049 = vld [vmem:[%s336 + $0xe78] sm:$0xff]
        %v1050 = vld [vmem:[%s336 + $0xe80] sm:$0xff]
        %v1051 = vld [vmem:[%s336 + $0xe88] sm:$0xff]
        %v1052 = vld [vmem:[%s336 + $0xe90] sm:$0xff]
        %v1053 = vld [vmem:[%s336 + $0xe98] sm:$0xff]
        %v1054 = vld [vmem:[%s336 + $0xea0] sm:$0xff]
        %v1055 = vld [vmem:[%s336 + $0xea8] sm:$0xff]
        %v1056 = vld [vmem:[%s336 + $0xeb0] sm:$0xff]
        %v1057 = vld [vmem:[%s336 + $0xeb8] sm:$0xff]
        %v1058 = vld [vmem:[%s336 + $0xec0] sm:$0xff]
        %v1059 = vld [vmem:[%s336 + $0xec8] sm:$0xff]
        %v1060 = vld [vmem:[%s336 + $0xed0] sm:$0xff]
        %v1061 = vld [vmem:[%s336 + $0xed8] sm:$0xff]
        %v1062 = vld [vmem:[%s336 + $0xee0] sm:$0xff]
        %v1063 = vld [vmem:[%s336 + $0xee8] sm:$0xff]
        %v1064 = vld [vmem:[%s336 + $0xef0] sm:$0xff]
        %v1065 = vld [vmem:[%s336 + $0xef8] sm:$0xff]
        %v1066 = vld [vmem:[%s345] sm:$0xff]
        %v1067 = vld [vmem:[%s345 + $0x8] sm:$0xff]
        %v1068 = vld [vmem:[%s345 + $0x10] sm:$0xff]
        %v1069 = vld [vmem:[%s345 + $0x18] sm:$0xff]
        %v1070 = vld [vmem:[%s345 + $0x20] sm:$0xff]
        %v1071 = vld [vmem:[%s345 + $0x28] sm:$0xff]
        %v1072 = vld [vmem:[%s345 + $0x30] sm:$0xff]
        %v1073 = vld [vmem:[%s345 + $0x38] sm:$0xf]
        %v1082 = vlaneseq
        %v1083 = vshrl.u32 %v1082, 7
        %v1084 = vsub.s32 0, %v1083
        %v1085 = vrot.slane %v1066, %v1084
        %v1086 = vlaneseq
        %v1087 = vshrl.u32 %v1086, 7
        %v1088 = vsub.s32 1, %v1087
        %v1089 = vrot.slane %v1066, %v1088
        %v1090 = vlaneseq
        %v1091 = vshrl.u32 %v1090, 7
        %v1092 = vsub.s32 2, %v1091
        %v1093 = vrot.slane %v1066, %v1092
        %v1094 = vlaneseq
        %v1095 = vshrl.u32 %v1094, 7
        %v1096 = vsub.s32 3, %v1095
        %v1097 = vrot.slane %v1066, %v1096
        %v1098 = vlaneseq
        %v1099 = vshrl.u32 %v1098, 7
        %v1100 = vsub.s32 4, %v1099
        %v1101 = vrot.slane %v1066, %v1100
        %v1102 = vlaneseq
        %v1103 = vshrl.u32 %v1102, 7
        %v1104 = vsub.s32 5, %v1103
        %v1105 = vrot.slane %v1066, %v1104
        %v1106 = vlaneseq
        %v1107 = vshrl.u32 %v1106, 7
        %v1108 = vsub.s32 6, %v1107
        %v1109 = vrot.slane %v1066, %v1108
        %v1110 = vlaneseq
        %v1111 = vshrl.u32 %v1110, 7
        %v1112 = vsub.s32 7, %v1111
        %v1113 = vrot.slane %v1066, %v1112
        %v1114 = vlaneseq
        %v1115 = vshrl.u32 %v1114, 7
        %v1116 = vsub.s32 0, %v1115
        %v1117 = vrot.slane %v1067, %v1116
        %v1118 = vlaneseq
        %v1119 = vshrl.u32 %v1118, 7
        %v1120 = vsub.s32 1, %v1119
        %v1121 = vrot.slane %v1067, %v1120
        %v1122 = vlaneseq
        %v1123 = vshrl.u32 %v1122, 7
        %v1124 = vsub.s32 2, %v1123
        %v1125 = vrot.slane %v1067, %v1124
        %v1126 = vlaneseq
        %v1127 = vshrl.u32 %v1126, 7
        %v1128 = vsub.s32 3, %v1127
        %v1129 = vrot.slane %v1067, %v1128
        %v1130 = vlaneseq
        %v1131 = vshrl.u32 %v1130, 7
        %v1132 = vsub.s32 4, %v1131
        %v1133 = vrot.slane %v1067, %v1132
        %v1134 = vlaneseq
        %v1135 = vshrl.u32 %v1134, 7
        %v1136 = vsub.s32 5, %v1135
        %v1137 = vrot.slane %v1067, %v1136
        %v1138 = vlaneseq
        %v1139 = vshrl.u32 %v1138, 7
        %v1140 = vsub.s32 6, %v1139
        %v1141 = vrot.slane %v1067, %v1140
        %v1142 = vlaneseq
        %v1143 = vshrl.u32 %v1142, 7
        %v1144 = vsub.s32 7, %v1143
        %v1145 = vrot.slane %v1067, %v1144
        %v1146 = vlaneseq
        %v1147 = vshrl.u32 %v1146, 7
        %v1148 = vsub.s32 0, %v1147
        %v1149 = vrot.slane %v1068, %v1148
        %v1150 = vlaneseq
        %v1151 = vshrl.u32 %v1150, 7
        %v1152 = vsub.s32 1, %v1151
        %v1153 = vrot.slane %v1068, %v1152
        %v1154 = vlaneseq
        %v1155 = vshrl.u32 %v1154, 7
        %v1156 = vsub.s32 2, %v1155
        %v1157 = vrot.slane %v1068, %v1156
        %v1158 = vlaneseq
        %v1159 = vshrl.u32 %v1158, 7
        %v1160 = vsub.s32 3, %v1159
        %v1161 = vrot.slane %v1068, %v1160
        %v1162 = vlaneseq
        %v1163 = vshrl.u32 %v1162, 7
        %v1164 = vsub.s32 4, %v1163
        %v1165 = vrot.slane %v1068, %v1164
        %v1166 = vlaneseq
        %v1167 = vshrl.u32 %v1166, 7
        %v1168 = vsub.s32 5, %v1167
        %v1169 = vrot.slane %v1068, %v1168
        %v1170 = vlaneseq
        %v1171 = vshrl.u32 %v1170, 7
        %v1172 = vsub.s32 6, %v1171
        %v1173 = vrot.slane %v1068, %v1172
        %v1174 = vlaneseq
        %v1175 = vshrl.u32 %v1174, 7
        %v1176 = vsub.s32 7, %v1175
        %v1177 = vrot.slane %v1068, %v1176
        %v1178 = vlaneseq
        %v1179 = vshrl.u32 %v1178, 7
        %v1180 = vsub.s32 0, %v1179
        %v1181 = vrot.slane %v1069, %v1180
        %v1182 = vlaneseq
        %v1183 = vshrl.u32 %v1182, 7
        %v1184 = vsub.s32 1, %v1183
        %v1185 = vrot.slane %v1069, %v1184
        %v1186 = vlaneseq
        %v1187 = vshrl.u32 %v1186, 7
        %v1188 = vsub.s32 2, %v1187
        %v1189 = vrot.slane %v1069, %v1188
        %v1190 = vlaneseq
        %v1191 = vshrl.u32 %v1190, 7
        %v1192 = vsub.s32 3, %v1191
        %v1193 = vrot.slane %v1069, %v1192
        %v1194 = vlaneseq
        %v1195 = vshrl.u32 %v1194, 7
        %v1196 = vsub.s32 4, %v1195
        %v1197 = vrot.slane %v1069, %v1196
        %v1198 = vlaneseq
        %v1199 = vshrl.u32 %v1198, 7
        %v1200 = vsub.s32 5, %v1199
        %v1201 = vrot.slane %v1069, %v1200
        %v1202 = vlaneseq
        %v1203 = vshrl.u32 %v1202, 7
        %v1204 = vsub.s32 6, %v1203
        %v1205 = vrot.slane %v1069, %v1204
        %v1206 = vlaneseq
        %v1207 = vshrl.u32 %v1206, 7
        %v1208 = vsub.s32 7, %v1207
        %v1209 = vrot.slane %v1069, %v1208
        %v1210 = vlaneseq
        %v1211 = vshrl.u32 %v1210, 7
        %v1212 = vsub.s32 0, %v1211
        %v1213 = vrot.slane %v1070, %v1212
        %v1214 = vlaneseq
        %v1215 = vshrl.u32 %v1214, 7
        %v1216 = vsub.s32 1, %v1215
        %v1217 = vrot.slane %v1070, %v1216
        %v1218 = vlaneseq
        %v1219 = vshrl.u32 %v1218, 7
        %v1220 = vsub.s32 2, %v1219
        %v1221 = vrot.slane %v1070, %v1220
        %v1222 = vlaneseq
        %v1223 = vshrl.u32 %v1222, 7
        %v1224 = vsub.s32 3, %v1223
        %v1225 = vrot.slane %v1070, %v1224
        %v1226 = vlaneseq
        %v1227 = vshrl.u32 %v1226, 7
        %v1228 = vsub.s32 4, %v1227
        %v1229 = vrot.slane %v1070, %v1228
        %v1230 = vlaneseq
        %v1231 = vshrl.u32 %v1230, 7
        %v1232 = vsub.s32 5, %v1231
        %v1233 = vrot.slane %v1070, %v1232
        %v1234 = vlaneseq
        %v1235 = vshrl.u32 %v1234, 7
        %v1236 = vsub.s32 6, %v1235
        %v1237 = vrot.slane %v1070, %v1236
        %v1238 = vlaneseq
        %v1239 = vshrl.u32 %v1238, 7
        %v1240 = vsub.s32 7, %v1239
        %v1241 = vrot.slane %v1070, %v1240
        %v1242 = vlaneseq
        %v1243 = vshrl.u32 %v1242, 7
        %v1244 = vsub.s32 0, %v1243
        %v1245 = vrot.slane %v1071, %v1244
        %v1246 = vlaneseq
        %v1247 = vshrl.u32 %v1246, 7
        %v1248 = vsub.s32 1, %v1247
        %v1249 = vrot.slane %v1071, %v1248
        %v1250 = vlaneseq
        %v1251 = vshrl.u32 %v1250, 7
        %v1252 = vsub.s32 2, %v1251
        %v1253 = vrot.slane %v1071, %v1252
        %v1254 = vlaneseq
        %v1255 = vshrl.u32 %v1254, 7
        %v1256 = vsub.s32 3, %v1255
        %v1257 = vrot.slane %v1071, %v1256
        %v1258 = vlaneseq
        %v1259 = vshrl.u32 %v1258, 7
        %v1260 = vsub.s32 4, %v1259
        %v1261 = vrot.slane %v1071, %v1260
        %v1262 = vlaneseq
        %v1263 = vshrl.u32 %v1262, 7
        %v1264 = vsub.s32 5, %v1263
        %v1265 = vrot.slane %v1071, %v1264
        %v1266 = vlaneseq
        %v1267 = vshrl.u32 %v1266, 7
        %v1268 = vsub.s32 6, %v1267
        %v1269 = vrot.slane %v1071, %v1268
        %v1270 = vlaneseq
        %v1271 = vshrl.u32 %v1270, 7
        %v1272 = vsub.s32 7, %v1271
        %v1273 = vrot.slane %v1071, %v1272
        %v1274 = vlaneseq
        %v1275 = vshrl.u32 %v1274, 7
        %v1276 = vsub.s32 0, %v1275
        %v1277 = vrot.slane %v1072, %v1276
        %v1278 = vlaneseq
        %v1279 = vshrl.u32 %v1278, 7
        %v1280 = vsub.s32 1, %v1279
        %v1281 = vrot.slane %v1072, %v1280
        %v1282 = vlaneseq
        %v1283 = vshrl.u32 %v1282, 7
        %v1284 = vsub.s32 2, %v1283
        %v1285 = vrot.slane %v1072, %v1284
        %v1286 = vlaneseq
        %v1287 = vshrl.u32 %v1286, 7
        %v1288 = vsub.s32 3, %v1287
        %v1289 = vrot.slane %v1072, %v1288
        %v1290 = vlaneseq
        %v1291 = vshrl.u32 %v1290, 7
        %v1292 = vsub.s32 4, %v1291
        %v1293 = vrot.slane %v1072, %v1292
        %v1294 = vlaneseq
        %v1295 = vshrl.u32 %v1294, 7
        %v1296 = vsub.s32 5, %v1295
        %v1297 = vrot.slane %v1072, %v1296
        %v1298 = vlaneseq
        %v1299 = vshrl.u32 %v1298, 7
        %v1300 = vsub.s32 6, %v1299
        %v1301 = vrot.slane %v1072, %v1300
        %v1302 = vlaneseq
        %v1303 = vshrl.u32 %v1302, 7
        %v1304 = vsub.s32 7, %v1303
        %v1305 = vrot.slane %v1072, %v1304
        %v1306 = vlaneseq
        %v1307 = vshrl.u32 %v1306, 7
        %v1308 = vsub.s32 0, %v1307
        %v1309 = vrot.slane %v1073, %v1308
        %v1310 = vlaneseq
        %v1311 = vshrl.u32 %v1310, 7
        %v1312 = vsub.s32 1, %v1311
        %v1313 = vrot.slane %v1073, %v1312
        %v1314 = vlaneseq
        %v1315 = vshrl.u32 %v1314, 7
        %v1316 = vsub.s32 2, %v1315
        %v1317 = vrot.slane %v1073, %v1316
        %v1318 = vlaneseq
        %v1319 = vshrl.u32 %v1318, 7
        %v1320 = vsub.s32 3, %v1319
        %v1321 = vrot.slane %v1073, %v1320
        %v1862 = vunpack.c.l.b16 %v586
        %v1863 = vunpack.c.h.b16 %v586
        %v1864 = vunpack.c.l.b16 %v587
        %v1865 = vunpack.c.h.b16 %v587
        %v1866 = vunpack.c.l.b16 %v588
        %v1867 = vunpack.c.h.b16 %v588
        %v1868 = vunpack.c.l.b16 %v589
        %v1869 = vunpack.c.h.b16 %v589
        %v1870 = vunpack.c.l.b16 %v590
        %v1871 = vunpack.c.h.b16 %v590
        %v1872 = vunpack.c.l.b16 %v591
        %v1873 = vunpack.c.h.b16 %v591
        %v1874 = vunpack.c.l.b16 %v592
        %v1875 = vunpack.c.h.b16 %v592
        %v1876 = vunpack.c.l.b16 %v593
        %v1877 = vunpack.c.h.b16 %v593
        %v1878 = vunpack.c.l.b16 %v594
        %v1879 = vunpack.c.h.b16 %v594
        %v1880 = vunpack.c.l.b16 %v595
        %v1881 = vunpack.c.h.b16 %v595
        %v1882 = vunpack.c.l.b16 %v596
        %v1883 = vunpack.c.h.b16 %v596
        %v1884 = vunpack.c.l.b16 %v597
        %v1885 = vunpack.c.h.b16 %v597
        %v1886 = vunpack.c.l.b16 %v598
        %v1887 = vunpack.c.h.b16 %v598
        %v1888 = vunpack.c.l.b16 %v599
        %v1889 = vunpack.c.h.b16 %v599
        %v1890 = vunpack.c.l.b16 %v600
        %v1891 = vunpack.c.h.b16 %v600
        %v1892 = vunpack.c.l.b16 %v601
        %v1893 = vunpack.c.h.b16 %v601
        %v1894 = vunpack.c.l.b16 %v602
        %v1895 = vunpack.c.h.b16 %v602
        %v1896 = vunpack.c.l.b16 %v603
        %v1897 = vunpack.c.h.b16 %v603
        %v1898 = vunpack.c.l.b16 %v604
        %v1899 = vunpack.c.h.b16 %v604
        %v1900 = vunpack.c.l.b16 %v605
        %v1901 = vunpack.c.h.b16 %v605
        %v1902 = vunpack.c.l.b16 %v606
        %v1903 = vunpack.c.h.b16 %v606
        %v1904 = vunpack.c.l.b16 %v607
        %v1905 = vunpack.c.h.b16 %v607
        %v1906 = vunpack.c.l.b16 %v608
        %v1907 = vunpack.c.h.b16 %v608
        %v1908 = vunpack.c.l.b16 %v609
        %v1909 = vunpack.c.h.b16 %v609
        %v1910 = vunpack.c.l.b16 %v610
        %v1911 = vunpack.c.h.b16 %v610
        %v1912 = vunpack.c.l.b16 %v611
        %v1913 = vunpack.c.h.b16 %v611
        %v1914 = vunpack.c.l.b16 %v612
        %v1915 = vunpack.c.h.b16 %v612
        %v1916 = vunpack.c.l.b16 %v613
        %v1917 = vunpack.c.h.b16 %v613
        %v1918 = vunpack.c.l.b16 %v614
        %v1919 = vunpack.c.h.b16 %v614
        %v1920 = vunpack.c.l.b16 %v615
        %v1921 = vunpack.c.h.b16 %v615
        %v1922 = vunpack.c.l.b16 %v616
        %v1923 = vunpack.c.h.b16 %v616
        %v1924 = vunpack.c.l.b16 %v617
        %v1925 = vunpack.c.h.b16 %v617
        %v1926 = vunpack.c.l.b16 %v618
        %v1927 = vunpack.c.h.b16 %v618
        %v1928 = vunpack.c.l.b16 %v619
        %v1929 = vunpack.c.h.b16 %v619
        %v1930 = vunpack.c.l.b16 %v620
        %v1931 = vunpack.c.h.b16 %v620
        %v1932 = vunpack.c.l.b16 %v621
        %v1933 = vunpack.c.h.b16 %v621
        %v1934 = vunpack.c.l.b16 %v622
        %v1935 = vunpack.c.h.b16 %v622
        %v1936 = vunpack.c.l.b16 %v623
        %v1937 = vunpack.c.h.b16 %v623
        %v1938 = vunpack.c.l.b16 %v624
        %v1939 = vunpack.c.h.b16 %v624
        %v1940 = vunpack.c.l.b16 %v625
        %v1941 = vunpack.c.h.b16 %v625
        %v1942 = vunpack.c.l.b16 %v626
        %v1943 = vunpack.c.h.b16 %v626
        %v1944 = vunpack.c.l.b16 %v627
        %v1945 = vunpack.c.h.b16 %v627
        %v1946 = vunpack.c.l.b16 %v628
        %v1947 = vunpack.c.h.b16 %v628
        %v1948 = vunpack.c.l.b16 %v629
        %v1949 = vunpack.c.h.b16 %v629
        %v1950 = vunpack.c.l.b16 %v630
        %v1951 = vunpack.c.h.b16 %v630
        %v1952 = vunpack.c.l.b16 %v631
        %v1953 = vunpack.c.h.b16 %v631
        %v1954 = vunpack.c.l.b16 %v632
        %v1955 = vunpack.c.h.b16 %v632
        %v1956 = vunpack.c.l.b16 %v633
        %v1957 = vunpack.c.h.b16 %v633
        %v1958 = vunpack.c.l.b16 %v634
        %v1959 = vunpack.c.h.b16 %v634
        %v1960 = vunpack.c.l.b16 %v635
        %v1961 = vunpack.c.h.b16 %v635
        %v1962 = vunpack.c.l.b16 %v636
        %v1963 = vunpack.c.h.b16 %v636
        %v1964 = vunpack.c.l.b16 %v637
        %v1965 = vunpack.c.h.b16 %v637
        %v1966 = vunpack.c.l.b16 %v638
        %v1967 = vunpack.c.h.b16 %v638
        %v1968 = vunpack.c.l.b16 %v639
        %v1969 = vunpack.c.h.b16 %v639
        %v1970 = vunpack.c.l.b16 %v640
        %v1971 = vunpack.c.h.b16 %v640
        %v1972 = vunpack.c.l.b16 %v641
        %v1973 = vunpack.c.h.b16 %v641
        %v1974 = vunpack.c.l.b16 %v642
        %v1975 = vunpack.c.h.b16 %v642
        %v1976 = vunpack.c.l.b16 %v643
        %v1977 = vunpack.c.h.b16 %v643
        %v1978 = vunpack.c.l.b16 %v644
        %v1979 = vunpack.c.h.b16 %v644
        %v1980 = vunpack.c.l.b16 %v645
        %v1981 = vunpack.c.h.b16 %v645
        %v1982 = vunpack.c.l.b16 %v646
        %v1983 = vunpack.c.h.b16 %v646
        %v1984 = vunpack.c.l.b16 %v647
        %v1985 = vunpack.c.h.b16 %v647
        %v1986 = vunpack.c.l.b16 %v648
        %v1987 = vunpack.c.h.b16 %v648
        %v1988 = vunpack.c.l.b16 %v649
        %v1989 = vunpack.c.h.b16 %v649
        %v1990 = vunpack.c.l.b16 %v650
        %v1991 = vunpack.c.h.b16 %v650
        %v1992 = vunpack.c.l.b16 %v651
        %v1993 = vunpack.c.h.b16 %v651
        %v1994 = vunpack.c.l.b16 %v652
        %v1995 = vunpack.c.h.b16 %v652
        %v1996 = vunpack.c.l.b16 %v653
        %v1997 = vunpack.c.h.b16 %v653
        %v1998 = vunpack.c.l.b16 %v654
        %v1999 = vunpack.c.h.b16 %v654
        %v2000 = vunpack.c.l.b16 %v655
        %v2001 = vunpack.c.h.b16 %v655
        %v2002 = vunpack.c.l.b16 %v656
        %v2003 = vunpack.c.h.b16 %v656
        %v2004 = vunpack.c.l.b16 %v657
        %v2005 = vunpack.c.h.b16 %v657
        %v2006 = vunpack.c.l.b16 %v658
        %v2007 = vunpack.c.h.b16 %v658
        %v2008 = vunpack.c.l.b16 %v659
        %v2009 = vunpack.c.h.b16 %v659
        %v2010 = vunpack.c.l.b16 %v660
        %v2011 = vunpack.c.h.b16 %v660
        %v2012 = vunpack.c.l.b16 %v661
        %v2013 = vunpack.c.h.b16 %v661
        %v2014 = vunpack.c.l.b16 %v662
        %v2015 = vunpack.c.h.b16 %v662
        %v2016 = vunpack.c.l.b16 %v663
        %v2017 = vunpack.c.h.b16 %v663
        %v2018 = vunpack.c.l.b16 %v664
        %v2019 = vunpack.c.h.b16 %v664
        %v2020 = vunpack.c.l.b16 %v665
        %v2021 = vunpack.c.h.b16 %v665
        %v2022 = vunpack.c.l.b16 %v666
        %v2023 = vunpack.c.h.b16 %v666
        %v2024 = vunpack.c.l.b16 %v667
        %v2025 = vunpack.c.h.b16 %v667
        %v2026 = vunpack.c.l.b16 %v668
        %v2027 = vunpack.c.h.b16 %v668
        %v2028 = vunpack.c.l.b16 %v669
        %v2029 = vunpack.c.h.b16 %v669
        %v2030 = vunpack.c.l.b16 %v670
        %v2031 = vunpack.c.h.b16 %v670
        %v2032 = vunpack.c.l.b16 %v671
        %v2033 = vunpack.c.h.b16 %v671
        %v2034 = vunpack.c.l.b16 %v672
        %v2035 = vunpack.c.h.b16 %v672
        %v2036 = vunpack.c.l.b16 %v673
        %v2037 = vunpack.c.h.b16 %v673
        %v2038 = vunpack.c.l.b16 %v674
        %v2039 = vunpack.c.h.b16 %v674
        %v2040 = vunpack.c.l.b16 %v675
        %v2041 = vunpack.c.h.b16 %v675
        %v2042 = vunpack.c.l.b16 %v676
        %v2043 = vunpack.c.h.b16 %v676
        %v2044 = vunpack.c.l.b16 %v677
        %v2045 = vunpack.c.h.b16 %v677
        %v2046 = vunpack.c.l.b16 %v678
        %v2047 = vunpack.c.h.b16 %v678
        %v2048 = vunpack.c.l.b16 %v679
        %v2049 = vunpack.c.h.b16 %v679
        %v2050 = vunpack.c.l.b16 %v680
        %v2051 = vunpack.c.h.b16 %v680
        %v2052 = vunpack.c.l.b16 %v681
        %v2053 = vunpack.c.h.b16 %v681
        %v2054 = vunpack.c.l.b16 %v682
        %v2055 = vunpack.c.h.b16 %v682
        %v2056 = vunpack.c.l.b16 %v683
        %v2057 = vunpack.c.h.b16 %v683
        %v2058 = vunpack.c.l.b16 %v684
        %v2059 = vunpack.c.h.b16 %v684
        %v2060 = vunpack.c.l.b16 %v685
        %v2061 = vunpack.c.h.b16 %v685
        %v2062 = vunpack.c.l.b16 %v686
        %v2063 = vunpack.c.h.b16 %v686
        %v2064 = vunpack.c.l.b16 %v687
        %v2065 = vunpack.c.h.b16 %v687
        %v2066 = vunpack.c.l.b16 %v688
        %v2067 = vunpack.c.h.b16 %v688
        %v2068 = vunpack.c.l.b16 %v689
        %v2069 = vunpack.c.h.b16 %v689
        %v2070 = vunpack.c.l.b16 %v690
        %v2071 = vunpack.c.h.b16 %v690
        %v2072 = vunpack.c.l.b16 %v691
        %v2073 = vunpack.c.h.b16 %v691
        %v2074 = vunpack.c.l.b16 %v692
        %v2075 = vunpack.c.h.b16 %v692
        %v2076 = vunpack.c.l.b16 %v693
        %v2077 = vunpack.c.h.b16 %v693
        %v2078 = vunpack.c.l.b16 %v694
        %v2079 = vunpack.c.h.b16 %v694
        %v2080 = vunpack.c.l.b16 %v695
        %v2081 = vunpack.c.h.b16 %v695
        %v2082 = vunpack.c.l.b16 %v696
        %v2083 = vunpack.c.h.b16 %v696
        %v2084 = vunpack.c.l.b16 %v697
        %v2085 = vunpack.c.h.b16 %v697
        %v2086 = vunpack.c.l.b16 %v698
        %v2087 = vunpack.c.h.b16 %v698
        %v2088 = vunpack.c.l.b16 %v699
        %v2089 = vunpack.c.h.b16 %v699
        %v2090 = vunpack.c.l.b16 %v700
        %v2091 = vunpack.c.h.b16 %v700
        %v2092 = vunpack.c.l.b16 %v701
        %v2093 = vunpack.c.h.b16 %v701
        %v2094 = vunpack.c.l.b16 %v702
        %v2095 = vunpack.c.h.b16 %v702
        %v2096 = vunpack.c.l.b16 %v703
        %v2097 = vunpack.c.h.b16 %v703
        %v2098 = vunpack.c.l.b16 %v704
        %v2099 = vunpack.c.h.b16 %v704
        %v2100 = vunpack.c.l.b16 %v705
        %v2101 = vunpack.c.h.b16 %v705
        %v2102 = vunpack.c.l.b16 %v706
        %v2103 = vunpack.c.h.b16 %v706
        %v2104 = vunpack.c.l.b16 %v707
        %v2105 = vunpack.c.h.b16 %v707
        %v2106 = vunpack.c.l.b16 %v708
        %v2107 = vunpack.c.h.b16 %v708
        %v2108 = vunpack.c.l.b16 %v709
        %v2109 = vunpack.c.h.b16 %v709
        %v2110 = vunpack.c.l.b16 %v710
        %v2111 = vunpack.c.h.b16 %v710
        %v2112 = vunpack.c.l.b16 %v711
        %v2113 = vunpack.c.h.b16 %v711
        %v2114 = vunpack.c.l.b16 %v712
        %v2115 = vunpack.c.h.b16 %v712
        %v2116 = vunpack.c.l.b16 %v713
        %v2117 = vunpack.c.h.b16 %v713
        %v2118 = vunpack.c.l.b16 %v714
        %v2119 = vunpack.c.h.b16 %v714
        %v2120 = vunpack.c.l.b16 %v715
        %v2121 = vunpack.c.h.b16 %v715
        %v2122 = vunpack.c.l.b16 %v716
        %v2123 = vunpack.c.h.b16 %v716
        %v2124 = vunpack.c.l.b16 %v717
        %v2125 = vunpack.c.h.b16 %v717
        %v2126 = vunpack.c.l.b16 %v718
        %v2127 = vunpack.c.h.b16 %v718
        %v2128 = vunpack.c.l.b16 %v719
        %v2129 = vunpack.c.h.b16 %v719
        %v2130 = vunpack.c.l.b16 %v720
        %v2131 = vunpack.c.h.b16 %v720
        %v2132 = vunpack.c.l.b16 %v721
        %v2133 = vunpack.c.h.b16 %v721
        %v2134 = vunpack.c.l.b16 %v722
        %v2135 = vunpack.c.h.b16 %v722
        %v2136 = vunpack.c.l.b16 %v723
        %v2137 = vunpack.c.h.b16 %v723
        %v2138 = vunpack.c.l.b16 %v724
        %v2139 = vunpack.c.h.b16 %v724
        %v2140 = vunpack.c.l.b16 %v725
        %v2141 = vunpack.c.h.b16 %v725
        %v2142 = vunpack.c.l.b16 %v726
        %v2143 = vunpack.c.h.b16 %v726
        %v2144 = vunpack.c.l.b16 %v727
        %v2145 = vunpack.c.h.b16 %v727
        %v2146 = vunpack.c.l.b16 %v728
        %v2147 = vunpack.c.h.b16 %v728
        %v2148 = vunpack.c.l.b16 %v729
        %v2149 = vunpack.c.h.b16 %v729
        %v2150 = vunpack.c.l.b16 %v730
        %v2151 = vunpack.c.h.b16 %v730
        %v2152 = vunpack.c.l.b16 %v731
        %v2153 = vunpack.c.h.b16 %v731
        %v2154 = vunpack.c.l.b16 %v732
        %v2155 = vunpack.c.h.b16 %v732
        %v2156 = vunpack.c.l.b16 %v733
        %v2157 = vunpack.c.h.b16 %v733
        %v2158 = vunpack.c.l.b16 %v734
        %v2159 = vunpack.c.h.b16 %v734
        %v2160 = vunpack.c.l.b16 %v735
        %v2161 = vunpack.c.h.b16 %v735
        %v2162 = vunpack.c.l.b16 %v736
        %v2163 = vunpack.c.h.b16 %v736
        %v2164 = vunpack.c.l.b16 %v737
        %v2165 = vunpack.c.h.b16 %v737
        %v2166 = vunpack.c.l.b16 %v738
        %v2167 = vunpack.c.h.b16 %v738
        %v2168 = vunpack.c.l.b16 %v739
        %v2169 = vunpack.c.h.b16 %v739
        %v2170 = vunpack.c.l.b16 %v740
        %v2171 = vunpack.c.h.b16 %v740
        %v2172 = vunpack.c.l.b16 %v741
        %v2173 = vunpack.c.h.b16 %v741
        %v2174 = vunpack.c.l.b16 %v742
        %v2175 = vunpack.c.h.b16 %v742
        %v2176 = vunpack.c.l.b16 %v743
        %v2177 = vunpack.c.h.b16 %v743
        %v2178 = vunpack.c.l.b16 %v744
        %v2179 = vunpack.c.h.b16 %v744
        %v2180 = vunpack.c.l.b16 %v745
        %v2181 = vunpack.c.h.b16 %v745
        %v2182 = vunpack.c.l.b16 %v746
        %v2183 = vunpack.c.h.b16 %v746
        %v2184 = vunpack.c.l.b16 %v747
        %v2185 = vunpack.c.h.b16 %v747
        %v2186 = vunpack.c.l.b16 %v748
        %v2187 = vunpack.c.h.b16 %v748
        %v2188 = vunpack.c.l.b16 %v749
        %v2189 = vunpack.c.h.b16 %v749
        %v2190 = vunpack.c.l.b16 %v750
        %v2191 = vunpack.c.h.b16 %v750
        %v2192 = vunpack.c.l.b16 %v751
        %v2193 = vunpack.c.h.b16 %v751
        %v2194 = vunpack.c.l.b16 %v752
        %v2195 = vunpack.c.h.b16 %v752
        %v2196 = vunpack.c.l.b16 %v753
        %v2197 = vunpack.c.h.b16 %v753
        %v2198 = vunpack.c.l.b16 %v754
        %v2199 = vunpack.c.h.b16 %v754
        %v2200 = vunpack.c.l.b16 %v755
        %v2201 = vunpack.c.h.b16 %v755
        %v2202 = vunpack.c.l.b16 %v756
        %v2203 = vunpack.c.h.b16 %v756
        %v2204 = vunpack.c.l.b16 %v757
        %v2205 = vunpack.c.h.b16 %v757
        %v2206 = vunpack.c.l.b16 %v758
        %v2207 = vunpack.c.h.b16 %v758
        %v2208 = vunpack.c.l.b16 %v759
        %v2209 = vunpack.c.h.b16 %v759
        %v2210 = vunpack.c.l.b16 %v760
        %v2211 = vunpack.c.h.b16 %v760
        %v2212 = vunpack.c.l.b16 %v761
        %v2213 = vunpack.c.h.b16 %v761
        %v2214 = vunpack.c.l.b16 %v762
        %v2215 = vunpack.c.h.b16 %v762
        %v2216 = vunpack.c.l.b16 %v763
        %v2217 = vunpack.c.h.b16 %v763
        %v2218 = vunpack.c.l.b16 %v764
        %v2219 = vunpack.c.h.b16 %v764
        %v2220 = vunpack.c.l.b16 %v765
        %v2221 = vunpack.c.h.b16 %v765
        %v2222 = vunpack.c.l.b16 %v766
        %v2223 = vunpack.c.h.b16 %v766
        %v2224 = vunpack.c.l.b16 %v767
        %v2225 = vunpack.c.h.b16 %v767
        %v2226 = vunpack.c.l.b16 %v768
        %v2227 = vunpack.c.h.b16 %v768
        %v2228 = vunpack.c.l.b16 %v769
        %v2229 = vunpack.c.h.b16 %v769
        %v2230 = vunpack.c.l.b16 %v770
        %v2231 = vunpack.c.h.b16 %v770
        %v2232 = vunpack.c.l.b16 %v771
        %v2233 = vunpack.c.h.b16 %v771
        %v2234 = vunpack.c.l.b16 %v772
        %v2235 = vunpack.c.h.b16 %v772
        %v2236 = vunpack.c.l.b16 %v773
        %v2237 = vunpack.c.h.b16 %v773
        %v2238 = vunpack.c.l.b16 %v774
        %v2239 = vunpack.c.h.b16 %v774
        %v2240 = vunpack.c.l.b16 %v775
        %v2241 = vunpack.c.h.b16 %v775
        %v2242 = vunpack.c.l.b16 %v776
        %v2243 = vunpack.c.h.b16 %v776
        %v2244 = vunpack.c.l.b16 %v777
        %v2245 = vunpack.c.h.b16 %v777
        %v2246 = vunpack.c.l.b16 %v778
        %v2247 = vunpack.c.h.b16 %v778
        %v2248 = vunpack.c.l.b16 %v779
        %v2249 = vunpack.c.h.b16 %v779
        %v2250 = vunpack.c.l.b16 %v780
        %v2251 = vunpack.c.h.b16 %v780
        %v2252 = vunpack.c.l.b16 %v781
        %v2253 = vunpack.c.h.b16 %v781
        %v2254 = vunpack.c.l.b16 %v782
        %v2255 = vunpack.c.h.b16 %v782
        %v2256 = vunpack.c.l.b16 %v783
        %v2257 = vunpack.c.h.b16 %v783
        %v2258 = vunpack.c.l.b16 %v784
        %v2259 = vunpack.c.h.b16 %v784
        %v2260 = vunpack.c.l.b16 %v785
        %v2261 = vunpack.c.h.b16 %v785
        %v2262 = vunpack.c.l.b16 %v786
        %v2263 = vunpack.c.h.b16 %v786
        %v2264 = vunpack.c.l.b16 %v787
        %v2265 = vunpack.c.h.b16 %v787
        %v2266 = vunpack.c.l.b16 %v788
        %v2267 = vunpack.c.h.b16 %v788
        %v2268 = vunpack.c.l.b16 %v789
        %v2269 = vunpack.c.h.b16 %v789
        %v2270 = vunpack.c.l.b16 %v790
        %v2271 = vunpack.c.h.b16 %v790
        %v2272 = vunpack.c.l.b16 %v791
        %v2273 = vunpack.c.h.b16 %v791
        %v2274 = vunpack.c.l.b16 %v792
        %v2275 = vunpack.c.h.b16 %v792
        %v2276 = vunpack.c.l.b16 %v793
        %v2277 = vunpack.c.h.b16 %v793
        %v2278 = vunpack.c.l.b16 %v794
        %v2279 = vunpack.c.h.b16 %v794
        %v2280 = vunpack.c.l.b16 %v795
        %v2281 = vunpack.c.h.b16 %v795
        %v2282 = vunpack.c.l.b16 %v796
        %v2283 = vunpack.c.h.b16 %v796
        %v2284 = vunpack.c.l.b16 %v797
        %v2285 = vunpack.c.h.b16 %v797
        %v2286 = vunpack.c.l.b16 %v798
        %v2287 = vunpack.c.h.b16 %v798
        %v2288 = vunpack.c.l.b16 %v799
        %v2289 = vunpack.c.h.b16 %v799
        %v2290 = vunpack.c.l.b16 %v800
        %v2291 = vunpack.c.h.b16 %v800
        %v2292 = vunpack.c.l.b16 %v801
        %v2293 = vunpack.c.h.b16 %v801
        %v2294 = vunpack.c.l.b16 %v802
        %v2295 = vunpack.c.h.b16 %v802
        %v2296 = vunpack.c.l.b16 %v803
        %v2297 = vunpack.c.h.b16 %v803
        %v2298 = vunpack.c.l.b16 %v804
        %v2299 = vunpack.c.h.b16 %v804
        %v2300 = vunpack.c.l.b16 %v805
        %v2301 = vunpack.c.h.b16 %v805
        %v2302 = vunpack.c.l.b16 %v806
        %v2303 = vunpack.c.h.b16 %v806
        %v2304 = vunpack.c.l.b16 %v807
        %v2305 = vunpack.c.h.b16 %v807
        %v2306 = vunpack.c.l.b16 %v808
        %v2307 = vunpack.c.h.b16 %v808
        %v2308 = vunpack.c.l.b16 %v809
        %v2309 = vunpack.c.h.b16 %v809
        %v2310 = vunpack.c.l.b16 %v810
        %v2311 = vunpack.c.h.b16 %v810
        %v2312 = vunpack.c.l.b16 %v811
        %v2313 = vunpack.c.h.b16 %v811
        %v2314 = vunpack.c.l.b16 %v812
        %v2315 = vunpack.c.h.b16 %v812
        %v2316 = vunpack.c.l.b16 %v813
        %v2317 = vunpack.c.h.b16 %v813
        %v2318 = vunpack.c.l.b16 %v814
        %v2319 = vunpack.c.h.b16 %v814
        %v2320 = vunpack.c.l.b16 %v815
        %v2321 = vunpack.c.h.b16 %v815
        %v2322 = vunpack.c.l.b16 %v816
        %v2323 = vunpack.c.h.b16 %v816
        %v2324 = vunpack.c.l.b16 %v817
        %v2325 = vunpack.c.h.b16 %v817
        %v2326 = vunpack.c.l.b16 %v818
        %v2327 = vunpack.c.h.b16 %v818
        %v2328 = vunpack.c.l.b16 %v819
        %v2329 = vunpack.c.h.b16 %v819
        %v2330 = vunpack.c.l.b16 %v820
        %v2331 = vunpack.c.h.b16 %v820
        %v2332 = vunpack.c.l.b16 %v821
        %v2333 = vunpack.c.h.b16 %v821
        %v2334 = vunpack.c.l.b16 %v822
        %v2335 = vunpack.c.h.b16 %v822
        %v2336 = vunpack.c.l.b16 %v823
        %v2337 = vunpack.c.h.b16 %v823
        %v2338 = vunpack.c.l.b16 %v824
        %v2339 = vunpack.c.h.b16 %v824
        %v2340 = vunpack.c.l.b16 %v825
        %v2341 = vunpack.c.h.b16 %v825
        %v2342 = vunpack.c.l.b16 %v826
        %v2343 = vunpack.c.h.b16 %v826
        %v2344 = vunpack.c.l.b16 %v827
        %v2345 = vunpack.c.h.b16 %v827
        %v2346 = vunpack.c.l.b16 %v828
        %v2347 = vunpack.c.h.b16 %v828
        %v2348 = vunpack.c.l.b16 %v829
        %v2349 = vunpack.c.h.b16 %v829
        %v2350 = vunpack.c.l.b16 %v830
        %v2351 = vunpack.c.h.b16 %v830
        %v2352 = vunpack.c.l.b16 %v831
        %v2353 = vunpack.c.h.b16 %v831
        %v2354 = vunpack.c.l.b16 %v832
        %v2355 = vunpack.c.h.b16 %v832
        %v2356 = vunpack.c.l.b16 %v833
        %v2357 = vunpack.c.h.b16 %v833
        %v2358 = vunpack.c.l.b16 %v834
        %v2359 = vunpack.c.h.b16 %v834
        %v2360 = vunpack.c.l.b16 %v835
        %v2361 = vunpack.c.h.b16 %v835
        %v2362 = vunpack.c.l.b16 %v836
        %v2363 = vunpack.c.h.b16 %v836
        %v2364 = vunpack.c.l.b16 %v837
        %v2365 = vunpack.c.h.b16 %v837
        %v2366 = vunpack.c.l.b16 %v838
        %v2367 = vunpack.c.h.b16 %v838
        %v2368 = vunpack.c.l.b16 %v839
        %v2369 = vunpack.c.h.b16 %v839
        %v2370 = vunpack.c.l.b16 %v840
        %v2371 = vunpack.c.h.b16 %v840
        %v2372 = vunpack.c.l.b16 %v841
        %v2373 = vunpack.c.h.b16 %v841
        %v2374 = vunpack.c.l.b16 %v842
        %v2375 = vunpack.c.h.b16 %v842
        %v2376 = vunpack.c.l.b16 %v843
        %v2377 = vunpack.c.h.b16 %v843
        %v2378 = vunpack.c.l.b16 %v844
        %v2379 = vunpack.c.h.b16 %v844
        %v2380 = vunpack.c.l.b16 %v845
        %v2381 = vunpack.c.h.b16 %v845
        %v2382 = vunpack.c.l.b16 %v846
        %v2383 = vunpack.c.h.b16 %v846
        %v2384 = vunpack.c.l.b16 %v847
        %v2385 = vunpack.c.h.b16 %v847
        %v2386 = vunpack.c.l.b16 %v848
        %v2387 = vunpack.c.h.b16 %v848
        %v2388 = vunpack.c.l.b16 %v849
        %v2389 = vunpack.c.h.b16 %v849
        %v2390 = vunpack.c.l.b16 %v850
        %v2391 = vunpack.c.h.b16 %v850
        %v2392 = vunpack.c.l.b16 %v851
        %v2393 = vunpack.c.h.b16 %v851
        %v2394 = vunpack.c.l.b16 %v852
        %v2395 = vunpack.c.h.b16 %v852
        %v2396 = vunpack.c.l.b16 %v853
        %v2397 = vunpack.c.h.b16 %v853
        %v2398 = vunpack.c.l.b16 %v854
        %v2399 = vunpack.c.h.b16 %v854
        %v2400 = vunpack.c.l.b16 %v855
        %v2401 = vunpack.c.h.b16 %v855
        %v2402 = vunpack.c.l.b16 %v856
        %v2403 = vunpack.c.h.b16 %v856
        %v2404 = vunpack.c.l.b16 %v857
        %v2405 = vunpack.c.h.b16 %v857
        %v2406 = vunpack.c.l.b16 %v858
        %v2407 = vunpack.c.h.b16 %v858
        %v2408 = vunpack.c.l.b16 %v859
        %v2409 = vunpack.c.h.b16 %v859
        %v2410 = vunpack.c.l.b16 %v860
        %v2411 = vunpack.c.h.b16 %v860
        %v2412 = vunpack.c.l.b16 %v861
        %v2413 = vunpack.c.h.b16 %v861
        %v2414 = vunpack.c.l.b16 %v862
        %v2415 = vunpack.c.h.b16 %v862
        %v2416 = vunpack.c.l.b16 %v863
        %v2417 = vunpack.c.h.b16 %v863
        %v2418 = vunpack.c.l.b16 %v864
        %v2419 = vunpack.c.h.b16 %v864
        %v2420 = vunpack.c.l.b16 %v865
        %v2421 = vunpack.c.h.b16 %v865
        %v2422 = vunpack.c.l.b16 %v866
        %v2423 = vunpack.c.h.b16 %v866
        %v2424 = vunpack.c.l.b16 %v867
        %v2425 = vunpack.c.h.b16 %v867
        %v2426 = vunpack.c.l.b16 %v868
        %v2427 = vunpack.c.h.b16 %v868
        %v2428 = vunpack.c.l.b16 %v869
        %v2429 = vunpack.c.h.b16 %v869
        %v2430 = vunpack.c.l.b16 %v870
        %v2431 = vunpack.c.h.b16 %v870
        %v2432 = vunpack.c.l.b16 %v871
        %v2433 = vunpack.c.h.b16 %v871
        %v2434 = vunpack.c.l.b16 %v872
        %v2435 = vunpack.c.h.b16 %v872
        %v2436 = vunpack.c.l.b16 %v873
        %v2437 = vunpack.c.h.b16 %v873
        %v2438 = vunpack.c.l.b16 %v874
        %v2439 = vunpack.c.h.b16 %v874
        %v2440 = vunpack.c.l.b16 %v875
        %v2441 = vunpack.c.h.b16 %v875
        %v2442 = vunpack.c.l.b16 %v876
        %v2443 = vunpack.c.h.b16 %v876
        %v2444 = vunpack.c.l.b16 %v877
        %v2445 = vunpack.c.h.b16 %v877
        %v2446 = vunpack.c.l.b16 %v878
        %v2447 = vunpack.c.h.b16 %v878
        %v2448 = vunpack.c.l.b16 %v879
        %v2449 = vunpack.c.h.b16 %v879
        %v2450 = vunpack.c.l.b16 %v880
        %v2451 = vunpack.c.h.b16 %v880
        %v2452 = vunpack.c.l.b16 %v881
        %v2453 = vunpack.c.h.b16 %v881
        %v2454 = vunpack.c.l.b16 %v882
        %v2455 = vunpack.c.h.b16 %v882
        %v2456 = vunpack.c.l.b16 %v883
        %v2457 = vunpack.c.h.b16 %v883
        %v2458 = vunpack.c.l.b16 %v884
        %v2459 = vunpack.c.h.b16 %v884
        %v2460 = vunpack.c.l.b16 %v885
        %v2461 = vunpack.c.h.b16 %v885
        %v2462 = vunpack.c.l.b16 %v886
        %v2463 = vunpack.c.h.b16 %v886
        %v2464 = vunpack.c.l.b16 %v887
        %v2465 = vunpack.c.h.b16 %v887
        %v2466 = vunpack.c.l.b16 %v888
        %v2467 = vunpack.c.h.b16 %v888
        %v2468 = vunpack.c.l.b16 %v889
        %v2469 = vunpack.c.h.b16 %v889
        %v2470 = vunpack.c.l.b16 %v890
        %v2471 = vunpack.c.h.b16 %v890
        %v2472 = vunpack.c.l.b16 %v891
        %v2473 = vunpack.c.h.b16 %v891
        %v2474 = vunpack.c.l.b16 %v892
        %v2475 = vunpack.c.h.b16 %v892
        %v2476 = vunpack.c.l.b16 %v893
        %v2477 = vunpack.c.h.b16 %v893
        %v2478 = vunpack.c.l.b16 %v894
        %v2479 = vunpack.c.h.b16 %v894
        %v2480 = vunpack.c.l.b16 %v895
        %v2481 = vunpack.c.h.b16 %v895
        %v2482 = vunpack.c.l.b16 %v896
        %v2483 = vunpack.c.h.b16 %v896
        %v2484 = vunpack.c.l.b16 %v897
        %v2485 = vunpack.c.h.b16 %v897
        %v2486 = vunpack.c.l.b16 %v898
        %v2487 = vunpack.c.h.b16 %v898
        %v2488 = vunpack.c.l.b16 %v899
        %v2489 = vunpack.c.h.b16 %v899
        %v2490 = vunpack.c.l.b16 %v900
        %v2491 = vunpack.c.h.b16 %v900
        %v2492 = vunpack.c.l.b16 %v901
        %v2493 = vunpack.c.h.b16 %v901
        %v2494 = vunpack.c.l.b16 %v902
        %v2495 = vunpack.c.h.b16 %v902
        %v2496 = vunpack.c.l.b16 %v903
        %v2497 = vunpack.c.h.b16 %v903
        %v2498 = vunpack.c.l.b16 %v904
        %v2499 = vunpack.c.h.b16 %v904
        %v2500 = vunpack.c.l.b16 %v905
        %v2501 = vunpack.c.h.b16 %v905
        %v2502 = vunpack.c.l.b16 %v906
        %v2503 = vunpack.c.h.b16 %v906
        %v2504 = vunpack.c.l.b16 %v907
        %v2505 = vunpack.c.h.b16 %v907
        %v2506 = vunpack.c.l.b16 %v908
        %v2507 = vunpack.c.h.b16 %v908
        %v2508 = vunpack.c.l.b16 %v909
        %v2509 = vunpack.c.h.b16 %v909
        %v2510 = vunpack.c.l.b16 %v910
        %v2511 = vunpack.c.h.b16 %v910
        %v2512 = vunpack.c.l.b16 %v911
        %v2513 = vunpack.c.h.b16 %v911
        %v2514 = vunpack.c.l.b16 %v912
        %v2515 = vunpack.c.h.b16 %v912
        %v2516 = vunpack.c.l.b16 %v913
        %v2517 = vunpack.c.h.b16 %v913
        %v2518 = vunpack.c.l.b16 %v914
        %v2519 = vunpack.c.h.b16 %v914
        %v2520 = vunpack.c.l.b16 %v915
        %v2521 = vunpack.c.h.b16 %v915
        %v2522 = vunpack.c.l.b16 %v916
        %v2523 = vunpack.c.h.b16 %v916
        %v2524 = vunpack.c.l.b16 %v917
        %v2525 = vunpack.c.h.b16 %v917
        %v2526 = vunpack.c.l.b16 %v918
        %v2527 = vunpack.c.h.b16 %v918
        %v2528 = vunpack.c.l.b16 %v919
        %v2529 = vunpack.c.h.b16 %v919
        %v2530 = vunpack.c.l.b16 %v920
        %v2531 = vunpack.c.h.b16 %v920
        %v2532 = vunpack.c.l.b16 %v921
        %v2533 = vunpack.c.h.b16 %v921
        %v2534 = vunpack.c.l.b16 %v922
        %v2535 = vunpack.c.h.b16 %v922
        %v2536 = vunpack.c.l.b16 %v923
        %v2537 = vunpack.c.h.b16 %v923
        %v2538 = vunpack.c.l.b16 %v924
        %v2539 = vunpack.c.h.b16 %v924
        %v2540 = vunpack.c.l.b16 %v925
        %v2541 = vunpack.c.h.b16 %v925
        %v2542 = vunpack.c.l.b16 %v926
        %v2543 = vunpack.c.h.b16 %v926
        %v2544 = vunpack.c.l.b16 %v927
        %v2545 = vunpack.c.h.b16 %v927
        %v2546 = vunpack.c.l.b16 %v928
        %v2547 = vunpack.c.h.b16 %v928
        %v2548 = vunpack.c.l.b16 %v929
        %v2549 = vunpack.c.h.b16 %v929
        %v2550 = vunpack.c.l.b16 %v930
        %v2551 = vunpack.c.h.b16 %v930
        %v2552 = vunpack.c.l.b16 %v931
        %v2553 = vunpack.c.h.b16 %v931
        %v2554 = vunpack.c.l.b16 %v932
        %v2555 = vunpack.c.h.b16 %v932
        %v2556 = vunpack.c.l.b16 %v933
        %v2557 = vunpack.c.h.b16 %v933
        %v2558 = vunpack.c.l.b16 %v934
        %v2559 = vunpack.c.h.b16 %v934
        %v2560 = vunpack.c.l.b16 %v935
        %v2561 = vunpack.c.h.b16 %v935
        %v2562 = vunpack.c.l.b16 %v936
        %v2563 = vunpack.c.h.b16 %v936
        %v2564 = vunpack.c.l.b16 %v937
        %v2565 = vunpack.c.h.b16 %v937
        %v2566 = vunpack.c.l.b16 %v938
        %v2567 = vunpack.c.h.b16 %v938
        %v2568 = vunpack.c.l.b16 %v939
        %v2569 = vunpack.c.h.b16 %v939
        %v2570 = vunpack.c.l.b16 %v940
        %v2571 = vunpack.c.h.b16 %v940
        %v2572 = vunpack.c.l.b16 %v941
        %v2573 = vunpack.c.h.b16 %v941
        %v2574 = vunpack.c.l.b16 %v942
        %v2575 = vunpack.c.h.b16 %v942
        %v2576 = vunpack.c.l.b16 %v943
        %v2577 = vunpack.c.h.b16 %v943
        %v2578 = vunpack.c.l.b16 %v944
        %v2579 = vunpack.c.h.b16 %v944
        %v2580 = vunpack.c.l.b16 %v945
        %v2581 = vunpack.c.h.b16 %v945
        %v2582 = vunpack.c.l.b16 %v946
        %v2583 = vunpack.c.h.b16 %v946
        %v2584 = vunpack.c.l.b16 %v947
        %v2585 = vunpack.c.h.b16 %v947
        %v2586 = vunpack.c.l.b16 %v948
        %v2587 = vunpack.c.h.b16 %v948
        %v2588 = vunpack.c.l.b16 %v949
        %v2589 = vunpack.c.h.b16 %v949
        %v2590 = vunpack.c.l.b16 %v950
        %v2591 = vunpack.c.h.b16 %v950
        %v2592 = vunpack.c.l.b16 %v951
        %v2593 = vunpack.c.h.b16 %v951
        %v2594 = vunpack.c.l.b16 %v952
        %v2595 = vunpack.c.h.b16 %v952
        %v2596 = vunpack.c.l.b16 %v953
        %v2597 = vunpack.c.h.b16 %v953
        %v2598 = vunpack.c.l.b16 %v954
        %v2599 = vunpack.c.h.b16 %v954
        %v2600 = vunpack.c.l.b16 %v955
        %v2601 = vunpack.c.h.b16 %v955
        %v2602 = vunpack.c.l.b16 %v956
        %v2603 = vunpack.c.h.b16 %v956
        %v2604 = vunpack.c.l.b16 %v957
        %v2605 = vunpack.c.h.b16 %v957
        %v2606 = vunpack.c.l.b16 %v958
        %v2607 = vunpack.c.h.b16 %v958
        %v2608 = vunpack.c.l.b16 %v959
        %v2609 = vunpack.c.h.b16 %v959
        %v2610 = vunpack.c.l.b16 %v960
        %v2611 = vunpack.c.h.b16 %v960
        %v2612 = vunpack.c.l.b16 %v961
        %v2613 = vunpack.c.h.b16 %v961
        %v2614 = vunpack.c.l.b16 %v962
        %v2615 = vunpack.c.h.b16 %v962
        %v2616 = vunpack.c.l.b16 %v963
        %v2617 = vunpack.c.h.b16 %v963
        %v2618 = vunpack.c.l.b16 %v964
        %v2619 = vunpack.c.h.b16 %v964
        %v2620 = vunpack.c.l.b16 %v965
        %v2621 = vunpack.c.h.b16 %v965
        %v2622 = vunpack.c.l.b16 %v966
        %v2623 = vunpack.c.h.b16 %v966
        %v2624 = vunpack.c.l.b16 %v967
        %v2625 = vunpack.c.h.b16 %v967
        %v2626 = vunpack.c.l.b16 %v968
        %v2627 = vunpack.c.h.b16 %v968
        %v2628 = vunpack.c.l.b16 %v969
        %v2629 = vunpack.c.h.b16 %v969
        %v2630 = vunpack.c.l.b16 %v970
        %v2631 = vunpack.c.h.b16 %v970
        %v2632 = vunpack.c.l.b16 %v971
        %v2633 = vunpack.c.h.b16 %v971
        %v2634 = vunpack.c.l.b16 %v972
        %v2635 = vunpack.c.h.b16 %v972
        %v2636 = vunpack.c.l.b16 %v973
        %v2637 = vunpack.c.h.b16 %v973
        %v2638 = vunpack.c.l.b16 %v974
        %v2639 = vunpack.c.h.b16 %v974
        %v2640 = vunpack.c.l.b16 %v975
        %v2641 = vunpack.c.h.b16 %v975
        %v2642 = vunpack.c.l.b16 %v976
        %v2643 = vunpack.c.h.b16 %v976
        %v2644 = vunpack.c.l.b16 %v977
        %v2645 = vunpack.c.h.b16 %v977
        %v2646 = vunpack.c.l.b16 %v978
        %v2647 = vunpack.c.h.b16 %v978
        %v2648 = vunpack.c.l.b16 %v979
        %v2649 = vunpack.c.h.b16 %v979
        %v2650 = vunpack.c.l.b16 %v980
        %v2651 = vunpack.c.h.b16 %v980
        %v2652 = vunpack.c.l.b16 %v981
        %v2653 = vunpack.c.h.b16 %v981
        %v2654 = vunpack.c.l.b16 %v982
        %v2655 = vunpack.c.h.b16 %v982
        %v2656 = vunpack.c.l.b16 %v983
        %v2657 = vunpack.c.h.b16 %v983
        %v2658 = vunpack.c.l.b16 %v984
        %v2659 = vunpack.c.h.b16 %v984
        %v2660 = vunpack.c.l.b16 %v985
        %v2661 = vunpack.c.h.b16 %v985
        %v2662 = vunpack.c.l.b16 %v986
        %v2663 = vunpack.c.h.b16 %v986
        %v2664 = vunpack.c.l.b16 %v987
        %v2665 = vunpack.c.h.b16 %v987
        %v2666 = vunpack.c.l.b16 %v988
        %v2667 = vunpack.c.h.b16 %v988
        %v2668 = vunpack.c.l.b16 %v989
        %v2669 = vunpack.c.h.b16 %v989
        %v2670 = vunpack.c.l.b16 %v990
        %v2671 = vunpack.c.h.b16 %v990
        %v2672 = vunpack.c.l.b16 %v991
        %v2673 = vunpack.c.h.b16 %v991
        %v2674 = vunpack.c.l.b16 %v992
        %v2675 = vunpack.c.h.b16 %v992
        %v2676 = vunpack.c.l.b16 %v993
        %v2677 = vunpack.c.h.b16 %v993
        %v2678 = vunpack.c.l.b16 %v994
        %v2679 = vunpack.c.h.b16 %v994
        %v2680 = vunpack.c.l.b16 %v995
        %v2681 = vunpack.c.h.b16 %v995
        %v2682 = vunpack.c.l.b16 %v996
        %v2683 = vunpack.c.h.b16 %v996
        %v2684 = vunpack.c.l.b16 %v997
        %v2685 = vunpack.c.h.b16 %v997
        %v2686 = vunpack.c.l.b16 %v998
        %v2687 = vunpack.c.h.b16 %v998
        %v2688 = vunpack.c.l.b16 %v999
        %v2689 = vunpack.c.h.b16 %v999
        %v2690 = vunpack.c.l.b16 %v1000
        %v2691 = vunpack.c.h.b16 %v1000
        %v2692 = vunpack.c.l.b16 %v1001
        %v2693 = vunpack.c.h.b16 %v1001
        %v2694 = vunpack.c.l.b16 %v1002
        %v2695 = vunpack.c.h.b16 %v1002
        %v2696 = vunpack.c.l.b16 %v1003
        %v2697 = vunpack.c.h.b16 %v1003
        %v2698 = vunpack.c.l.b16 %v1004
        %v2699 = vunpack.c.h.b16 %v1004
        %v2700 = vunpack.c.l.b16 %v1005
        %v2701 = vunpack.c.h.b16 %v1005
        %v2702 = vunpack.c.l.b16 %v1006
        %v2703 = vunpack.c.h.b16 %v1006
        %v2704 = vunpack.c.l.b16 %v1007
        %v2705 = vunpack.c.h.b16 %v1007
        %v2706 = vunpack.c.l.b16 %v1008
        %v2707 = vunpack.c.h.b16 %v1008
        %v2708 = vunpack.c.l.b16 %v1009
        %v2709 = vunpack.c.h.b16 %v1009
        %v2710 = vunpack.c.l.b16 %v1010
        %v2711 = vunpack.c.h.b16 %v1010
        %v2712 = vunpack.c.l.b16 %v1011
        %v2713 = vunpack.c.h.b16 %v1011
        %v2714 = vunpack.c.l.b16 %v1012
        %v2715 = vunpack.c.h.b16 %v1012
        %v2716 = vunpack.c.l.b16 %v1013
        %v2717 = vunpack.c.h.b16 %v1013
        %v2718 = vunpack.c.l.b16 %v1014
        %v2719 = vunpack.c.h.b16 %v1014
        %v2720 = vunpack.c.l.b16 %v1015
        %v2721 = vunpack.c.h.b16 %v1015
        %v2722 = vunpack.c.l.b16 %v1016
        %v2723 = vunpack.c.h.b16 %v1016
        %v2724 = vunpack.c.l.b16 %v1017
        %v2725 = vunpack.c.h.b16 %v1017
        %v2726 = vunpack.c.l.b16 %v1018
        %v2727 = vunpack.c.h.b16 %v1018
        %v2728 = vunpack.c.l.b16 %v1019
        %v2729 = vunpack.c.h.b16 %v1019
        %v2730 = vunpack.c.l.b16 %v1020
        %v2731 = vunpack.c.h.b16 %v1020
        %v2732 = vunpack.c.l.b16 %v1021
        %v2733 = vunpack.c.h.b16 %v1021
        %v2734 = vunpack.c.l.b16 %v1022
        %v2735 = vunpack.c.h.b16 %v1022
        %v2736 = vunpack.c.l.b16 %v1023
        %v2737 = vunpack.c.h.b16 %v1023
        %v2738 = vunpack.c.l.b16 %v1024
        %v2739 = vunpack.c.h.b16 %v1024
        %v2740 = vunpack.c.l.b16 %v1025
        %v2741 = vunpack.c.h.b16 %v1025
        %v2742 = vunpack.c.l.b16 %v1026
        %v2743 = vunpack.c.h.b16 %v1026
        %v2744 = vunpack.c.l.b16 %v1027
        %v2745 = vunpack.c.h.b16 %v1027
        %v2746 = vunpack.c.l.b16 %v1028
        %v2747 = vunpack.c.h.b16 %v1028
        %v2748 = vunpack.c.l.b16 %v1029
        %v2749 = vunpack.c.h.b16 %v1029
        %v2750 = vunpack.c.l.b16 %v1030
        %v2751 = vunpack.c.h.b16 %v1030
        %v2752 = vunpack.c.l.b16 %v1031
        %v2753 = vunpack.c.h.b16 %v1031
        %v2754 = vunpack.c.l.b16 %v1032
        %v2755 = vunpack.c.h.b16 %v1032
        %v2756 = vunpack.c.l.b16 %v1033
        %v2757 = vunpack.c.h.b16 %v1033
        %v2758 = vunpack.c.l.b16 %v1034
        %v2759 = vunpack.c.h.b16 %v1034
        %v2760 = vunpack.c.l.b16 %v1035
        %v2761 = vunpack.c.h.b16 %v1035
        %v2762 = vunpack.c.l.b16 %v1036
        %v2763 = vunpack.c.h.b16 %v1036
        %v2764 = vunpack.c.l.b16 %v1037
        %v2765 = vunpack.c.h.b16 %v1037
        %v2766 = vunpack.c.l.b16 %v1038
        %v2767 = vunpack.c.h.b16 %v1038
        %v2768 = vunpack.c.l.b16 %v1039
        %v2769 = vunpack.c.h.b16 %v1039
        %v2770 = vunpack.c.l.b16 %v1040
        %v2771 = vunpack.c.h.b16 %v1040
        %v2772 = vunpack.c.l.b16 %v1041
        %v2773 = vunpack.c.h.b16 %v1041
        %v2774 = vunpack.c.l.b16 %v1042
        %v2775 = vunpack.c.h.b16 %v1042
        %v2776 = vunpack.c.l.b16 %v1043
        %v2777 = vunpack.c.h.b16 %v1043
        %v2778 = vunpack.c.l.b16 %v1044
        %v2779 = vunpack.c.h.b16 %v1044
        %v2780 = vunpack.c.l.b16 %v1045
        %v2781 = vunpack.c.h.b16 %v1045
        %v2782 = vunpack.c.l.b16 %v1046
        %v2783 = vunpack.c.h.b16 %v1046
        %v2784 = vunpack.c.l.b16 %v1047
        %v2785 = vunpack.c.h.b16 %v1047
        %v2786 = vunpack.c.l.b16 %v1048
        %v2787 = vunpack.c.h.b16 %v1048
        %v2788 = vunpack.c.l.b16 %v1049
        %v2789 = vunpack.c.h.b16 %v1049
        %v2790 = vunpack.c.l.b16 %v1050
        %v2791 = vunpack.c.h.b16 %v1050
        %v2792 = vunpack.c.l.b16 %v1051
        %v2793 = vunpack.c.h.b16 %v1051
        %v2794 = vunpack.c.l.b16 %v1052
        %v2795 = vunpack.c.h.b16 %v1052
        %v2796 = vunpack.c.l.b16 %v1053
        %v2797 = vunpack.c.h.b16 %v1053
        %v2798 = vunpack.c.l.b16 %v1054
        %v2799 = vunpack.c.h.b16 %v1054
        %v2800 = vunpack.c.l.b16 %v1055
        %v2801 = vunpack.c.h.b16 %v1055
        %v2802 = vunpack.c.l.b16 %v1056
        %v2803 = vunpack.c.h.b16 %v1056
        %v2804 = vunpack.c.l.b16 %v1057
        %v2805 = vunpack.c.h.b16 %v1057
        %v2806 = vunpack.c.l.b16 %v1058
        %v2807 = vunpack.c.h.b16 %v1058
        %v2808 = vunpack.c.l.b16 %v1059
        %v2809 = vunpack.c.h.b16 %v1059
        %v2810 = vunpack.c.l.b16 %v1060
        %v2811 = vunpack.c.h.b16 %v1060
        %v2812 = vunpack.c.l.b16 %v1061
        %v2813 = vunpack.c.h.b16 %v1061
        %v2814 = vunpack.c.l.b16 %v1062
        %v2815 = vunpack.c.h.b16 %v1062
        %v2816 = vunpack.c.l.b16 %v1063
        %v2817 = vunpack.c.h.b16 %v1063
        %v2818 = vunpack.c.l.b16 %v1064
        %v2819 = vunpack.c.h.b16 %v1064
        %v2820 = vunpack.c.l.b16 %v1065
        %v2821 = vunpack.c.h.b16 %v1065
        %v2822 = vpack.c.b16 %v1922, %v1862
        %v2823 = vpack.c.b16 %v1923, %v1863
        %v2824 = vpack.c.b16 %v1924, %v1864
        %v2825 = vpack.c.b16 %v1925, %v1865
        %v2826 = vpack.c.b16 %v1926, %v1866
        %v2827 = vpack.c.b16 %v1927, %v1867
        %v2828 = vpack.c.b16 %v1928, %v1868
        %v2829 = vpack.c.b16 %v1929, %v1869
        %v2830 = vpack.c.b16 %v1930, %v1870
        %v2831 = vpack.c.b16 %v1931, %v1871
        %v2832 = vpack.c.b16 %v1932, %v1872
        %v2833 = vpack.c.b16 %v1933, %v1873
        %v2834 = vpack.c.b16 %v1934, %v1874
        %v2835 = vpack.c.b16 %v1935, %v1875
        %v2836 = vpack.c.b16 %v1936, %v1876
        %v2837 = vpack.c.b16 %v1937, %v1877
        %v2838 = vpack.c.b16 %v1938, %v1878
        %v2839 = vpack.c.b16 %v1939, %v1879
        %v2840 = vpack.c.b16 %v1940, %v1880
        %v2841 = vpack.c.b16 %v1941, %v1881
        %v2842 = vpack.c.b16 %v1942, %v1882
        %v2843 = vpack.c.b16 %v1943, %v1883
        %v2844 = vpack.c.b16 %v1944, %v1884
        %v2845 = vpack.c.b16 %v1945, %v1885
        %v2846 = vpack.c.b16 %v1946, %v1886
        %v2847 = vpack.c.b16 %v1947, %v1887
        %v2848 = vpack.c.b16 %v1948, %v1888
        %v2849 = vpack.c.b16 %v1949, %v1889
        %v2850 = vpack.c.b16 %v1950, %v1890
        %v2851 = vpack.c.b16 %v1951, %v1891
        %v2852 = vpack.c.b16 %v1952, %v1892
        %v2853 = vpack.c.b16 %v1953, %v1893
        %v2854 = vpack.c.b16 %v1954, %v1894
        %v2855 = vpack.c.b16 %v1955, %v1895
        %v2856 = vpack.c.b16 %v1956, %v1896
        %v2857 = vpack.c.b16 %v1957, %v1897
        %v2858 = vpack.c.b16 %v1958, %v1898
        %v2859 = vpack.c.b16 %v1959, %v1899
        %v2860 = vpack.c.b16 %v1960, %v1900
        %v2861 = vpack.c.b16 %v1961, %v1901
        %v2862 = vpack.c.b16 %v1962, %v1902
        %v2863 = vpack.c.b16 %v1963, %v1903
        %v2864 = vpack.c.b16 %v1964, %v1904
        %v2865 = vpack.c.b16 %v1965, %v1905
        %v2866 = vpack.c.b16 %v1966, %v1906
        %v2867 = vpack.c.b16 %v1967, %v1907
        %v2868 = vpack.c.b16 %v1968, %v1908
        %v2869 = vpack.c.b16 %v1969, %v1909
        %v2870 = vpack.c.b16 %v1970, %v1910
        %v2871 = vpack.c.b16 %v1971, %v1911
        %v2872 = vpack.c.b16 %v1972, %v1912
        %v2873 = vpack.c.b16 %v1973, %v1913
        %v2874 = vpack.c.b16 %v1974, %v1914
        %v2875 = vpack.c.b16 %v1975, %v1915
        %v2876 = vpack.c.b16 %v1976, %v1916
        %v2877 = vpack.c.b16 %v1977, %v1917
        %v2878 = vpack.c.b16 %v1978, %v1918
        %v2879 = vpack.c.b16 %v1979, %v1919
        %v2880 = vpack.c.b16 %v1980, %v1920
        %v2881 = vpack.c.b16 %v1981, %v1921
        %v2882 = vpack.c.b16 %v2042, %v1982
        %v2883 = vpack.c.b16 %v2043, %v1983
        %v2884 = vpack.c.b16 %v2044, %v1984
        %v2885 = vpack.c.b16 %v2045, %v1985
        %v2886 = vpack.c.b16 %v2046, %v1986
        %v2887 = vpack.c.b16 %v2047, %v1987
        %v2888 = vpack.c.b16 %v2048, %v1988
        %v2889 = vpack.c.b16 %v2049, %v1989
        %v2890 = vpack.c.b16 %v2050, %v1990
        %v2891 = vpack.c.b16 %v2051, %v1991
        %v2892 = vpack.c.b16 %v2052, %v1992
        %v2893 = vpack.c.b16 %v2053, %v1993
        %v2894 = vpack.c.b16 %v2054, %v1994
        %v2895 = vpack.c.b16 %v2055, %v1995
        %v2896 = vpack.c.b16 %v2056, %v1996
        %v2897 = vpack.c.b16 %v2057, %v1997
        %v2898 = vpack.c.b16 %v2058, %v1998
        %v2899 = vpack.c.b16 %v2059, %v1999
        %v2900 = vpack.c.b16 %v2060, %v2000
        %v2901 = vpack.c.b16 %v2061, %v2001
        %v2902 = vpack.c.b16 %v2062, %v2002
        %v2903 = vpack.c.b16 %v2063, %v2003
        %v2904 = vpack.c.b16 %v2064, %v2004
        %v2905 = vpack.c.b16 %v2065, %v2005
        %v2906 = vpack.c.b16 %v2066, %v2006
        %v2907 = vpack.c.b16 %v2067, %v2007
        %v2908 = vpack.c.b16 %v2068, %v2008
        %v2909 = vpack.c.b16 %v2069, %v2009
        %v2910 = vpack.c.b16 %v2070, %v2010
        %v2911 = vpack.c.b16 %v2071, %v2011
        %v2912 = vpack.c.b16 %v2072, %v2012
        %v2913 = vpack.c.b16 %v2073, %v2013
        %v2914 = vpack.c.b16 %v2074, %v2014
        %v2915 = vpack.c.b16 %v2075, %v2015
        %v2916 = vpack.c.b16 %v2076, %v2016
        %v2917 = vpack.c.b16 %v2077, %v2017
        %v2918 = vpack.c.b16 %v2078, %v2018
        %v2919 = vpack.c.b16 %v2079, %v2019
        %v2920 = vpack.c.b16 %v2080, %v2020
        %v2921 = vpack.c.b16 %v2081, %v2021
        %v2922 = vpack.c.b16 %v2082, %v2022
        %v2923 = vpack.c.b16 %v2083, %v2023
        %v2924 = vpack.c.b16 %v2084, %v2024
        %v2925 = vpack.c.b16 %v2085, %v2025
        %v2926 = vpack.c.b16 %v2086, %v2026
        %v2927 = vpack.c.b16 %v2087, %v2027
        %v2928 = vpack.c.b16 %v2088, %v2028
        %v2929 = vpack.c.b16 %v2089, %v2029
        %v2930 = vpack.c.b16 %v2090, %v2030
        %v2931 = vpack.c.b16 %v2091, %v2031
        %v2932 = vpack.c.b16 %v2092, %v2032
        %v2933 = vpack.c.b16 %v2093, %v2033
        %v2934 = vpack.c.b16 %v2094, %v2034
        %v2935 = vpack.c.b16 %v2095, %v2035
        %v2936 = vpack.c.b16 %v2096, %v2036
        %v2937 = vpack.c.b16 %v2097, %v2037
        %v2938 = vpack.c.b16 %v2098, %v2038
        %v2939 = vpack.c.b16 %v2099, %v2039
        %v2940 = vpack.c.b16 %v2100, %v2040
        %v2941 = vpack.c.b16 %v2101, %v2041
        %v2942 = vpack.c.b16 %v2162, %v2102
        %v2943 = vpack.c.b16 %v2163, %v2103
        %v2944 = vpack.c.b16 %v2164, %v2104
        %v2945 = vpack.c.b16 %v2165, %v2105
        %v2946 = vpack.c.b16 %v2166, %v2106
        %v2947 = vpack.c.b16 %v2167, %v2107
        %v2948 = vpack.c.b16 %v2168, %v2108
        %v2949 = vpack.c.b16 %v2169, %v2109
        %v2950 = vpack.c.b16 %v2170, %v2110
        %v2951 = vpack.c.b16 %v2171, %v2111
        %v2952 = vpack.c.b16 %v2172, %v2112
        %v2953 = vpack.c.b16 %v2173, %v2113
        %v2954 = vpack.c.b16 %v2174, %v2114
        %v2955 = vpack.c.b16 %v2175, %v2115
        %v2956 = vpack.c.b16 %v2176, %v2116
        %v2957 = vpack.c.b16 %v2177, %v2117
        %v2958 = vpack.c.b16 %v2178, %v2118
        %v2959 = vpack.c.b16 %v2179, %v2119
        %v2960 = vpack.c.b16 %v2180, %v2120
        %v2961 = vpack.c.b16 %v2181, %v2121
        %v2962 = vpack.c.b16 %v2182, %v2122
        %v2963 = vpack.c.b16 %v2183, %v2123
        %v2964 = vpack.c.b16 %v2184, %v2124
        %v2965 = vpack.c.b16 %v2185, %v2125
        %v2966 = vpack.c.b16 %v2186, %v2126
        %v2967 = vpack.c.b16 %v2187, %v2127
        %v2968 = vpack.c.b16 %v2188, %v2128
        %v2969 = vpack.c.b16 %v2189, %v2129
        %v2970 = vpack.c.b16 %v2190, %v2130
        %v2971 = vpack.c.b16 %v2191, %v2131
        %v2972 = vpack.c.b16 %v2192, %v2132
        %v2973 = vpack.c.b16 %v2193, %v2133
        %v2974 = vpack.c.b16 %v2194, %v2134
        %v2975 = vpack.c.b16 %v2195, %v2135
        %v2976 = vpack.c.b16 %v2196, %v2136
        %v2977 = vpack.c.b16 %v2197, %v2137
        %v2978 = vpack.c.b16 %v2198, %v2138
        %v2979 = vpack.c.b16 %v2199, %v2139
        %v2980 = vpack.c.b16 %v2200, %v2140
        %v2981 = vpack.c.b16 %v2201, %v2141
        %v2982 = vpack.c.b16 %v2202, %v2142
        %v2983 = vpack.c.b16 %v2203, %v2143
        %v2984 = vpack.c.b16 %v2204, %v2144
        %v2985 = vpack.c.b16 %v2205, %v2145
        %v2986 = vpack.c.b16 %v2206, %v2146
        %v2987 = vpack.c.b16 %v2207, %v2147
        %v2988 = vpack.c.b16 %v2208, %v2148
        %v2989 = vpack.c.b16 %v2209, %v2149
        %v2990 = vpack.c.b16 %v2210, %v2150
        %v2991 = vpack.c.b16 %v2211, %v2151
        %v2992 = vpack.c.b16 %v2212, %v2152
        %v2993 = vpack.c.b16 %v2213, %v2153
        %v2994 = vpack.c.b16 %v2214, %v2154
        %v2995 = vpack.c.b16 %v2215, %v2155
        %v2996 = vpack.c.b16 %v2216, %v2156
        %v2997 = vpack.c.b16 %v2217, %v2157
        %v2998 = vpack.c.b16 %v2218, %v2158
        %v2999 = vpack.c.b16 %v2219, %v2159
        %v3000 = vpack.c.b16 %v2220, %v2160
        %v3001 = vpack.c.b16 %v2221, %v2161
        %v3002 = vpack.c.b16 %v2282, %v2222
        %v3003 = vpack.c.b16 %v2283, %v2223
        %v3004 = vpack.c.b16 %v2284, %v2224
        %v3005 = vpack.c.b16 %v2285, %v2225
        %v3006 = vpack.c.b16 %v2286, %v2226
        %v3007 = vpack.c.b16 %v2287, %v2227
        %v3008 = vpack.c.b16 %v2288, %v2228
        %v3009 = vpack.c.b16 %v2289, %v2229
        %v3010 = vpack.c.b16 %v2290, %v2230
        %v3011 = vpack.c.b16 %v2291, %v2231
        %v3012 = vpack.c.b16 %v2292, %v2232
        %v3013 = vpack.c.b16 %v2293, %v2233
        %v3014 = vpack.c.b16 %v2294, %v2234
        %v3015 = vpack.c.b16 %v2295, %v2235
        %v3016 = vpack.c.b16 %v2296, %v2236
        %v3017 = vpack.c.b16 %v2297, %v2237
        %v3018 = vpack.c.b16 %v2298, %v2238
        %v3019 = vpack.c.b16 %v2299, %v2239
        %v3020 = vpack.c.b16 %v2300, %v2240
        %v3021 = vpack.c.b16 %v2301, %v2241
        %v3022 = vpack.c.b16 %v2302, %v2242
        %v3023 = vpack.c.b16 %v2303, %v2243
        %v3024 = vpack.c.b16 %v2304, %v2244
        %v3025 = vpack.c.b16 %v2305, %v2245
        %v3026 = vpack.c.b16 %v2306, %v2246
        %v3027 = vpack.c.b16 %v2307, %v2247
        %v3028 = vpack.c.b16 %v2308, %v2248
        %v3029 = vpack.c.b16 %v2309, %v2249
        %v3030 = vpack.c.b16 %v2310, %v2250
        %v3031 = vpack.c.b16 %v2311, %v2251
        %v3032 = vpack.c.b16 %v2312, %v2252
        %v3033 = vpack.c.b16 %v2313, %v2253
        %v3034 = vpack.c.b16 %v2314, %v2254
        %v3035 = vpack.c.b16 %v2315, %v2255
        %v3036 = vpack.c.b16 %v2316, %v2256
        %v3037 = vpack.c.b16 %v2317, %v2257
        %v3038 = vpack.c.b16 %v2318, %v2258
        %v3039 = vpack.c.b16 %v2319, %v2259
        %v3040 = vpack.c.b16 %v2320, %v2260
        %v3041 = vpack.c.b16 %v2321, %v2261
        %v3042 = vpack.c.b16 %v2322, %v2262
        %v3043 = vpack.c.b16 %v2323, %v2263
        %v3044 = vpack.c.b16 %v2324, %v2264
        %v3045 = vpack.c.b16 %v2325, %v2265
        %v3046 = vpack.c.b16 %v2326, %v2266
        %v3047 = vpack.c.b16 %v2327, %v2267
        %v3048 = vpack.c.b16 %v2328, %v2268
        %v3049 = vpack.c.b16 %v2329, %v2269
        %v3050 = vpack.c.b16 %v2330, %v2270
        %v3051 = vpack.c.b16 %v2331, %v2271
        %v3052 = vpack.c.b16 %v2332, %v2272
        %v3053 = vpack.c.b16 %v2333, %v2273
        %v3054 = vpack.c.b16 %v2334, %v2274
        %v3055 = vpack.c.b16 %v2335, %v2275
        %v3056 = vpack.c.b16 %v2336, %v2276
        %v3057 = vpack.c.b16 %v2337, %v2277
        %v3058 = vpack.c.b16 %v2338, %v2278
        %v3059 = vpack.c.b16 %v2339, %v2279
        %v3060 = vpack.c.b16 %v2340, %v2280
        %v3061 = vpack.c.b16 %v2341, %v2281
        %v3062 = vpack.c.b16 %v2402, %v2342
        %v3063 = vpack.c.b16 %v2403, %v2343
        %v3064 = vpack.c.b16 %v2404, %v2344
        %v3065 = vpack.c.b16 %v2405, %v2345
        %v3066 = vpack.c.b16 %v2406, %v2346
        %v3067 = vpack.c.b16 %v2407, %v2347
        %v3068 = vpack.c.b16 %v2408, %v2348
        %v3069 = vpack.c.b16 %v2409, %v2349
        %v3070 = vpack.c.b16 %v2410, %v2350
        %v3071 = vpack.c.b16 %v2411, %v2351
        %v3072 = vpack.c.b16 %v2412, %v2352
        %v3073 = vpack.c.b16 %v2413, %v2353
        %v3074 = vpack.c.b16 %v2414, %v2354
        %v3075 = vpack.c.b16 %v2415, %v2355
        %v3076 = vpack.c.b16 %v2416, %v2356
        %v3077 = vpack.c.b16 %v2417, %v2357
        %v3078 = vpack.c.b16 %v2418, %v2358
        %v3079 = vpack.c.b16 %v2419, %v2359
        %v3080 = vpack.c.b16 %v2420, %v2360
        %v3081 = vpack.c.b16 %v2421, %v2361
        %v3082 = vpack.c.b16 %v2422, %v2362
        %v3083 = vpack.c.b16 %v2423, %v2363
        %v3084 = vpack.c.b16 %v2424, %v2364
        %v3085 = vpack.c.b16 %v2425, %v2365
        %v3086 = vpack.c.b16 %v2426, %v2366
        %v3087 = vpack.c.b16 %v2427, %v2367
        %v3088 = vpack.c.b16 %v2428, %v2368
        %v3089 = vpack.c.b16 %v2429, %v2369
        %v3090 = vpack.c.b16 %v2430, %v2370
        %v3091 = vpack.c.b16 %v2431, %v2371
        %v3092 = vpack.c.b16 %v2432, %v2372
        %v3093 = vpack.c.b16 %v2433, %v2373
        %v3094 = vpack.c.b16 %v2434, %v2374
        %v3095 = vpack.c.b16 %v2435, %v2375
        %v3096 = vpack.c.b16 %v2436, %v2376
        %v3097 = vpack.c.b16 %v2437, %v2377
        %v3098 = vpack.c.b16 %v2438, %v2378
        %v3099 = vpack.c.b16 %v2439, %v2379
        %v3100 = vpack.c.b16 %v2440, %v2380
        %v3101 = vpack.c.b16 %v2441, %v2381
        %v3102 = vpack.c.b16 %v2442, %v2382
        %v3103 = vpack.c.b16 %v2443, %v2383
        %v3104 = vpack.c.b16 %v2444, %v2384
        %v3105 = vpack.c.b16 %v2445, %v2385
        %v3106 = vpack.c.b16 %v2446, %v2386
        %v3107 = vpack.c.b16 %v2447, %v2387
        %v3108 = vpack.c.b16 %v2448, %v2388
        %v3109 = vpack.c.b16 %v2449, %v2389
        %v3110 = vpack.c.b16 %v2450, %v2390
        %v3111 = vpack.c.b16 %v2451, %v2391
        %v3112 = vpack.c.b16 %v2452, %v2392
        %v3113 = vpack.c.b16 %v2453, %v2393
        %v3114 = vpack.c.b16 %v2454, %v2394
        %v3115 = vpack.c.b16 %v2455, %v2395
        %v3116 = vpack.c.b16 %v2456, %v2396
        %v3117 = vpack.c.b16 %v2457, %v2397
        %v3118 = vpack.c.b16 %v2458, %v2398
        %v3119 = vpack.c.b16 %v2459, %v2399
        %v3120 = vpack.c.b16 %v2460, %v2400
        %v3121 = vpack.c.b16 %v2461, %v2401
        %v3122 = vpack.c.b16 %v2522, %v2462
        %v3123 = vpack.c.b16 %v2523, %v2463
        %v3124 = vpack.c.b16 %v2524, %v2464
        %v3125 = vpack.c.b16 %v2525, %v2465
        %v3126 = vpack.c.b16 %v2526, %v2466
        %v3127 = vpack.c.b16 %v2527, %v2467
        %v3128 = vpack.c.b16 %v2528, %v2468
        %v3129 = vpack.c.b16 %v2529, %v2469
        %v3130 = vpack.c.b16 %v2530, %v2470
        %v3131 = vpack.c.b16 %v2531, %v2471
        %v3132 = vpack.c.b16 %v2532, %v2472
        %v3133 = vpack.c.b16 %v2533, %v2473
        %v3134 = vpack.c.b16 %v2534, %v2474
        %v3135 = vpack.c.b16 %v2535, %v2475
        %v3136 = vpack.c.b16 %v2536, %v2476
        %v3137 = vpack.c.b16 %v2537, %v2477
        %v3138 = vpack.c.b16 %v2538, %v2478
        %v3139 = vpack.c.b16 %v2539, %v2479
        %v3140 = vpack.c.b16 %v2540, %v2480
        %v3141 = vpack.c.b16 %v2541, %v2481
        %v3142 = vpack.c.b16 %v2542, %v2482
        %v3143 = vpack.c.b16 %v2543, %v2483
        %v3144 = vpack.c.b16 %v2544, %v2484
        %v3145 = vpack.c.b16 %v2545, %v2485
        %v3146 = vpack.c.b16 %v2546, %v2486
        %v3147 = vpack.c.b16 %v2547, %v2487
        %v3148 = vpack.c.b16 %v2548, %v2488
        %v3149 = vpack.c.b16 %v2549, %v2489
        %v3150 = vpack.c.b16 %v2550, %v2490
        %v3151 = vpack.c.b16 %v2551, %v2491
        %v3152 = vpack.c.b16 %v2552, %v2492
        %v3153 = vpack.c.b16 %v2553, %v2493
        %v3154 = vpack.c.b16 %v2554, %v2494
        %v3155 = vpack.c.b16 %v2555, %v2495
        %v3156 = vpack.c.b16 %v2556, %v2496
        %v3157 = vpack.c.b16 %v2557, %v2497
        %v3158 = vpack.c.b16 %v2558, %v2498
        %v3159 = vpack.c.b16 %v2559, %v2499
        %v3160 = vpack.c.b16 %v2560, %v2500
        %v3161 = vpack.c.b16 %v2561, %v2501
        %v3162 = vpack.c.b16 %v2562, %v2502
        %v3163 = vpack.c.b16 %v2563, %v2503
        %v3164 = vpack.c.b16 %v2564, %v2504
        %v3165 = vpack.c.b16 %v2565, %v2505
        %v3166 = vpack.c.b16 %v2566, %v2506
        %v3167 = vpack.c.b16 %v2567, %v2507
        %v3168 = vpack.c.b16 %v2568, %v2508
        %v3169 = vpack.c.b16 %v2569, %v2509
        %v3170 = vpack.c.b16 %v2570, %v2510
        %v3171 = vpack.c.b16 %v2571, %v2511
        %v3172 = vpack.c.b16 %v2572, %v2512
        %v3173 = vpack.c.b16 %v2573, %v2513
        %v3174 = vpack.c.b16 %v2574, %v2514
        %v3175 = vpack.c.b16 %v2575, %v2515
        %v3176 = vpack.c.b16 %v2576, %v2516
        %v3177 = vpack.c.b16 %v2577, %v2517
        %v3178 = vpack.c.b16 %v2578, %v2518
        %v3179 = vpack.c.b16 %v2579, %v2519
        %v3180 = vpack.c.b16 %v2580, %v2520
        %v3181 = vpack.c.b16 %v2581, %v2521
        %v3182 = vpack.c.b16 %v2642, %v2582
        %v3183 = vpack.c.b16 %v2643, %v2583
        %v3184 = vpack.c.b16 %v2644, %v2584
        %v3185 = vpack.c.b16 %v2645, %v2585
        %v3186 = vpack.c.b16 %v2646, %v2586
        %v3187 = vpack.c.b16 %v2647, %v2587
        %v3188 = vpack.c.b16 %v2648, %v2588
        %v3189 = vpack.c.b16 %v2649, %v2589
        %v3190 = vpack.c.b16 %v2650, %v2590
        %v3191 = vpack.c.b16 %v2651, %v2591
        %v3192 = vpack.c.b16 %v2652, %v2592
        %v3193 = vpack.c.b16 %v2653, %v2593
        %v3194 = vpack.c.b16 %v2654, %v2594
        %v3195 = vpack.c.b16 %v2655, %v2595
        %v3196 = vpack.c.b16 %v2656, %v2596
        %v3197 = vpack.c.b16 %v2657, %v2597
        %v3198 = vpack.c.b16 %v2658, %v2598
        %v3199 = vpack.c.b16 %v2659, %v2599
        %v3200 = vpack.c.b16 %v2660, %v2600
        %v3201 = vpack.c.b16 %v2661, %v2601
        %v3202 = vpack.c.b16 %v2662, %v2602
        %v3203 = vpack.c.b16 %v2663, %v2603
        %v3204 = vpack.c.b16 %v2664, %v2604
        %v3205 = vpack.c.b16 %v2665, %v2605
        %v3206 = vpack.c.b16 %v2666, %v2606
        %v3207 = vpack.c.b16 %v2667, %v2607
        %v3208 = vpack.c.b16 %v2668, %v2608
        %v3209 = vpack.c.b16 %v2669, %v2609
        %v3210 = vpack.c.b16 %v2670, %v2610
        %v3211 = vpack.c.b16 %v2671, %v2611
        %v3212 = vpack.c.b16 %v2672, %v2612
        %v3213 = vpack.c.b16 %v2673, %v2613
        %v3214 = vpack.c.b16 %v2674, %v2614
        %v3215 = vpack.c.b16 %v2675, %v2615
        %v3216 = vpack.c.b16 %v2676, %v2616
        %v3217 = vpack.c.b16 %v2677, %v2617
        %v3218 = vpack.c.b16 %v2678, %v2618
        %v3219 = vpack.c.b16 %v2679, %v2619
        %v3220 = vpack.c.b16 %v2680, %v2620
        %v3221 = vpack.c.b16 %v2681, %v2621
        %v3222 = vpack.c.b16 %v2682, %v2622
        %v3223 = vpack.c.b16 %v2683, %v2623
        %v3224 = vpack.c.b16 %v2684, %v2624
        %v3225 = vpack.c.b16 %v2685, %v2625
        %v3226 = vpack.c.b16 %v2686, %v2626
        %v3227 = vpack.c.b16 %v2687, %v2627
        %v3228 = vpack.c.b16 %v2688, %v2628
        %v3229 = vpack.c.b16 %v2689, %v2629
        %v3230 = vpack.c.b16 %v2690, %v2630
        %v3231 = vpack.c.b16 %v2691, %v2631
        %v3232 = vpack.c.b16 %v2692, %v2632
        %v3233 = vpack.c.b16 %v2693, %v2633
        %v3234 = vpack.c.b16 %v2694, %v2634
        %v3235 = vpack.c.b16 %v2695, %v2635
        %v3236 = vpack.c.b16 %v2696, %v2636
        %v3237 = vpack.c.b16 %v2697, %v2637
        %v3238 = vpack.c.b16 %v2698, %v2638
        %v3239 = vpack.c.b16 %v2699, %v2639
        %v3240 = vpack.c.b16 %v2700, %v2640
        %v3241 = vpack.c.b16 %v2701, %v2641
        %v3242 = vpack.c.b16 %v2762, %v2702
        %v3243 = vpack.c.b16 %v2763, %v2703
        %v3244 = vpack.c.b16 %v2764, %v2704
        %v3245 = vpack.c.b16 %v2765, %v2705
        %v3246 = vpack.c.b16 %v2766, %v2706
        %v3247 = vpack.c.b16 %v2767, %v2707
        %v3248 = vpack.c.b16 %v2768, %v2708
        %v3249 = vpack.c.b16 %v2769, %v2709
        %v3250 = vpack.c.b16 %v2770, %v2710
        %v3251 = vpack.c.b16 %v2771, %v2711
        %v3252 = vpack.c.b16 %v2772, %v2712
        %v3253 = vpack.c.b16 %v2773, %v2713
        %v3254 = vpack.c.b16 %v2774, %v2714
        %v3255 = vpack.c.b16 %v2775, %v2715
        %v3256 = vpack.c.b16 %v2776, %v2716
        %v3257 = vpack.c.b16 %v2777, %v2717
        %v3258 = vpack.c.b16 %v2778, %v2718
        %v3259 = vpack.c.b16 %v2779, %v2719
        %v3260 = vpack.c.b16 %v2780, %v2720
        %v3261 = vpack.c.b16 %v2781, %v2721
        %v3262 = vpack.c.b16 %v2782, %v2722
        %v3263 = vpack.c.b16 %v2783, %v2723
        %v3264 = vpack.c.b16 %v2784, %v2724
        %v3265 = vpack.c.b16 %v2785, %v2725
        %v3266 = vpack.c.b16 %v2786, %v2726
        %v3267 = vpack.c.b16 %v2787, %v2727
        %v3268 = vpack.c.b16 %v2788, %v2728
        %v3269 = vpack.c.b16 %v2789, %v2729
        %v3270 = vpack.c.b16 %v2790, %v2730
        %v3271 = vpack.c.b16 %v2791, %v2731
        %v3272 = vpack.c.b16 %v2792, %v2732
        %v3273 = vpack.c.b16 %v2793, %v2733
        %v3274 = vpack.c.b16 %v2794, %v2734
        %v3275 = vpack.c.b16 %v2795, %v2735
        %v3276 = vpack.c.b16 %v2796, %v2736
        %v3277 = vpack.c.b16 %v2797, %v2737
        %v3278 = vpack.c.b16 %v2798, %v2738
        %v3279 = vpack.c.b16 %v2799, %v2739
        %v3280 = vpack.c.b16 %v2800, %v2740
        %v3281 = vpack.c.b16 %v2801, %v2741
        %v3282 = vpack.c.b16 %v2802, %v2742
        %v3283 = vpack.c.b16 %v2803, %v2743
        %v3284 = vpack.c.b16 %v2804, %v2744
        %v3285 = vpack.c.b16 %v2805, %v2745
        %v3286 = vpack.c.b16 %v2806, %v2746
        %v3287 = vpack.c.b16 %v2807, %v2747
        %v3288 = vpack.c.b16 %v2808, %v2748
        %v3289 = vpack.c.b16 %v2809, %v2749
        %v3290 = vpack.c.b16 %v2810, %v2750
        %v3291 = vpack.c.b16 %v2811, %v2751
        %v3292 = vpack.c.b16 %v2812, %v2752
        %v3293 = vpack.c.b16 %v2813, %v2753
        %v3294 = vpack.c.b16 %v2814, %v2754
        %v3295 = vpack.c.b16 %v2815, %v2755
        %v3296 = vpack.c.b16 %v2816, %v2756
        %v3297 = vpack.c.b16 %v2817, %v2757
        %v3298 = vpack.c.b16 %v2818, %v2758
        %v3299 = vpack.c.b16 %v2819, %v2759
        %v3300 = vpack.c.b16 %v2820, %v2760
        %v3301 = vpack.c.b16 %v2821, %v2761
        %3782 = vmatprep.subr.bf16.mxu0 %v3243
        %3783 = vmatpush1.bf16.msra.mxu0 %v3242
        %3784 = vmatprep.subr.bf16.mxu0 %v3183
        %3785 = vmatpush1.bf16.msra.mxu0 %v3182
        %3786 = vmatprep.subr.bf16.mxu0 %v3123
        %3787 = vmatpush1.bf16.msra.mxu0 %v3122
        %3788 = vmatprep.subr.bf16.mxu0 %v3063
        %3789 = vmatpush1.bf16.msra.mxu0 %v3062
        %3790 = vmatprep.subr.bf16.mxu0 %v3003
        %3791 = vmatpush1.bf16.msra.mxu0 %v3002
        %3792 = vmatprep.subr.bf16.mxu0 %v2943
        %3793 = vmatpush1.bf16.msra.mxu0 %v2942
        %3794 = vmatprep.subr.bf16.mxu0 %v2883
        %3795 = vmatpush1.bf16.msra.mxu0 %v2882
        %3796 = vmatprep.subr.bf16.mxu0 %v2823
        %3797 = vmatpush1.bf16.msra.mxu0 %v2822
        %3798 = vmatprep.subr.bf16.mxu0 0
        %3799 = vmatpush2.bf16.msra.mxu0 0
        %3800 = vmatprep.subr.bf16.mxu0 0
        %3801 = vmatpush2.bf16.msra.mxu0 0
        %3802 = vmatprep.subr.bf16.mxu0 0
        %3803 = vmatpush2.bf16.msra.mxu0 0
        %3804 = vmatprep.subr.bf16.mxu0 0
        %3805 = vmatpush2.bf16.msra.mxu0 0
        %3806 = vmatprep.subr.bf16.mxu0 0
        %3807 = vmatpush2.bf16.msra.mxu0 0
        %3808 = vmatprep.subr.bf16.mxu0 0
        %3809 = vmatpush2.bf16.msra.mxu0 0
        %3810 = vmatprep.subr.bf16.mxu0 0
        %3811 = vmatpush2.bf16.msra.mxu0 0
        %3812 = vmatprep.subr.bf16.mxu0 0
        %3813 = vmatpush2.bf16.msra.mxu0 0
        %3814 = vmatprep.mubr.bf16.mxu0 0
        %3815 = vmatmul.mubr.bf16.gmra.mxu0 %v585
        %v3816 = vpop.f32.mrf.mxu0
        %v3817 = vadd.f32 %v1085, %v3816
        %v3818 = vpop.f32.mrf.mxu0
        %v3819 = vadd.f32 %v1089, %v3818
        %v3820 = vpop.f32.mrf.mxu0
        %v3821 = vpop.f32.mrf.mxu0
        %3822 = vdwg.mxu0
        %3823 = vmatprep.subr.bf16.mxu0 %v3245
        %3824 = vmatpush1.bf16.msra.mxu0 %v3244
        %3825 = vmatprep.subr.bf16.mxu0 %v3185
        %3826 = vmatpush1.bf16.msra.mxu0 %v3184
        %3827 = vmatprep.subr.bf16.mxu0 %v3125
        %3828 = vmatpush1.bf16.msra.mxu0 %v3124
        %3829 = vmatprep.subr.bf16.mxu0 %v3065
        %3830 = vmatpush1.bf16.msra.mxu0 %v3064
        %3831 = vmatprep.subr.bf16.mxu0 %v3005
        %3832 = vmatpush1.bf16.msra.mxu0 %v3004
        %3833 = vmatprep.subr.bf16.mxu0 %v2945
        %3834 = vmatpush1.bf16.msra.mxu0 %v2944
        %3835 = vmatprep.subr.bf16.mxu0 %v2885
        %3836 = vmatpush1.bf16.msra.mxu0 %v2884
        %3837 = vmatprep.subr.bf16.mxu0 %v2825
        %3838 = vmatpush1.bf16.msra.mxu0 %v2824
        %3839 = vmatprep.subr.bf16.mxu0 0
        %3840 = vmatpush2.bf16.msra.mxu0 0
        %3841 = vmatprep.subr.bf16.mxu0 0
        %3842 = vmatpush2.bf16.msra.mxu0 0
        %3843 = vmatprep.subr.bf16.mxu0 0
        %3844 = vmatpush2.bf16.msra.mxu0 0
        %3845 = vmatprep.subr.bf16.mxu0 0
        %3846 = vmatpush2.bf16.msra.mxu0 0
        %3847 = vmatprep.subr.bf16.mxu0 0
        %3848 = vmatpush2.bf16.msra.mxu0 0
        %3849 = vmatprep.subr.bf16.mxu0 0
        %3850 = vmatpush2.bf16.msra.mxu0 0
        %3851 = vmatprep.subr.bf16.mxu0 0
        %3852 = vmatpush2.bf16.msra.mxu0 0
        %3853 = vmatprep.subr.bf16.mxu0 0
        %3854 = vmatpush2.bf16.msra.mxu0 0
        %3855 = vmatprep.mubr.bf16.mxu0 0
        %3856 = vmatmul.mubr.bf16.gmra.mxu0 %v585
        %v3857 = vpop.f32.mrf.mxu0
        %v3858 = vadd.f32 %v1093, %v3857
        %v3859 = vpop.f32.mrf.mxu0
        %v3860 = vadd.f32 %v1097, %v3859
        %v3861 = vpop.f32.mrf.mxu0
        %v3862 = vpop.f32.mrf.mxu0
        %3863 = vdwg.mxu0
        %3864 = vmatprep.subr.bf16.mxu0 %v3247
        %3865 = vmatpush1.bf16.msra.mxu0 %v3246
        %3866 = vmatprep.subr.bf16.mxu0 %v3187
        %3867 = vmatpush1.bf16.msra.mxu0 %v3186
        %3868 = vmatprep.subr.bf16.mxu0 %v3127
        %3869 = vmatpush1.bf16.msra.mxu0 %v3126
        %3870 = vmatprep.subr.bf16.mxu0 %v3067
        %3871 = vmatpush1.bf16.msra.mxu0 %v3066
        %3872 = vmatprep.subr.bf16.mxu0 %v3007
        %3873 = vmatpush1.bf16.msra.mxu0 %v3006
        %3874 = vmatprep.subr.bf16.mxu0 %v2947
        %3875 = vmatpush1.bf16.msra.mxu0 %v2946
        %3876 = vmatprep.subr.bf16.mxu0 %v2887
        %3877 = vmatpush1.bf16.msra.mxu0 %v2886
        %3878 = vmatprep.subr.bf16.mxu0 %v2827
        %3879 = vmatpush1.bf16.msra.mxu0 %v2826
        %3880 = vmatprep.subr.bf16.mxu0 0
        %3881 = vmatpush2.bf16.msra.mxu0 0
        %3882 = vmatprep.subr.bf16.mxu0 0
        %3883 = vmatpush2.bf16.msra.mxu0 0
        %3884 = vmatprep.subr.bf16.mxu0 0
        %3885 = vmatpush2.bf16.msra.mxu0 0
        %3886 = vmatprep.subr.bf16.mxu0 0
        %3887 = vmatpush2.bf16.msra.mxu0 0
        %3888 = vmatprep.subr.bf16.mxu0 0
        %3889 = vmatpush2.bf16.msra.mxu0 0
        %3890 = vmatprep.subr.bf16.mxu0 0
        %3891 = vmatpush2.bf16.msra.mxu0 0
        %3892 = vmatprep.subr.bf16.mxu0 0
        %3893 = vmatpush2.bf16.msra.mxu0 0
        %3894 = vmatprep.subr.bf16.mxu0 0
        %3895 = vmatpush2.bf16.msra.mxu0 0
        %3896 = vmatprep.mubr.bf16.mxu0 0
        %3897 = vmatmul.mubr.bf16.gmra.mxu0 %v585
        %v3898 = vpop.f32.mrf.mxu0
        %v3899 = vadd.f32 %v1101, %v3898
        %v3900 = vpop.f32.mrf.mxu0
        %v3901 = vadd.f32 %v1105, %v3900
        %v3902 = vpop.f32.mrf.mxu0
        %v3903 = vpop.f32.mrf.mxu0
        %3904 = vdwg.mxu0
        %3905 = vmatprep.subr.bf16.mxu0 %v3249
        %3906 = vmatpush1.bf16.msra.mxu0 %v3248
        %3907 = vmatprep.subr.bf16.mxu0 %v3189
        %3908 = vmatpush1.bf16.msra.mxu0 %v3188
        %3909 = vmatprep.subr.bf16.mxu0 %v3129
        %3910 = vmatpush1.bf16.msra.mxu0 %v3128
        %3911 = vmatprep.subr.bf16.mxu0 %v3069
        %3912 = vmatpush1.bf16.msra.mxu0 %v3068
        %3913 = vmatprep.subr.bf16.mxu0 %v3009
        %3914 = vmatpush1.bf16.msra.mxu0 %v3008
        %3915 = vmatprep.subr.bf16.mxu0 %v2949
        %3916 = vmatpush1.bf16.msra.mxu0 %v2948
        %3917 = vmatprep.subr.bf16.mxu0 %v2889
        %3918 = vmatpush1.bf16.msra.mxu0 %v2888
        %3919 = vmatprep.subr.bf16.mxu0 %v2829
        %3920 = vmatpush1.bf16.msra.mxu0 %v2828
        %3921 = vmatprep.subr.bf16.mxu0 0
        %3922 = vmatpush2.bf16.msra.mxu0 0
        %3923 = vmatprep.subr.bf16.mxu0 0
        %3924 = vmatpush2.bf16.msra.mxu0 0
        %3925 = vmatprep.subr.bf16.mxu0 0
        %3926 = vmatpush2.bf16.msra.mxu0 0
        %3927 = vmatprep.subr.bf16.mxu0 0
        %3928 = vmatpush2.bf16.msra.mxu0 0
        %3929 = vmatprep.subr.bf16.mxu0 0
        %3930 = vmatpush2.bf16.msra.mxu0 0
        %3931 = vmatprep.subr.bf16.mxu0 0
        %3932 = vmatpush2.bf16.msra.mxu0 0
        %3933 = vmatprep.subr.bf16.mxu0 0
        %3934 = vmatpush2.bf16.msra.mxu0 0
        %3935 = vmatprep.subr.bf16.mxu0 0
        %3936 = vmatpush2.bf16.msra.mxu0 0
        %3937 = vmatprep.mubr.bf16.mxu0 0
        %3938 = vmatmul.mubr.bf16.gmra.mxu0 %v585
        %v3939 = vpop.f32.mrf.mxu0
        %v3940 = vadd.f32 %v1109, %v3939
        %v3941 = vpop.f32.mrf.mxu0
        %v3942 = vadd.f32 %v1113, %v3941
        %v3943 = vpop.f32.mrf.mxu0
        %v3944 = vpop.f32.mrf.mxu0
        %3945 = vdwg.mxu0
        %3946 = vmatprep.subr.bf16.mxu0 %v3251
        %3947 = vmatpush1.bf16.msra.mxu0 %v3250
        %3948 = vmatprep.subr.bf16.mxu0 %v3191
        %3949 = vmatpush1.bf16.msra.mxu0 %v3190
        %3950 = vmatprep.subr.bf16.mxu0 %v3131
        %3951 = vmatpush1.bf16.msra.mxu0 %v3130
        %3952 = vmatprep.subr.bf16.mxu0 %v3071
        %3953 = vmatpush1.bf16.msra.mxu0 %v3070
        %3954 = vmatprep.subr.bf16.mxu0 %v3011
        %3955 = vmatpush1.bf16.msra.mxu0 %v3010
        %3956 = vmatprep.subr.bf16.mxu0 %v2951
        %3957 = vmatpush1.bf16.msra.mxu0 %v2950
        %3958 = vmatprep.subr.bf16.mxu0 %v2891
        %3959 = vmatpush1.bf16.msra.mxu0 %v2890
        %3960 = vmatprep.subr.bf16.mxu0 %v2831
        %3961 = vmatpush1.bf16.msra.mxu0 %v2830
        %3962 = vmatprep.subr.bf16.mxu0 0
        %3963 = vmatpush2.bf16.msra.mxu0 0
        %3964 = vmatprep.subr.bf16.mxu0 0
        %3965 = vmatpush2.bf16.msra.mxu0 0
        %3966 = vmatprep.subr.bf16.mxu0 0
        %3967 = vmatpush2.bf16.msra.mxu0 0
        %3968 = vmatprep.subr.bf16.mxu0 0
        %3969 = vmatpush2.bf16.msra.mxu0 0
        %3970 = vmatprep.subr.bf16.mxu0 0
        %3971 = vmatpush2.bf16.msra.mxu0 0
        %3972 = vmatprep.subr.bf16.mxu0 0
        %3973 = vmatpush2.bf16.msra.mxu0 0
        %3974 = vmatprep.subr.bf16.mxu0 0
        %3975 = vmatpush2.bf16.msra.mxu0 0
        %3976 = vmatprep.subr.bf16.mxu0 0
        %3977 = vmatpush2.bf16.msra.mxu0 0
        %3978 = vmatprep.mubr.bf16.mxu0 0
        %3979 = vmatmul.mubr.bf16.gmra.mxu0 %v585
        %v3980 = vpop.f32.mrf.mxu0
        %v3981 = vadd.f32 %v1117, %v3980
        %v3982 = vpop.f32.mrf.mxu0
        %v3983 = vadd.f32 %v1121, %v3982
        %v3984 = vpop.f32.mrf.mxu0
        %v3985 = vpop.f32.mrf.mxu0
        %3986 = vdwg.mxu0
        %3987 = vmatprep.subr.bf16.mxu0 %v3253
        %3988 = vmatpush1.bf16.msra.mxu0 %v3252
        %3989 = vmatprep.subr.bf16.mxu0 %v3193
        %3990 = vmatpush1.bf16.msra.mxu0 %v3192
        %3991 = vmatprep.subr.bf16.mxu0 %v3133
        %3992 = vmatpush1.bf16.msra.mxu0 %v3132
        %3993 = vmatprep.subr.bf16.mxu0 %v3073
        %3994 = vmatpush1.bf16.msra.mxu0 %v3072
        %3995 = vmatprep.subr.bf16.mxu0 %v3013
        %3996 = vmatpush1.bf16.msra.mxu0 %v3012
        %3997 = vmatprep.subr.bf16.mxu0 %v2953
        %3998 = vmatpush1.bf16.msra.mxu0 %v2952
        %3999 = vmatprep.subr.bf16.mxu0 %v2893
        %4000 = vmatpush1.bf16.msra.mxu0 %v2892
        %4001 = vmatprep.subr.bf16.mxu0 %v2833
        %4002 = vmatpush1.bf16.msra.mxu0 %v2832
        %4003 = vmatprep.subr.bf16.mxu0 0
        %4004 = vmatpush2.bf16.msra.mxu0 0
        %4005 = vmatprep.subr.bf16.mxu0 0
        %4006 = vmatpush2.bf16.msra.mxu0 0
        %4007 = vmatprep.subr.bf16.mxu0 0
        %4008 = vmatpush2.bf16.msra.mxu0 0
        %4009 = vmatprep.subr.bf16.mxu0 0
        %4010 = vmatpush2.bf16.msra.mxu0 0
        %4011 = vmatprep.subr.bf16.mxu0 0
        %4012 = vmatpush2.bf16.msra.mxu0 0
        %4013 = vmatprep.subr.bf16.mxu0 0
        %4014 = vmatpush2.bf16.msra.mxu0 0
        %4015 = vmatprep.subr.bf16.mxu0 0
        %4016 = vmatpush2.bf16.msra.mxu0 0
        %4017 = vmatprep.subr.bf16.mxu0 0
        %4018 = vmatpush2.bf16.msra.mxu0 0
        %4019 = vmatprep.mubr.bf16.mxu0 0
        %4020 = vmatmul.mubr.bf16.gmra.mxu0 %v585
        %v4021 = vpop.f32.mrf.mxu0
        %v4022 = vadd.f32 %v1125, %v4021
        %v4023 = vpop.f32.mrf.mxu0
        %v4024 = vadd.f32 %v1129, %v4023
        %v4025 = vpop.f32.mrf.mxu0
        %v4026 = vpop.f32.mrf.mxu0
        %4027 = vdwg.mxu0
        %4028 = vmatprep.subr.bf16.mxu0 %v3255
        %4029 = vmatpush1.bf16.msra.mxu0 %v3254
        %4030 = vmatprep.subr.bf16.mxu0 %v3195
        %4031 = vmatpush1.bf16.msra.mxu0 %v3194
        %4032 = vmatprep.subr.bf16.mxu0 %v3135
        %4033 = vmatpush1.bf16.msra.mxu0 %v3134
        %4034 = vmatprep.subr.bf16.mxu0 %v3075
        %4035 = vmatpush1.bf16.msra.mxu0 %v3074
        %4036 = vmatprep.subr.bf16.mxu0 %v3015
        %4037 = vmatpush1.bf16.msra.mxu0 %v3014
        %4038 = vmatprep.subr.bf16.mxu0 %v2955
        %4039 = vmatpush1.bf16.msra.mxu0 %v2954
        %4040 = vmatprep.subr.bf16.mxu0 %v2895
        %4041 = vmatpush1.bf16.msra.mxu0 %v2894
        %4042 = vmatprep.subr.bf16.mxu0 %v2835
        %4043 = vmatpush1.bf16.msra.mxu0 %v2834
        %4044 = vmatprep.subr.bf16.mxu0 0
        %4045 = vmatpush2.bf16.msra.mxu0 0
        %4046 = vmatprep.subr.bf16.mxu0 0
        %4047 = vmatpush2.bf16.msra.mxu0 0
        %4048 = vmatprep.subr.bf16.mxu0 0
        %4049 = vmatpush2.bf16.msra.mxu0 0
        %4050 = vmatprep.subr.bf16.mxu0 0
        %4051 = vmatpush2.bf16.msra.mxu0 0
        %4052 = vmatprep.subr.bf16.mxu0 0
        %4053 = vmatpush2.bf16.msra.mxu0 0
        %4054 = vmatprep.subr.bf16.mxu0 0
        %4055 = vmatpush2.bf16.msra.mxu0 0
        %4056 = vmatprep.subr.bf16.mxu0 0
        %4057 = vmatpush2.bf16.msra.mxu0 0
        %4058 = vmatprep.subr.bf16.mxu0 0
        %4059 = vmatpush2.bf16.msra.mxu0 0
        %4060 = vmatprep.mubr.bf16.mxu0 0
        %4061 = vmatmul.mubr.bf16.gmra.mxu0 %v585
        %v4062 = vpop.f32.mrf.mxu0
        %v4063 = vadd.f32 %v1133, %v4062
        %v4064 = vpop.f32.mrf.mxu0
        %v4065 = vadd.f32 %v1137, %v4064
        %v4066 = vpop.f32.mrf.mxu0
        %v4067 = vpop.f32.mrf.mxu0
        %4068 = vdwg.mxu0
        %4069 = vmatprep.subr.bf16.mxu0 %v3257
        %4070 = vmatpush1.bf16.msra.mxu0 %v3256
        %4071 = vmatprep.subr.bf16.mxu0 %v3197
        %4072 = vmatpush1.bf16.msra.mxu0 %v3196
        %4073 = vmatprep.subr.bf16.mxu0 %v3137
        %4074 = vmatpush1.bf16.msra.mxu0 %v3136
        %4075 = vmatprep.subr.bf16.mxu0 %v3077
        %4076 = vmatpush1.bf16.msra.mxu0 %v3076
        %4077 = vmatprep.subr.bf16.mxu0 %v3017
        %4078 = vmatpush1.bf16.msra.mxu0 %v3016
        %4079 = vmatprep.subr.bf16.mxu0 %v2957
        %4080 = vmatpush1.bf16.msra.mxu0 %v2956
        %4081 = vmatprep.subr.bf16.mxu0 %v2897
        %4082 = vmatpush1.bf16.msra.mxu0 %v2896
        %4083 = vmatprep.subr.bf16.mxu0 %v2837
        %4084 = vmatpush1.bf16.msra.mxu0 %v2836
        %4085 = vmatprep.subr.bf16.mxu0 0
        %4086 = vmatpush2.bf16.msra.mxu0 0
        %4087 = vmatprep.subr.bf16.mxu0 0
        %4088 = vmatpush2.bf16.msra.mxu0 0
        %4089 = vmatprep.subr.bf16.mxu0 0
        %4090 = vmatpush2.bf16.msra.mxu0 0
        %4091 = vmatprep.subr.bf16.mxu0 0
        %4092 = vmatpush2.bf16.msra.mxu0 0
        %4093 = vmatprep.subr.bf16.mxu0 0
        %4094 = vmatpush2.bf16.msra.mxu0 0
        %4095 = vmatprep.subr.bf16.mxu0 0
        %4096 = vmatpush2.bf16.msra.mxu0 0
        %4097 = vmatprep.subr.bf16.mxu0 0
        %4098 = vmatpush2.bf16.msra.mxu0 0
        %4099 = vmatprep.subr.bf16.mxu0 0
        %4100 = vmatpush2.bf16.msra.mxu0 0
        %4101 = vmatprep.mubr.bf16.mxu0 0
        %4102 = vmatmul.mubr.bf16.gmra.mxu0 %v585
        %v4103 = vpop.f32.mrf.mxu0
        %v4104 = vadd.f32 %v1141, %v4103
        %v4105 = vpop.f32.mrf.mxu0
        %v4106 = vadd.f32 %v1145, %v4105
        %v4107 = vpop.f32.mrf.mxu0
        %v4108 = vpop.f32.mrf.mxu0
        %4109 = vdwg.mxu0
        %4110 = vmatprep.subr.bf16.mxu0 %v3259
        %4111 = vmatpush1.bf16.msra.mxu0 %v3258
        %4112 = vmatprep.subr.bf16.mxu0 %v3199
        %4113 = vmatpush1.bf16.msra.mxu0 %v3198
        %4114 = vmatprep.subr.bf16.mxu0 %v3139
        %4115 = vmatpush1.bf16.msra.mxu0 %v3138
        %4116 = vmatprep.subr.bf16.mxu0 %v3079
        %4117 = vmatpush1.bf16.msra.mxu0 %v3078
        %4118 = vmatprep.subr.bf16.mxu0 %v3019
        %4119 = vmatpush1.bf16.msra.mxu0 %v3018
        %4120 = vmatprep.subr.bf16.mxu0 %v2959
        %4121 = vmatpush1.bf16.msra.mxu0 %v2958
        %4122 = vmatprep.subr.bf16.mxu0 %v2899
        %4123 = vmatpush1.bf16.msra.mxu0 %v2898
        %4124 = vmatprep.subr.bf16.mxu0 %v2839
        %4125 = vmatpush1.bf16.msra.mxu0 %v2838
        %4126 = vmatprep.subr.bf16.mxu0 0
        %4127 = vmatpush2.bf16.msra.mxu0 0
        %4128 = vmatprep.subr.bf16.mxu0 0
        %4129 = vmatpush2.bf16.msra.mxu0 0
        %4130 = vmatprep.subr.bf16.mxu0 0
        %4131 = vmatpush2.bf16.msra.mxu0 0
        %4132 = vmatprep.subr.bf16.mxu0 0
        %4133 = vmatpush2.bf16.msra.mxu0 0
        %4134 = vmatprep.subr.bf16.mxu0 0
        %4135 = vmatpush2.bf16.msra.mxu0 0
        %4136 = vmatprep.subr.bf16.mxu0 0
        %4137 = vmatpush2.bf16.msra.mxu0 0
        %4138 = vmatprep.subr.bf16.mxu0 0
        %4139 = vmatpush2.bf16.msra.mxu0 0
        %4140 = vmatprep.subr.bf16.mxu0 0
        %4141 = vmatpush2.bf16.msra.mxu0 0
        %4142 = vmatprep.mubr.bf16.mxu0 0
        %4143 = vmatmul.mubr.bf16.gmra.mxu0 %v585
        %v4144 = vpop.f32.mrf.mxu0
        %v4145 = vadd.f32 %v1149, %v4144
        %v4146 = vpop.f32.mrf.mxu0
        %v4147 = vadd.f32 %v1153, %v4146
        %v4148 = vpop.f32.mrf.mxu0
        %v4149 = vpop.f32.mrf.mxu0
        %4150 = vdwg.mxu0
        %4151 = vmatprep.subr.bf16.mxu0 %v3261
        %4152 = vmatpush1.bf16.msra.mxu0 %v3260
        %4153 = vmatprep.subr.bf16.mxu0 %v3201
        %4154 = vmatpush1.bf16.msra.mxu0 %v3200
        %4155 = vmatprep.subr.bf16.mxu0 %v3141
        %4156 = vmatpush1.bf16.msra.mxu0 %v3140
        %4157 = vmatprep.subr.bf16.mxu0 %v3081
        %4158 = vmatpush1.bf16.msra.mxu0 %v3080
        %4159 = vmatprep.subr.bf16.mxu0 %v3021
        %4160 = vmatpush1.bf16.msra.mxu0 %v3020
        %4161 = vmatprep.subr.bf16.mxu0 %v2961
        %4162 = vmatpush1.bf16.msra.mxu0 %v2960
        %4163 = vmatprep.subr.bf16.mxu0 %v2901
        %4164 = vmatpush1.bf16.msra.mxu0 %v2900
        %4165 = vmatprep.subr.bf16.mxu0 %v2841
        %4166 = vmatpush1.bf16.msra.mxu0 %v2840
        %4167 = vmatprep.subr.bf16.mxu0 0
        %4168 = vmatpush2.bf16.msra.mxu0 0
        %4169 = vmatprep.subr.bf16.mxu0 0
        %4170 = vmatpush2.bf16.msra.mxu0 0
        %4171 = vmatprep.subr.bf16.mxu0 0
        %4172 = vmatpush2.bf16.msra.mxu0 0
        %4173 = vmatprep.subr.bf16.mxu0 0
        %4174 = vmatpush2.bf16.msra.mxu0 0
        %4175 = vmatprep.subr.bf16.mxu0 0
        %4176 = vmatpush2.bf16.msra.mxu0 0
        %4177 = vmatprep.subr.bf16.mxu0 0
        %4178 = vmatpush2.bf16.msra.mxu0 0
        %4179 = vmatprep.subr.bf16.mxu0 0
        %4180 = vmatpush2.bf16.msra.mxu0 0
        %4181 = vmatprep.subr.bf16.mxu0 0
        %4182 = vmatpush2.bf16.msra.mxu0 0
        %4183 = vmatprep.mubr.bf16.mxu0 0
        %4184 = vmatmul.mubr.bf16.gmra.mxu0 %v585
        %v4185 = vpop.f32.mrf.mxu0
        %v4186 = vadd.f32 %v1157, %v4185
        %v4187 = vpop.f32.mrf.mxu0
        %v4188 = vadd.f32 %v1161, %v4187
        %v4189 = vpop.f32.mrf.mxu0
        %v4190 = vpop.f32.mrf.mxu0
        %4191 = vdwg.mxu0
        %4192 = vmatprep.subr.bf16.mxu0 %v3263
        %4193 = vmatpush1.bf16.msra.mxu0 %v3262
        %4194 = vmatprep.subr.bf16.mxu0 %v3203
        %4195 = vmatpush1.bf16.msra.mxu0 %v3202
        %4196 = vmatprep.subr.bf16.mxu0 %v3143
        %4197 = vmatpush1.bf16.msra.mxu0 %v3142
        %4198 = vmatprep.subr.bf16.mxu0 %v3083
        %4199 = vmatpush1.bf16.msra.mxu0 %v3082
        %4200 = vmatprep.subr.bf16.mxu0 %v3023
        %4201 = vmatpush1.bf16.msra.mxu0 %v3022
        %4202 = vmatprep.subr.bf16.mxu0 %v2963
        %4203 = vmatpush1.bf16.msra.mxu0 %v2962
        %4204 = vmatprep.subr.bf16.mxu0 %v2903
        %4205 = vmatpush1.bf16.msra.mxu0 %v2902
        %4206 = vmatprep.subr.bf16.mxu0 %v2843
        %4207 = vmatpush1.bf16.msra.mxu0 %v2842
        %4208 = vmatprep.subr.bf16.mxu0 0
        %4209 = vmatpush2.bf16.msra.mxu0 0
        %4210 = vmatprep.subr.bf16.mxu0 0
        %4211 = vmatpush2.bf16.msra.mxu0 0
        %4212 = vmatprep.subr.bf16.mxu0 0
        %4213 = vmatpush2.bf16.msra.mxu0 0
        %4214 = vmatprep.subr.bf16.mxu0 0
        %4215 = vmatpush2.bf16.msra.mxu0 0
        %4216 = vmatprep.subr.bf16.mxu0 0
        %4217 = vmatpush2.bf16.msra.mxu0 0
        %4218 = vmatprep.subr.bf16.mxu0 0
        %4219 = vmatpush2.bf16.msra.mxu0 0
        %4220 = vmatprep.subr.bf16.mxu0 0
        %4221 = vmatpush2.bf16.msra.mxu0 0
        %4222 = vmatprep.subr.bf16.mxu0 0
        %4223 = vmatpush2.bf16.msra.mxu0 0
        %4224 = vmatprep.mubr.bf16.mxu0 0
        %4225 = vmatmul.mubr.bf16.gmra.mxu0 %v585
        %v4226 = vpop.f32.mrf.mxu0
        %v4227 = vadd.f32 %v1165, %v4226
        %v4228 = vpop.f32.mrf.mxu0
        %v4229 = vadd.f32 %v1169, %v4228
        %v4230 = vpop.f32.mrf.mxu0
        %v4231 = vpop.f32.mrf.mxu0
        %4232 = vdwg.mxu0
        %4233 = vmatprep.subr.bf16.mxu0 %v3265
        %4234 = vmatpush1.bf16.msra.mxu0 %v3264
        %4235 = vmatprep.subr.bf16.mxu0 %v3205
        %4236 = vmatpush1.bf16.msra.mxu0 %v3204
        %4237 = vmatprep.subr.bf16.mxu0 %v3145
        %4238 = vmatpush1.bf16.msra.mxu0 %v3144
        %4239 = vmatprep.subr.bf16.mxu0 %v3085
        %4240 = vmatpush1.bf16.msra.mxu0 %v3084
        %4241 = vmatprep.subr.bf16.mxu0 %v3025
        %4242 = vmatpush1.bf16.msra.mxu0 %v3024
        %4243 = vmatprep.subr.bf16.mxu0 %v2965
        %4244 = vmatpush1.bf16.msra.mxu0 %v2964
        %4245 = vmatprep.subr.bf16.mxu0 %v2905
        %4246 = vmatpush1.bf16.msra.mxu0 %v2904
        %4247 = vmatprep.subr.bf16.mxu0 %v2845
        %4248 = vmatpush1.bf16.msra.mxu0 %v2844
        %4249 = vmatprep.subr.bf16.mxu0 0
        %4250 = vmatpush2.bf16.msra.mxu0 0
        %4251 = vmatprep.subr.bf16.mxu0 0
        %4252 = vmatpush2.bf16.msra.mxu0 0
        %4253 = vmatprep.subr.bf16.mxu0 0
        %4254 = vmatpush2.bf16.msra.mxu0 0
        %4255 = vmatprep.subr.bf16.mxu0 0
        %4256 = vmatpush2.bf16.msra.mxu0 0
        %4257 = vmatprep.subr.bf16.mxu0 0
        %4258 = vmatpush2.bf16.msra.mxu0 0
        %4259 = vmatprep.subr.bf16.mxu0 0
        %4260 = vmatpush2.bf16.msra.mxu0 0
        %4261 = vmatprep.subr.bf16.mxu0 0
        %4262 = vmatpush2.bf16.msra.mxu0 0
        %4263 = vmatprep.subr.bf16.mxu0 0
        %4264 = vmatpush2.bf16.msra.mxu0 0
        %4265 = vmatprep.mubr.bf16.mxu0 0
        %4266 = vmatmul.mubr.bf16.gmra.mxu0 %v585
        %v4267 = vpop.f32.mrf.mxu0
        %v4268 = vadd.f32 %v1173, %v4267
        %v4269 = vpop.f32.mrf.mxu0
        %v4270 = vadd.f32 %v1177, %v4269
        %v4271 = vpop.f32.mrf.mxu0
        %v4272 = vpop.f32.mrf.mxu0
        %4273 = vdwg.mxu0
        %4274 = vmatprep.subr.bf16.mxu0 %v3267
        %4275 = vmatpush1.bf16.msra.mxu0 %v3266
        %4276 = vmatprep.subr.bf16.mxu0 %v3207
        %4277 = vmatpush1.bf16.msra.mxu0 %v3206
        %4278 = vmatprep.subr.bf16.mxu0 %v3147
        %4279 = vmatpush1.bf16.msra.mxu0 %v3146
        %4280 = vmatprep.subr.bf16.mxu0 %v3087
        %4281 = vmatpush1.bf16.msra.mxu0 %v3086
        %4282 = vmatprep.subr.bf16.mxu0 %v3027
        %4283 = vmatpush1.bf16.msra.mxu0 %v3026
        %4284 = vmatprep.subr.bf16.mxu0 %v2967
        %4285 = vmatpush1.bf16.msra.mxu0 %v2966
        %4286 = vmatprep.subr.bf16.mxu0 %v2907
        %4287 = vmatpush1.bf16.msra.mxu0 %v2906
        %4288 = vmatprep.subr.bf16.mxu0 %v2847
        %4289 = vmatpush1.bf16.msra.mxu0 %v2846
        %4290 = vmatprep.subr.bf16.mxu0 0
        %4291 = vmatpush2.bf16.msra.mxu0 0
        %4292 = vmatprep.subr.bf16.mxu0 0
        %4293 = vmatpush2.bf16.msra.mxu0 0
        %4294 = vmatprep.subr.bf16.mxu0 0
        %4295 = vmatpush2.bf16.msra.mxu0 0
        %4296 = vmatprep.subr.bf16.mxu0 0
        %4297 = vmatpush2.bf16.msra.mxu0 0
        %4298 = vmatprep.subr.bf16.mxu0 0
        %4299 = vmatpush2.bf16.msra.mxu0 0
        %4300 = vmatprep.subr.bf16.mxu0 0
        %4301 = vmatpush2.bf16.msra.mxu0 0
        %4302 = vmatprep.subr.bf16.mxu0 0
        %4303 = vmatpush2.bf16.msra.mxu0 0
        %4304 = vmatprep.subr.bf16.mxu0 0
        %4305 = vmatpush2.bf16.msra.mxu0 0
        %4306 = vmatprep.mubr.bf16.mxu0 0
        %4307 = vmatmul.mubr.bf16.gmra.mxu0 %v585
        %v4308 = vpop.f32.mrf.mxu0
        %v4309 = vadd.f32 %v1181, %v4308
        %v4310 = vpop.f32.mrf.mxu0
        %v4311 = vadd.f32 %v1185, %v4310
        %v4312 = vpop.f32.mrf.mxu0
        %v4313 = vpop.f32.mrf.mxu0
        %4314 = vdwg.mxu0
        %4315 = vmatprep.subr.bf16.mxu0 %v3269
        %4316 = vmatpush1.bf16.msra.mxu0 %v3268
        %4317 = vmatprep.subr.bf16.mxu0 %v3209
        %4318 = vmatpush1.bf16.msra.mxu0 %v3208
        %4319 = vmatprep.subr.bf16.mxu0 %v3149
        %4320 = vmatpush1.bf16.msra.mxu0 %v3148
        %4321 = vmatprep.subr.bf16.mxu0 %v3089
        %4322 = vmatpush1.bf16.msra.mxu0 %v3088
        %4323 = vmatprep.subr.bf16.mxu0 %v3029
        %4324 = vmatpush1.bf16.msra.mxu0 %v3028
        %4325 = vmatprep.subr.bf16.mxu0 %v2969
        %4326 = vmatpush1.bf16.msra.mxu0 %v2968
        %4327 = vmatprep.subr.bf16.mxu0 %v2909
        %4328 = vmatpush1.bf16.msra.mxu0 %v2908
        %4329 = vmatprep.subr.bf16.mxu0 %v2849
        %4330 = vmatpush1.bf16.msra.mxu0 %v2848
        %4331 = vmatprep.subr.bf16.mxu0 0
        %4332 = vmatpush2.bf16.msra.mxu0 0
        %4333 = vmatprep.subr.bf16.mxu0 0
        %4334 = vmatpush2.bf16.msra.mxu0 0
        %4335 = vmatprep.subr.bf16.mxu0 0
        %4336 = vmatpush2.bf16.msra.mxu0 0
        %4337 = vmatprep.subr.bf16.mxu0 0
        %4338 = vmatpush2.bf16.msra.mxu0 0
        %4339 = vmatprep.subr.bf16.mxu0 0
        %4340 = vmatpush2.bf16.msra.mxu0 0
        %4341 = vmatprep.subr.bf16.mxu0 0
        %4342 = vmatpush2.bf16.msra.mxu0 0
        %4343 = vmatprep.subr.bf16.mxu0 0
        %4344 = vmatpush2.bf16.msra.mxu0 0
        %4345 = vmatprep.subr.bf16.mxu0 0
        %4346 = vmatpush2.bf16.msra.mxu0 0
        %4347 = vmatprep.mubr.bf16.mxu0 0
        %4348 = vmatmul.mubr.bf16.gmra.mxu0 %v585
        %v4349 = vpop.f32.mrf.mxu0
        %v4350 = vadd.f32 %v1189, %v4349
        %v4351 = vpop.f32.mrf.mxu0
        %v4352 = vadd.f32 %v1193, %v4351
        %v4353 = vpop.f32.mrf.mxu0
        %v4354 = vpop.f32.mrf.mxu0
        %4355 = vdwg.mxu0
        %4356 = vmatprep.subr.bf16.mxu0 %v3271
        %4357 = vmatpush1.bf16.msra.mxu0 %v3270
        %4358 = vmatprep.subr.bf16.mxu0 %v3211
        %4359 = vmatpush1.bf16.msra.mxu0 %v3210
        %4360 = vmatprep.subr.bf16.mxu0 %v3151
        %4361 = vmatpush1.bf16.msra.mxu0 %v3150
        %4362 = vmatprep.subr.bf16.mxu0 %v3091
        %4363 = vmatpush1.bf16.msra.mxu0 %v3090
        %4364 = vmatprep.subr.bf16.mxu0 %v3031
        %4365 = vmatpush1.bf16.msra.mxu0 %v3030
        %4366 = vmatprep.subr.bf16.mxu0 %v2971
        %4367 = vmatpush1.bf16.msra.mxu0 %v2970
        %4368 = vmatprep.subr.bf16.mxu0 %v2911
        %4369 = vmatpush1.bf16.msra.mxu0 %v2910
        %4370 = vmatprep.subr.bf16.mxu0 %v2851
        %4371 = vmatpush1.bf16.msra.mxu0 %v2850
        %4372 = vmatprep.subr.bf16.mxu0 0
        %4373 = vmatpush2.bf16.msra.mxu0 0
        %4374 = vmatprep.subr.bf16.mxu0 0
        %4375 = vmatpush2.bf16.msra.mxu0 0
        %4376 = vmatprep.subr.bf16.mxu0 0
        %4377 = vmatpush2.bf16.msra.mxu0 0
        %4378 = vmatprep.subr.bf16.mxu0 0
        %4379 = vmatpush2.bf16.msra.mxu0 0
        %4380 = vmatprep.subr.bf16.mxu0 0
        %4381 = vmatpush2.bf16.msra.mxu0 0
        %4382 = vmatprep.subr.bf16.mxu0 0
        %4383 = vmatpush2.bf16.msra.mxu0 0
        %4384 = vmatprep.subr.bf16.mxu0 0
        %4385 = vmatpush2.bf16.msra.mxu0 0
        %4386 = vmatprep.subr.bf16.mxu0 0
        %4387 = vmatpush2.bf16.msra.mxu0 0
        %4388 = vmatprep.mubr.bf16.mxu0 0
        %4389 = vmatmul.mubr.bf16.gmra.mxu0 %v585
        %v4390 = vpop.f32.mrf.mxu0
        %v4391 = vadd.f32 %v1197, %v4390
        %v4392 = vpop.f32.mrf.mxu0
        %v4393 = vadd.f32 %v1201, %v4392
        %v4394 = vpop.f32.mrf.mxu0
        %v4395 = vpop.f32.mrf.mxu0
        %4396 = vdwg.mxu0
        %4397 = vmatprep.subr.bf16.mxu0 %v3273
        %4398 = vmatpush1.bf16.msra.mxu0 %v3272
        %4399 = vmatprep.subr.bf16.mxu0 %v3213
        %4400 = vmatpush1.bf16.msra.mxu0 %v3212
        %4401 = vmatprep.subr.bf16.mxu0 %v3153
        %4402 = vmatpush1.bf16.msra.mxu0 %v3152
        %4403 = vmatprep.subr.bf16.mxu0 %v3093
        %4404 = vmatpush1.bf16.msra.mxu0 %v3092
        %4405 = vmatprep.subr.bf16.mxu0 %v3033
        %4406 = vmatpush1.bf16.msra.mxu0 %v3032
        %4407 = vmatprep.subr.bf16.mxu0 %v2973
        %4408 = vmatpush1.bf16.msra.mxu0 %v2972
        %4409 = vmatprep.subr.bf16.mxu0 %v2913
        %4410 = vmatpush1.bf16.msra.mxu0 %v2912
        %4411 = vmatprep.subr.bf16.mxu0 %v2853
        %4412 = vmatpush1.bf16.msra.mxu0 %v2852
        %4413 = vmatprep.subr.bf16.mxu0 0
        %4414 = vmatpush2.bf16.msra.mxu0 0
        %4415 = vmatprep.subr.bf16.mxu0 0
        %4416 = vmatpush2.bf16.msra.mxu0 0
        %4417 = vmatprep.subr.bf16.mxu0 0
        %4418 = vmatpush2.bf16.msra.mxu0 0
        %4419 = vmatprep.subr.bf16.mxu0 0
        %4420 = vmatpush2.bf16.msra.mxu0 0
        %4421 = vmatprep.subr.bf16.mxu0 0
        %4422 = vmatpush2.bf16.msra.mxu0 0
        %4423 = vmatprep.subr.bf16.mxu0 0
        %4424 = vmatpush2.bf16.msra.mxu0 0
        %4425 = vmatprep.subr.bf16.mxu0 0
        %4426 = vmatpush2.bf16.msra.mxu0 0
        %4427 = vmatprep.subr.bf16.mxu0 0
        %4428 = vmatpush2.bf16.msra.mxu0 0
        %4429 = vmatprep.mubr.bf16.mxu0 0
        %4430 = vmatmul.mubr.bf16.gmra.mxu0 %v585
        %v4431 = vpop.f32.mrf.mxu0
        %v4432 = vadd.f32 %v1205, %v4431
        %v4433 = vpop.f32.mrf.mxu0
        %v4434 = vadd.f32 %v1209, %v4433
        %v4435 = vpop.f32.mrf.mxu0
        %v4436 = vpop.f32.mrf.mxu0
        %4437 = vdwg.mxu0
        %4438 = vmatprep.subr.bf16.mxu0 %v3275
        %4439 = vmatpush1.bf16.msra.mxu0 %v3274
        %4440 = vmatprep.subr.bf16.mxu0 %v3215
        %4441 = vmatpush1.bf16.msra.mxu0 %v3214
        %4442 = vmatprep.subr.bf16.mxu0 %v3155
        %4443 = vmatpush1.bf16.msra.mxu0 %v3154
        %4444 = vmatprep.subr.bf16.mxu0 %v3095
        %4445 = vmatpush1.bf16.msra.mxu0 %v3094
        %4446 = vmatprep.subr.bf16.mxu0 %v3035
        %4447 = vmatpush1.bf16.msra.mxu0 %v3034
        %4448 = vmatprep.subr.bf16.mxu0 %v2975
        %4449 = vmatpush1.bf16.msra.mxu0 %v2974
        %4450 = vmatprep.subr.bf16.mxu0 %v2915
        %4451 = vmatpush1.bf16.msra.mxu0 %v2914
        %4452 = vmatprep.subr.bf16.mxu0 %v2855
        %4453 = vmatpush1.bf16.msra.mxu0 %v2854
        %4454 = vmatprep.subr.bf16.mxu0 0
        %4455 = vmatpush2.bf16.msra.mxu0 0
        %4456 = vmatprep.subr.bf16.mxu0 0
        %4457 = vmatpush2.bf16.msra.mxu0 0
        %4458 = vmatprep.subr.bf16.mxu0 0
        %4459 = vmatpush2.bf16.msra.mxu0 0
        %4460 = vmatprep.subr.bf16.mxu0 0
        %4461 = vmatpush2.bf16.msra.mxu0 0
        %4462 = vmatprep.subr.bf16.mxu0 0
        %4463 = vmatpush2.bf16.msra.mxu0 0
        %4464 = vmatprep.subr.bf16.mxu0 0
        %4465 = vmatpush2.bf16.msra.mxu0 0
        %4466 = vmatprep.subr.bf16.mxu0 0
        %4467 = vmatpush2.bf16.msra.mxu0 0
        %4468 = vmatprep.subr.bf16.mxu0 0
        %4469 = vmatpush2.bf16.msra.mxu0 0
        %4470 = vmatprep.mubr.bf16.mxu0 0
        %4471 = vmatmul.mubr.bf16.gmra.mxu0 %v585
        %v4472 = vpop.f32.mrf.mxu0
        %v4473 = vadd.f32 %v1213, %v4472
        %v4474 = vpop.f32.mrf.mxu0
        %v4475 = vadd.f32 %v1217, %v4474
        %v4476 = vpop.f32.mrf.mxu0
        %v4477 = vpop.f32.mrf.mxu0
        %4478 = vdwg.mxu0
        %4479 = vmatprep.subr.bf16.mxu0 %v3277
        %4480 = vmatpush1.bf16.msra.mxu0 %v3276
        %4481 = vmatprep.subr.bf16.mxu0 %v3217
        %4482 = vmatpush1.bf16.msra.mxu0 %v3216
        %4483 = vmatprep.subr.bf16.mxu0 %v3157
        %4484 = vmatpush1.bf16.msra.mxu0 %v3156
        %4485 = vmatprep.subr.bf16.mxu0 %v3097
        %4486 = vmatpush1.bf16.msra.mxu0 %v3096
        %4487 = vmatprep.subr.bf16.mxu0 %v3037
        %4488 = vmatpush1.bf16.msra.mxu0 %v3036
        %4489 = vmatprep.subr.bf16.mxu0 %v2977
        %4490 = vmatpush1.bf16.msra.mxu0 %v2976
        %4491 = vmatprep.subr.bf16.mxu0 %v2917
        %4492 = vmatpush1.bf16.msra.mxu0 %v2916
        %4493 = vmatprep.subr.bf16.mxu0 %v2857
        %4494 = vmatpush1.bf16.msra.mxu0 %v2856
        %4495 = vmatprep.subr.bf16.mxu0 0
        %4496 = vmatpush2.bf16.msra.mxu0 0
        %4497 = vmatprep.subr.bf16.mxu0 0
        %4498 = vmatpush2.bf16.msra.mxu0 0
        %4499 = vmatprep.subr.bf16.mxu0 0
        %4500 = vmatpush2.bf16.msra.mxu0 0
        %4501 = vmatprep.subr.bf16.mxu0 0
        %4502 = vmatpush2.bf16.msra.mxu0 0
        %4503 = vmatprep.subr.bf16.mxu0 0
        %4504 = vmatpush2.bf16.msra.mxu0 0
        %4505 = vmatprep.subr.bf16.mxu0 0
        %4506 = vmatpush2.bf16.msra.mxu0 0
        %4507 = vmatprep.subr.bf16.mxu0 0
        %4508 = vmatpush2.bf16.msra.mxu0 0
        %4509 = vmatprep.subr.bf16.mxu0 0
        %4510 = vmatpush2.bf16.msra.mxu0 0
        %4511 = vmatprep.mubr.bf16.mxu0 0
        %4512 = vmatmul.mubr.bf16.gmra.mxu0 %v585
        %v4513 = vpop.f32.mrf.mxu0
        %v4514 = vadd.f32 %v1221, %v4513
        %v4515 = vpop.f32.mrf.mxu0
        %v4516 = vadd.f32 %v1225, %v4515
        %v4517 = vpop.f32.mrf.mxu0
        %v4518 = vpop.f32.mrf.mxu0
        %4519 = vdwg.mxu0
        %4520 = vmatprep.subr.bf16.mxu0 %v3279
        %4521 = vmatpush1.bf16.msra.mxu0 %v3278
        %4522 = vmatprep.subr.bf16.mxu0 %v3219
        %4523 = vmatpush1.bf16.msra.mxu0 %v3218
        %4524 = vmatprep.subr.bf16.mxu0 %v3159
        %4525 = vmatpush1.bf16.msra.mxu0 %v3158
        %4526 = vmatprep.subr.bf16.mxu0 %v3099
        %4527 = vmatpush1.bf16.msra.mxu0 %v3098
        %4528 = vmatprep.subr.bf16.mxu0 %v3039
        %4529 = vmatpush1.bf16.msra.mxu0 %v3038
        %4530 = vmatprep.subr.bf16.mxu0 %v2979
        %4531 = vmatpush1.bf16.msra.mxu0 %v2978
        %4532 = vmatprep.subr.bf16.mxu0 %v2919
        %4533 = vmatpush1.bf16.msra.mxu0 %v2918
        %4534 = vmatprep.subr.bf16.mxu0 %v2859
        %4535 = vmatpush1.bf16.msra.mxu0 %v2858
        %4536 = vmatprep.subr.bf16.mxu0 0
        %4537 = vmatpush2.bf16.msra.mxu0 0
        %4538 = vmatprep.subr.bf16.mxu0 0
        %4539 = vmatpush2.bf16.msra.mxu0 0
        %4540 = vmatprep.subr.bf16.mxu0 0
        %4541 = vmatpush2.bf16.msra.mxu0 0
        %4542 = vmatprep.subr.bf16.mxu0 0
        %4543 = vmatpush2.bf16.msra.mxu0 0
        %4544 = vmatprep.subr.bf16.mxu0 0
        %4545 = vmatpush2.bf16.msra.mxu0 0
        %4546 = vmatprep.subr.bf16.mxu0 0
        %4547 = vmatpush2.bf16.msra.mxu0 0
        %4548 = vmatprep.subr.bf16.mxu0 0
        %4549 = vmatpush2.bf16.msra.mxu0 0
        %4550 = vmatprep.subr.bf16.mxu0 0
        %4551 = vmatpush2.bf16.msra.mxu0 0
        %4552 = vmatprep.mubr.bf16.mxu0 0
        %4553 = vmatmul.mubr.bf16.gmra.mxu0 %v585
        %v4554 = vpop.f32.mrf.mxu0
        %v4555 = vadd.f32 %v1229, %v4554
        %v4556 = vpop.f32.mrf.mxu0
        %v4557 = vadd.f32 %v1233, %v4556
        %v4558 = vpop.f32.mrf.mxu0
        %v4559 = vpop.f32.mrf.mxu0
        %4560 = vdwg.mxu0
        %4561 = vmatprep.subr.bf16.mxu0 %v3281
        %4562 = vmatpush1.bf16.msra.mxu0 %v3280
        %4563 = vmatprep.subr.bf16.mxu0 %v3221
        %4564 = vmatpush1.bf16.msra.mxu0 %v3220
        %4565 = vmatprep.subr.bf16.mxu0 %v3161
        %4566 = vmatpush1.bf16.msra.mxu0 %v3160
        %4567 = vmatprep.subr.bf16.mxu0 %v3101
        %4568 = vmatpush1.bf16.msra.mxu0 %v3100
        %4569 = vmatprep.subr.bf16.mxu0 %v3041
        %4570 = vmatpush1.bf16.msra.mxu0 %v3040
        %4571 = vmatprep.subr.bf16.mxu0 %v2981
        %4572 = vmatpush1.bf16.msra.mxu0 %v2980
        %4573 = vmatprep.subr.bf16.mxu0 %v2921
        %4574 = vmatpush1.bf16.msra.mxu0 %v2920
        %4575 = vmatprep.subr.bf16.mxu0 %v2861
        %4576 = vmatpush1.bf16.msra.mxu0 %v2860
        %4577 = vmatprep.subr.bf16.mxu0 0
        %4578 = vmatpush2.bf16.msra.mxu0 0
        %4579 = vmatprep.subr.bf16.mxu0 0
        %4580 = vmatpush2.bf16.msra.mxu0 0
        %4581 = vmatprep.subr.bf16.mxu0 0
        %4582 = vmatpush2.bf16.msra.mxu0 0
        %4583 = vmatprep.subr.bf16.mxu0 0
        %4584 = vmatpush2.bf16.msra.mxu0 0
        %4585 = vmatprep.subr.bf16.mxu0 0
        %4586 = vmatpush2.bf16.msra.mxu0 0
        %4587 = vmatprep.subr.bf16.mxu0 0
        %4588 = vmatpush2.bf16.msra.mxu0 0
        %4589 = vmatprep.subr.bf16.mxu0 0
        %4590 = vmatpush2.bf16.msra.mxu0 0
        %4591 = vmatprep.subr.bf16.mxu0 0
        %4592 = vmatpush2.bf16.msra.mxu0 0
        %4593 = vmatprep.mubr.bf16.mxu0 0
        %4594 = vmatmul.mubr.bf16.gmra.mxu0 %v585
        %v4595 = vpop.f32.mrf.mxu0
        %v4596 = vadd.f32 %v1237, %v4595
        %v4597 = vpop.f32.mrf.mxu0
        %v4598 = vadd.f32 %v1241, %v4597
        %v4599 = vpop.f32.mrf.mxu0
        %v4600 = vpop.f32.mrf.mxu0
        %4601 = vdwg.mxu0
        %4602 = vmatprep.subr.bf16.mxu0 %v3283
        %4603 = vmatpush1.bf16.msra.mxu0 %v3282
        %4604 = vmatprep.subr.bf16.mxu0 %v3223
        %4605 = vmatpush1.bf16.msra.mxu0 %v3222
        %4606 = vmatprep.subr.bf16.mxu0 %v3163
        %4607 = vmatpush1.bf16.msra.mxu0 %v3162
        %4608 = vmatprep.subr.bf16.mxu0 %v3103
        %4609 = vmatpush1.bf16.msra.mxu0 %v3102
        %4610 = vmatprep.subr.bf16.mxu0 %v3043
        %4611 = vmatpush1.bf16.msra.mxu0 %v3042
        %4612 = vmatprep.subr.bf16.mxu0 %v2983
        %4613 = vmatpush1.bf16.msra.mxu0 %v2982
        %4614 = vmatprep.subr.bf16.mxu0 %v2923
        %4615 = vmatpush1.bf16.msra.mxu0 %v2922
        %4616 = vmatprep.subr.bf16.mxu0 %v2863
        %4617 = vmatpush1.bf16.msra.mxu0 %v2862
        %4618 = vmatprep.subr.bf16.mxu0 0
        %4619 = vmatpush2.bf16.msra.mxu0 0
        %4620 = vmatprep.subr.bf16.mxu0 0
        %4621 = vmatpush2.bf16.msra.mxu0 0
        %4622 = vmatprep.subr.bf16.mxu0 0
        %4623 = vmatpush2.bf16.msra.mxu0 0
        %4624 = vmatprep.subr.bf16.mxu0 0
        %4625 = vmatpush2.bf16.msra.mxu0 0
        %4626 = vmatprep.subr.bf16.mxu0 0
        %4627 = vmatpush2.bf16.msra.mxu0 0
        %4628 = vmatprep.subr.bf16.mxu0 0
        %4629 = vmatpush2.bf16.msra.mxu0 0
        %4630 = vmatprep.subr.bf16.mxu0 0
        %4631 = vmatpush2.bf16.msra.mxu0 0
        %4632 = vmatprep.subr.bf16.mxu0 0
        %4633 = vmatpush2.bf16.msra.mxu0 0
        %4634 = vmatprep.mubr.bf16.mxu0 0
        %4635 = vmatmul.mubr.bf16.gmra.mxu0 %v585
        %v4636 = vpop.f32.mrf.mxu0
        %v4637 = vadd.f32 %v1245, %v4636
        %v4638 = vpop.f32.mrf.mxu0
        %v4639 = vadd.f32 %v1249, %v4638
        %v4640 = vpop.f32.mrf.mxu0
        %v4641 = vpop.f32.mrf.mxu0
        %4642 = vdwg.mxu0
        %4643 = vmatprep.subr.bf16.mxu0 %v3285
        %4644 = vmatpush1.bf16.msra.mxu0 %v3284
        %4645 = vmatprep.subr.bf16.mxu0 %v3225
        %4646 = vmatpush1.bf16.msra.mxu0 %v3224
        %4647 = vmatprep.subr.bf16.mxu0 %v3165
        %4648 = vmatpush1.bf16.msra.mxu0 %v3164
        %4649 = vmatprep.subr.bf16.mxu0 %v3105
        %4650 = vmatpush1.bf16.msra.mxu0 %v3104
        %4651 = vmatprep.subr.bf16.mxu0 %v3045
        %4652 = vmatpush1.bf16.msra.mxu0 %v3044
        %4653 = vmatprep.subr.bf16.mxu0 %v2985
        %4654 = vmatpush1.bf16.msra.mxu0 %v2984
        %4655 = vmatprep.subr.bf16.mxu0 %v2925
        %4656 = vmatpush1.bf16.msra.mxu0 %v2924
        %4657 = vmatprep.subr.bf16.mxu0 %v2865
        %4658 = vmatpush1.bf16.msra.mxu0 %v2864
        %4659 = vmatprep.subr.bf16.mxu0 0
        %4660 = vmatpush2.bf16.msra.mxu0 0
        %4661 = vmatprep.subr.bf16.mxu0 0
        %4662 = vmatpush2.bf16.msra.mxu0 0
        %4663 = vmatprep.subr.bf16.mxu0 0
        %4664 = vmatpush2.bf16.msra.mxu0 0
        %4665 = vmatprep.subr.bf16.mxu0 0
        %4666 = vmatpush2.bf16.msra.mxu0 0
        %4667 = vmatprep.subr.bf16.mxu0 0
        %4668 = vmatpush2.bf16.msra.mxu0 0
        %4669 = vmatprep.subr.bf16.mxu0 0
        %4670 = vmatpush2.bf16.msra.mxu0 0
        %4671 = vmatprep.subr.bf16.mxu0 0
        %4672 = vmatpush2.bf16.msra.mxu0 0
        %4673 = vmatprep.subr.bf16.mxu0 0
        %4674 = vmatpush2.bf16.msra.mxu0 0
        %4675 = vmatprep.mubr.bf16.mxu0 0
        %4676 = vmatmul.mubr.bf16.gmra.mxu0 %v585
        %v4677 = vpop.f32.mrf.mxu0
        %v4678 = vadd.f32 %v1253, %v4677
        %v4679 = vpop.f32.mrf.mxu0
        %v4680 = vadd.f32 %v1257, %v4679
        %v4681 = vpop.f32.mrf.mxu0
        %v4682 = vpop.f32.mrf.mxu0
        %4683 = vdwg.mxu0
        %4684 = vmatprep.subr.bf16.mxu0 %v3287
        %4685 = vmatpush1.bf16.msra.mxu0 %v3286
        %4686 = vmatprep.subr.bf16.mxu0 %v3227
        %4687 = vmatpush1.bf16.msra.mxu0 %v3226
        %4688 = vmatprep.subr.bf16.mxu0 %v3167
        %4689 = vmatpush1.bf16.msra.mxu0 %v3166
        %4690 = vmatprep.subr.bf16.mxu0 %v3107
        %4691 = vmatpush1.bf16.msra.mxu0 %v3106
        %4692 = vmatprep.subr.bf16.mxu0 %v3047
        %4693 = vmatpush1.bf16.msra.mxu0 %v3046
        %4694 = vmatprep.subr.bf16.mxu0 %v2987
        %4695 = vmatpush1.bf16.msra.mxu0 %v2986
        %4696 = vmatprep.subr.bf16.mxu0 %v2927
        %4697 = vmatpush1.bf16.msra.mxu0 %v2926
        %4698 = vmatprep.subr.bf16.mxu0 %v2867
        %4699 = vmatpush1.bf16.msra.mxu0 %v2866
        %4700 = vmatprep.subr.bf16.mxu0 0
        %4701 = vmatpush2.bf16.msra.mxu0 0
        %4702 = vmatprep.subr.bf16.mxu0 0
        %4703 = vmatpush2.bf16.msra.mxu0 0
        %4704 = vmatprep.subr.bf16.mxu0 0
        %4705 = vmatpush2.bf16.msra.mxu0 0
        %4706 = vmatprep.subr.bf16.mxu0 0
        %4707 = vmatpush2.bf16.msra.mxu0 0
        %4708 = vmatprep.subr.bf16.mxu0 0
        %4709 = vmatpush2.bf16.msra.mxu0 0
        %4710 = vmatprep.subr.bf16.mxu0 0
        %4711 = vmatpush2.bf16.msra.mxu0 0
        %4712 = vmatprep.subr.bf16.mxu0 0
        %4713 = vmatpush2.bf16.msra.mxu0 0
        %4714 = vmatprep.subr.bf16.mxu0 0
        %4715 = vmatpush2.bf16.msra.mxu0 0
        %4716 = vmatprep.mubr.bf16.mxu0 0
        %4717 = vmatmul.mubr.bf16.gmra.mxu0 %v585
        %v4718 = vpop.f32.mrf.mxu0
        %v4719 = vadd.f32 %v1261, %v4718
        %v4720 = vpop.f32.mrf.mxu0
        %v4721 = vadd.f32 %v1265, %v4720
        %v4722 = vpop.f32.mrf.mxu0
        %v4723 = vpop.f32.mrf.mxu0
        %4724 = vdwg.mxu0
        %4725 = vmatprep.subr.bf16.mxu0 %v3289
        %4726 = vmatpush1.bf16.msra.mxu0 %v3288
        %4727 = vmatprep.subr.bf16.mxu0 %v3229
        %4728 = vmatpush1.bf16.msra.mxu0 %v3228
        %4729 = vmatprep.subr.bf16.mxu0 %v3169
        %4730 = vmatpush1.bf16.msra.mxu0 %v3168
        %4731 = vmatprep.subr.bf16.mxu0 %v3109
        %4732 = vmatpush1.bf16.msra.mxu0 %v3108
        %4733 = vmatprep.subr.bf16.mxu0 %v3049
        %4734 = vmatpush1.bf16.msra.mxu0 %v3048
        %4735 = vmatprep.subr.bf16.mxu0 %v2989
        %4736 = vmatpush1.bf16.msra.mxu0 %v2988
        %4737 = vmatprep.subr.bf16.mxu0 %v2929
        %4738 = vmatpush1.bf16.msra.mxu0 %v2928
        %4739 = vmatprep.subr.bf16.mxu0 %v2869
        %4740 = vmatpush1.bf16.msra.mxu0 %v2868
        %4741 = vmatprep.subr.bf16.mxu0 0
        %4742 = vmatpush2.bf16.msra.mxu0 0
        %4743 = vmatprep.subr.bf16.mxu0 0
        %4744 = vmatpush2.bf16.msra.mxu0 0
        %4745 = vmatprep.subr.bf16.mxu0 0
        %4746 = vmatpush2.bf16.msra.mxu0 0
        %4747 = vmatprep.subr.bf16.mxu0 0
        %4748 = vmatpush2.bf16.msra.mxu0 0
        %4749 = vmatprep.subr.bf16.mxu0 0
        %4750 = vmatpush2.bf16.msra.mxu0 0
        %4751 = vmatprep.subr.bf16.mxu0 0
        %4752 = vmatpush2.bf16.msra.mxu0 0
        %4753 = vmatprep.subr.bf16.mxu0 0
        %4754 = vmatpush2.bf16.msra.mxu0 0
        %4755 = vmatprep.subr.bf16.mxu0 0
        %4756 = vmatpush2.bf16.msra.mxu0 0
        %4757 = vmatprep.mubr.bf16.mxu0 0
        %4758 = vmatmul.mubr.bf16.gmra.mxu0 %v585
        %v4759 = vpop.f32.mrf.mxu0
        %v4760 = vadd.f32 %v1269, %v4759
        %v4761 = vpop.f32.mrf.mxu0
        %v4762 = vadd.f32 %v1273, %v4761
        %v4763 = vpop.f32.mrf.mxu0
        %v4764 = vpop.f32.mrf.mxu0
        %4765 = vdwg.mxu0
        %4766 = vmatprep.subr.bf16.mxu0 %v3291
        %4767 = vmatpush1.bf16.msra.mxu0 %v3290
        %4768 = vmatprep.subr.bf16.mxu0 %v3231
        %4769 = vmatpush1.bf16.msra.mxu0 %v3230
        %4770 = vmatprep.subr.bf16.mxu0 %v3171
        %4771 = vmatpush1.bf16.msra.mxu0 %v3170
        %4772 = vmatprep.subr.bf16.mxu0 %v3111
        %4773 = vmatpush1.bf16.msra.mxu0 %v3110
        %4774 = vmatprep.subr.bf16.mxu0 %v3051
        %4775 = vmatpush1.bf16.msra.mxu0 %v3050
        %4776 = vmatprep.subr.bf16.mxu0 %v2991
        %4777 = vmatpush1.bf16.msra.mxu0 %v2990
        %4778 = vmatprep.subr.bf16.mxu0 %v2931
        %4779 = vmatpush1.bf16.msra.mxu0 %v2930
        %4780 = vmatprep.subr.bf16.mxu0 %v2871
        %4781 = vmatpush1.bf16.msra.mxu0 %v2870
        %4782 = vmatprep.subr.bf16.mxu0 0
        %4783 = vmatpush2.bf16.msra.mxu0 0
        %4784 = vmatprep.subr.bf16.mxu0 0
        %4785 = vmatpush2.bf16.msra.mxu0 0
        %4786 = vmatprep.subr.bf16.mxu0 0
        %4787 = vmatpush2.bf16.msra.mxu0 0
        %4788 = vmatprep.subr.bf16.mxu0 0
        %4789 = vmatpush2.bf16.msra.mxu0 0
        %4790 = vmatprep.subr.bf16.mxu0 0
        %4791 = vmatpush2.bf16.msra.mxu0 0
        %4792 = vmatprep.subr.bf16.mxu0 0
        %4793 = vmatpush2.bf16.msra.mxu0 0
        %4794 = vmatprep.subr.bf16.mxu0 0
        %4795 = vmatpush2.bf16.msra.mxu0 0
        %4796 = vmatprep.subr.bf16.mxu0 0
        %4797 = vmatpush2.bf16.msra.mxu0 0
        %4798 = vmatprep.mubr.bf16.mxu0 0
        %4799 = vmatmul.mubr.bf16.gmra.mxu0 %v585
        %v4800 = vpop.f32.mrf.mxu0
        %v4801 = vadd.f32 %v1277, %v4800
        %v4802 = vpop.f32.mrf.mxu0
        %v4803 = vadd.f32 %v1281, %v4802
        %v4804 = vpop.f32.mrf.mxu0
        %v4805 = vpop.f32.mrf.mxu0
        %4806 = vdwg.mxu0
        %4807 = vmatprep.subr.bf16.mxu0 %v3293
        %4808 = vmatpush1.bf16.msra.mxu0 %v3292
        %4809 = vmatprep.subr.bf16.mxu0 %v3233
        %4810 = vmatpush1.bf16.msra.mxu0 %v3232
        %4811 = vmatprep.subr.bf16.mxu0 %v3173
        %4812 = vmatpush1.bf16.msra.mxu0 %v3172
        %4813 = vmatprep.subr.bf16.mxu0 %v3113
        %4814 = vmatpush1.bf16.msra.mxu0 %v3112
        %4815 = vmatprep.subr.bf16.mxu0 %v3053
        %4816 = vmatpush1.bf16.msra.mxu0 %v3052
        %4817 = vmatprep.subr.bf16.mxu0 %v2993
        %4818 = vmatpush1.bf16.msra.mxu0 %v2992
        %4819 = vmatprep.subr.bf16.mxu0 %v2933
        %4820 = vmatpush1.bf16.msra.mxu0 %v2932
        %4821 = vmatprep.subr.bf16.mxu0 %v2873
        %4822 = vmatpush1.bf16.msra.mxu0 %v2872
        %4823 = vmatprep.subr.bf16.mxu0 0
        %4824 = vmatpush2.bf16.msra.mxu0 0
        %4825 = vmatprep.subr.bf16.mxu0 0
        %4826 = vmatpush2.bf16.msra.mxu0 0
        %4827 = vmatprep.subr.bf16.mxu0 0
        %4828 = vmatpush2.bf16.msra.mxu0 0
        %4829 = vmatprep.subr.bf16.mxu0 0
        %4830 = vmatpush2.bf16.msra.mxu0 0
        %4831 = vmatprep.subr.bf16.mxu0 0
        %4832 = vmatpush2.bf16.msra.mxu0 0
        %4833 = vmatprep.subr.bf16.mxu0 0
        %4834 = vmatpush2.bf16.msra.mxu0 0
        %4835 = vmatprep.subr.bf16.mxu0 0
        %4836 = vmatpush2.bf16.msra.mxu0 0
        %4837 = vmatprep.subr.bf16.mxu0 0
        %4838 = vmatpush2.bf16.msra.mxu0 0
        %4839 = vmatprep.mubr.bf16.mxu0 0
        %4840 = vmatmul.mubr.bf16.gmra.mxu0 %v585
        %v4841 = vpop.f32.mrf.mxu0
        %v4842 = vadd.f32 %v1285, %v4841
        %v4843 = vpop.f32.mrf.mxu0
        %v4844 = vadd.f32 %v1289, %v4843
        %v4845 = vpop.f32.mrf.mxu0
        %v4846 = vpop.f32.mrf.mxu0
        %4847 = vdwg.mxu0
        %4848 = vmatprep.subr.bf16.mxu0 %v3295
        %4849 = vmatpush1.bf16.msra.mxu0 %v3294
        %4850 = vmatprep.subr.bf16.mxu0 %v3235
        %4851 = vmatpush1.bf16.msra.mxu0 %v3234
        %4852 = vmatprep.subr.bf16.mxu0 %v3175
        %4853 = vmatpush1.bf16.msra.mxu0 %v3174
        %4854 = vmatprep.subr.bf16.mxu0 %v3115
        %4855 = vmatpush1.bf16.msra.mxu0 %v3114
        %4856 = vmatprep.subr.bf16.mxu0 %v3055
        %4857 = vmatpush1.bf16.msra.mxu0 %v3054
        %4858 = vmatprep.subr.bf16.mxu0 %v2995
        %4859 = vmatpush1.bf16.msra.mxu0 %v2994
        %4860 = vmatprep.subr.bf16.mxu0 %v2935
        %4861 = vmatpush1.bf16.msra.mxu0 %v2934
        %4862 = vmatprep.subr.bf16.mxu0 %v2875
        %4863 = vmatpush1.bf16.msra.mxu0 %v2874
        %4864 = vmatprep.subr.bf16.mxu0 0
        %4865 = vmatpush2.bf16.msra.mxu0 0
        %4866 = vmatprep.subr.bf16.mxu0 0
        %4867 = vmatpush2.bf16.msra.mxu0 0
        %4868 = vmatprep.subr.bf16.mxu0 0
        %4869 = vmatpush2.bf16.msra.mxu0 0
        %4870 = vmatprep.subr.bf16.mxu0 0
        %4871 = vmatpush2.bf16.msra.mxu0 0
        %4872 = vmatprep.subr.bf16.mxu0 0
        %4873 = vmatpush2.bf16.msra.mxu0 0
        %4874 = vmatprep.subr.bf16.mxu0 0
        %4875 = vmatpush2.bf16.msra.mxu0 0
        %4876 = vmatprep.subr.bf16.mxu0 0
        %4877 = vmatpush2.bf16.msra.mxu0 0
        %4878 = vmatprep.subr.bf16.mxu0 0
        %4879 = vmatpush2.bf16.msra.mxu0 0
        %4880 = vmatprep.mubr.bf16.mxu0 0
        %4881 = vmatmul.mubr.bf16.gmra.mxu0 %v585
        %v4882 = vpop.f32.mrf.mxu0
        %v4883 = vadd.f32 %v1293, %v4882
        %v4884 = vpop.f32.mrf.mxu0
        %v4885 = vadd.f32 %v1297, %v4884
        %v4886 = vpop.f32.mrf.mxu0
        %v4887 = vpop.f32.mrf.mxu0
        %4888 = vdwg.mxu0
        %4889 = vmatprep.subr.bf16.mxu0 %v3297
        %4890 = vmatpush1.bf16.msra.mxu0 %v3296
        %4891 = vmatprep.subr.bf16.mxu0 %v3237
        %4892 = vmatpush1.bf16.msra.mxu0 %v3236
        %4893 = vmatprep.subr.bf16.mxu0 %v3177
        %4894 = vmatpush1.bf16.msra.mxu0 %v3176
        %4895 = vmatprep.subr.bf16.mxu0 %v3117
        %4896 = vmatpush1.bf16.msra.mxu0 %v3116
        %4897 = vmatprep.subr.bf16.mxu0 %v3057
        %4898 = vmatpush1.bf16.msra.mxu0 %v3056
        %4899 = vmatprep.subr.bf16.mxu0 %v2997
        %4900 = vmatpush1.bf16.msra.mxu0 %v2996
        %4901 = vmatprep.subr.bf16.mxu0 %v2937
        %4902 = vmatpush1.bf16.msra.mxu0 %v2936
        %4903 = vmatprep.subr.bf16.mxu0 %v2877
        %4904 = vmatpush1.bf16.msra.mxu0 %v2876
        %4905 = vmatprep.subr.bf16.mxu0 0
        %4906 = vmatpush2.bf16.msra.mxu0 0
        %4907 = vmatprep.subr.bf16.mxu0 0
        %4908 = vmatpush2.bf16.msra.mxu0 0
        %4909 = vmatprep.subr.bf16.mxu0 0
        %4910 = vmatpush2.bf16.msra.mxu0 0
        %4911 = vmatprep.subr.bf16.mxu0 0
        %4912 = vmatpush2.bf16.msra.mxu0 0
        %4913 = vmatprep.subr.bf16.mxu0 0
        %4914 = vmatpush2.bf16.msra.mxu0 0
        %4915 = vmatprep.subr.bf16.mxu0 0
        %4916 = vmatpush2.bf16.msra.mxu0 0
        %4917 = vmatprep.subr.bf16.mxu0 0
        %4918 = vmatpush2.bf16.msra.mxu0 0
        %4919 = vmatprep.subr.bf16.mxu0 0
        %4920 = vmatpush2.bf16.msra.mxu0 0
        %4921 = vmatprep.mubr.bf16.mxu0 0
        %4922 = vmatmul.mubr.bf16.gmra.mxu0 %v585
        %v4923 = vpop.f32.mrf.mxu0
        %v4924 = vadd.f32 %v1301, %v4923
        %v4925 = vpop.f32.mrf.mxu0
        %v4926 = vadd.f32 %v1305, %v4925
        %v4927 = vpop.f32.mrf.mxu0
        %v4928 = vpop.f32.mrf.mxu0
        %4929 = vdwg.mxu0
        %4930 = vmatprep.subr.bf16.mxu0 %v3299
        %4931 = vmatpush1.bf16.msra.mxu0 %v3298
        %4932 = vmatprep.subr.bf16.mxu0 %v3239
        %4933 = vmatpush1.bf16.msra.mxu0 %v3238
        %4934 = vmatprep.subr.bf16.mxu0 %v3179
        %4935 = vmatpush1.bf16.msra.mxu0 %v3178
        %4936 = vmatprep.subr.bf16.mxu0 %v3119
        %4937 = vmatpush1.bf16.msra.mxu0 %v3118
        %4938 = vmatprep.subr.bf16.mxu0 %v3059
        %4939 = vmatpush1.bf16.msra.mxu0 %v3058
        %4940 = vmatprep.subr.bf16.mxu0 %v2999
        %4941 = vmatpush1.bf16.msra.mxu0 %v2998
        %4942 = vmatprep.subr.bf16.mxu0 %v2939
        %4943 = vmatpush1.bf16.msra.mxu0 %v2938
        %4944 = vmatprep.subr.bf16.mxu0 %v2879
        %4945 = vmatpush1.bf16.msra.mxu0 %v2878
        %4946 = vmatprep.subr.bf16.mxu0 0
        %4947 = vmatpush2.bf16.msra.mxu0 0
        %4948 = vmatprep.subr.bf16.mxu0 0
        %4949 = vmatpush2.bf16.msra.mxu0 0
        %4950 = vmatprep.subr.bf16.mxu0 0
        %4951 = vmatpush2.bf16.msra.mxu0 0
        %4952 = vmatprep.subr.bf16.mxu0 0
        %4953 = vmatpush2.bf16.msra.mxu0 0
        %4954 = vmatprep.subr.bf16.mxu0 0
        %4955 = vmatpush2.bf16.msra.mxu0 0
        %4956 = vmatprep.subr.bf16.mxu0 0
        %4957 = vmatpush2.bf16.msra.mxu0 0
        %4958 = vmatprep.subr.bf16.mxu0 0
        %4959 = vmatpush2.bf16.msra.mxu0 0
        %4960 = vmatprep.subr.bf16.mxu0 0
        %4961 = vmatpush2.bf16.msra.mxu0 0
        %4962 = vmatprep.mubr.bf16.mxu0 0
        %4963 = vmatmul.mubr.bf16.gmra.mxu0 %v585
        %v4964 = vpop.f32.mrf.mxu0
        %v4965 = vadd.f32 %v1309, %v4964
        %v4966 = vpop.f32.mrf.mxu0
        %v4967 = vadd.f32 %v1313, %v4966
        %v4968 = vpop.f32.mrf.mxu0
        %v4969 = vpop.f32.mrf.mxu0
        %4970 = vdwg.mxu0
        %4971 = vmatprep.subr.bf16.mxu0 %v3301
        %4972 = vmatpush1.bf16.msra.mxu0 %v3300
        %4973 = vmatprep.subr.bf16.mxu0 %v3241
        %4974 = vmatpush1.bf16.msra.mxu0 %v3240
        %4975 = vmatprep.subr.bf16.mxu0 %v3181
        %4976 = vmatpush1.bf16.msra.mxu0 %v3180
        %4977 = vmatprep.subr.bf16.mxu0 %v3121
        %4978 = vmatpush1.bf16.msra.mxu0 %v3120
        %4979 = vmatprep.subr.bf16.mxu0 %v3061
        %4980 = vmatpush1.bf16.msra.mxu0 %v3060
        %4981 = vmatprep.subr.bf16.mxu0 %v3001
        %4982 = vmatpush1.bf16.msra.mxu0 %v3000
        %4983 = vmatprep.subr.bf16.mxu0 %v2941
        %4984 = vmatpush1.bf16.msra.mxu0 %v2940
        %4985 = vmatprep.subr.bf16.mxu0 %v2881
        %4986 = vmatpush1.bf16.msra.mxu0 %v2880
        %4987 = vmatprep.subr.bf16.mxu0 0
        %4988 = vmatpush2.bf16.msra.mxu0 0
        %4989 = vmatprep.subr.bf16.mxu0 0
        %4990 = vmatpush2.bf16.msra.mxu0 0
        %4991 = vmatprep.subr.bf16.mxu0 0
        %4992 = vmatpush2.bf16.msra.mxu0 0
        %4993 = vmatprep.subr.bf16.mxu0 0
        %4994 = vmatpush2.bf16.msra.mxu0 0
        %4995 = vmatprep.subr.bf16.mxu0 0
        %4996 = vmatpush2.bf16.msra.mxu0 0
        %4997 = vmatprep.subr.bf16.mxu0 0
        %4998 = vmatpush2.bf16.msra.mxu0 0
        %4999 = vmatprep.subr.bf16.mxu0 0
        %5000 = vmatpush2.bf16.msra.mxu0 0
        %5001 = vmatprep.subr.bf16.mxu0 0
        %5002 = vmatpush2.bf16.msra.mxu0 0
        %5003 = vmatprep.mubr.bf16.mxu0 0
        %5004 = vmatmul.mubr.bf16.gmra.mxu0 %v585
        %v5005 = vpop.f32.mrf.mxu0
        %v5006 = vadd.f32 %v1317, %v5005
        %v5007 = vpop.f32.mrf.mxu0
        %v5008 = vadd.f32 %v1321, %v5007
        %v5009 = vpop.f32.mrf.mxu0
        %v5010 = vpop.f32.mrf.mxu0
        %5011 = vdwg.mxu0
        %v5012 = vtanh.pop %v3817
        %v5013 = vtanh.pop %v3819
        %v5014 = vtanh.pop %v3858
        %v5015 = vtanh.pop %v3860
        %v5016 = vtanh.pop %v3899
        %v5017 = vtanh.pop %v3901
        %v5018 = vtanh.pop %v3940
        %v5019 = vtanh.pop %v3942
        %v5020 = vtanh.pop %v3981
        %v5021 = vtanh.pop %v3983
        %v5022 = vtanh.pop %v4022
        %v5023 = vtanh.pop %v4024
        %v5024 = vtanh.pop %v4063
        %v5025 = vtanh.pop %v4065
        %v5026 = vtanh.pop %v4104
        %v5027 = vtanh.pop %v4106
        %v5028 = vtanh.pop %v4145
        %v5029 = vtanh.pop %v4147
        %v5030 = vtanh.pop %v4186
        %v5031 = vtanh.pop %v4188
        %v5032 = vtanh.pop %v4227
        %v5033 = vtanh.pop %v4229
        %v5034 = vtanh.pop %v4268
        %v5035 = vtanh.pop %v4270
        %v5036 = vtanh.pop %v4309
        %v5037 = vtanh.pop %v4311
        %v5038 = vtanh.pop %v4350
        %v5039 = vtanh.pop %v4352
        %v5040 = vtanh.pop %v4391
        %v5041 = vtanh.pop %v4393
        %v5042 = vtanh.pop %v4432
        %v5043 = vtanh.pop %v4434
        %v5044 = vtanh.pop %v4473
        %v5045 = vtanh.pop %v4475
        %v5046 = vtanh.pop %v4514
        %v5047 = vtanh.pop %v4516
        %v5048 = vtanh.pop %v4555
        %v5049 = vtanh.pop %v4557
        %v5050 = vtanh.pop %v4596
        %v5051 = vtanh.pop %v4598
        %v5052 = vtanh.pop %v4637
        %v5053 = vtanh.pop %v4639
        %v5054 = vtanh.pop %v4678
        %v5055 = vtanh.pop %v4680
        %v5056 = vtanh.pop %v4719
        %v5057 = vtanh.pop %v4721
        %v5058 = vtanh.pop %v4760
        %v5059 = vtanh.pop %v4762
        %v5060 = vtanh.pop %v4801
        %v5061 = vtanh.pop %v4803
        %v5062 = vtanh.pop %v4842
        %v5063 = vtanh.pop %v4844
        %v5064 = vtanh.pop %v4883
        %v5065 = vtanh.pop %v4885
        %v5066 = vtanh.pop %v4924
        %v5067 = vtanh.pop %v4926
        %v5068 = vtanh.pop %v4965
        %v5069 = vtanh.pop %v4967
        %v5070 = vtanh.pop %v5006
        %v5071 = vtanh.pop %v5008
        %5072 = vst [vmem:[%s387] sm:$0xff] %v5012
        %5073 = vst [vmem:[%s387 + $0x8] sm:$0xff] %v5013
        %5074 = vst [vmem:[%s387 + $0x10] sm:$0xff] %v5014
        %5075 = vst [vmem:[%s387 + $0x18] sm:$0xff] %v5015
        %5076 = vst [vmem:[%s387 + $0x20] sm:$0xff] %v5016
        %5077 = vst [vmem:[%s387 + $0x28] sm:$0xff] %v5017
        %5078 = vst [vmem:[%s387 + $0x30] sm:$0xff] %v5018
        %5079 = vst [vmem:[%s387 + $0x38] sm:$0xff] %v5019
        %5080 = vst [vmem:[%s387 + $0x40] sm:$0xff] %v5020
        %5081 = vst [vmem:[%s387 + $0x48] sm:$0xff] %v5021
        %5082 = vst [vmem:[%s387 + $0x50] sm:$0xff] %v5022
        %5083 = vst [vmem:[%s387 + $0x58] sm:$0xff] %v5023
        %5084 = vst [vmem:[%s387 + $0x60] sm:$0xff] %v5024
        %5085 = vst [vmem:[%s387 + $0x68] sm:$0xff] %v5025
        %5086 = vst [vmem:[%s387 + $0x70] sm:$0xff] %v5026
        %5087 = vst [vmem:[%s387 + $0x78] sm:$0xff] %v5027
        %5088 = vst [vmem:[%s387 + $0x80] sm:$0xff] %v5028
        %5089 = vst [vmem:[%s387 + $0x88] sm:$0xff] %v5029
        %5090 = vst [vmem:[%s387 + $0x90] sm:$0xff] %v5030
        %5091 = vst [vmem:[%s387 + $0x98] sm:$0xff] %v5031
        %5092 = vst [vmem:[%s387 + $0xa0] sm:$0xff] %v5032
        %5093 = vst [vmem:[%s387 + $0xa8] sm:$0xff] %v5033
        %5094 = vst [vmem:[%s387 + $0xb0] sm:$0xff] %v5034
        %5095 = vst [vmem:[%s387 + $0xb8] sm:$0xff] %v5035
        %5096 = vst [vmem:[%s387 + $0xc0] sm:$0xff] %v5036
        %5097 = vst [vmem:[%s387 + $0xc8] sm:$0xff] %v5037
        %5098 = vst [vmem:[%s387 + $0xd0] sm:$0xff] %v5038
        %5099 = vst [vmem:[%s387 + $0xd8] sm:$0xff] %v5039
        %5100 = vst [vmem:[%s387 + $0xe0] sm:$0xff] %v5040
        %5101 = vst [vmem:[%s387 + $0xe8] sm:$0xff] %v5041
        %5102 = vst [vmem:[%s387 + $0xf0] sm:$0xff] %v5042
        %5103 = vst [vmem:[%s387 + $0xf8] sm:$0xff] %v5043
        %5104 = vst [vmem:[%s387 + $0x100] sm:$0xff] %v5044
        %5105 = vst [vmem:[%s387 + $0x108] sm:$0xff] %v5045
        %5106 = vst [vmem:[%s387 + $0x110] sm:$0xff] %v5046
        %5107 = vst [vmem:[%s387 + $0x118] sm:$0xff] %v5047
        %5108 = vst [vmem:[%s387 + $0x120] sm:$0xff] %v5048
        %5109 = vst [vmem:[%s387 + $0x128] sm:$0xff] %v5049
        %5110 = vst [vmem:[%s387 + $0x130] sm:$0xff] %v5050
        %5111 = vst [vmem:[%s387 + $0x138] sm:$0xff] %v5051
        %5112 = vst [vmem:[%s387 + $0x140] sm:$0xff] %v5052
        %5113 = vst [vmem:[%s387 + $0x148] sm:$0xff] %v5053
        %5114 = vst [vmem:[%s387 + $0x150] sm:$0xff] %v5054
        %5115 = vst [vmem:[%s387 + $0x158] sm:$0xff] %v5055
        %5116 = vst [vmem:[%s387 + $0x160] sm:$0xff] %v5056
        %5117 = vst [vmem:[%s387 + $0x168] sm:$0xff] %v5057
        %5118 = vst [vmem:[%s387 + $0x170] sm:$0xff] %v5058
        %5119 = vst [vmem:[%s387 + $0x178] sm:$0xff] %v5059
        %5120 = vst [vmem:[%s387 + $0x180] sm:$0xff] %v5060
        %5121 = vst [vmem:[%s387 + $0x188] sm:$0xff] %v5061
        %5122 = vst [vmem:[%s387 + $0x190] sm:$0xff] %v5062
        %5123 = vst [vmem:[%s387 + $0x198] sm:$0xff] %v5063
        %5124 = vst [vmem:[%s387 + $0x1a0] sm:$0xff] %v5064
        %5125 = vst [vmem:[%s387 + $0x1a8] sm:$0xff] %v5065
        %5126 = vst [vmem:[%s387 + $0x1b0] sm:$0xff] %v5066
        %5127 = vst [vmem:[%s387 + $0x1b8] sm:$0xff] %v5067
        %5128 = vst [vmem:[%s387 + $0x1c0] sm:$0xff] %v5068
        %5129 = vst [vmem:[%s387 + $0x1c8] sm:$0xff] %v5069
        %5130 = vst [vmem:[%s387 + $0x1d0] sm:$0xff] %v5070
        %5131 = vst [vmem:[%s387 + $0x1d8] sm:$0xff] %v5071
        %s5132 = smul.u32 60, %s21
        %p5133 = scmp.lt.s32.totalorder %s5132, 239
        %s5134 = scalar_select %p5133, %s5132, 239
        %s5135 = smul.addr %s5134, 8
        %s5136 = scalar_lea.vmem %s7, %s5135
        // Predicated region
        $region73: #{biomime_forward.1} parent=47 // pred_check
          %p5137 = pneg %p196
        $region74: #{biomime_forward.1} parent=47 // pred_check_branch
          %5139 = sbr.rel (%p5137) target = $region76
        $region75: #{biomime_forward.1} parent=47 // pred_region
          %s5140 = smul.u32 60, %s21
        $region76: #{biomime_forward.1} parent=47 // pred_fallthru
          _
      $region48: #{biomime_forward.1} parent=5 // pred_fallthru
        _
      %p5141 = scmp.le.s32.totalorder 2, %s16
      // Predicated region
      $region77: #{biomime_forward.1} parent=5 // pred_check
        %p5142 = pneg %p5141
      $region78: #{biomime_forward.1} parent=5 // pred_check_branch
        %5144 = sbr.rel (%p5142) target = $region80
      $region79: #{biomime_forward.1} parent=5 // pred_region
        %s5145 = ssub.s32 %s16, 2
        // Predicated region
        $region81: #{biomime_forward.1} parent=79 // pred_check
          %p5146 = pneg %p202
        $region82: #{biomime_forward.1} parent=79 // pred_check_branch
          %5148 = sbr.rel (%p5146) target = $region84
        $region83: #{biomime_forward.1} parent=79 // pred_region
          %s5149 = smul.u32 60, %s22
          %p5150 = scmp.lt.s32.totalorder %s5149, 239
          %s5151 = scalar_select %p5150, %s5149, 239
          %s5152 = smul.addr %s5151, 8
          %s5153 = scalar_lea.vmem %s7, %s5152
        $region84: #{biomime_forward.1} parent=79 // pred_fallthru
          _
      $region80: #{biomime_forward.1} parent=5 // pred_fallthru
        _
    $region6: #{biomime_forward.1} parent=1 // loop_footer
      %s20 = sadd.s32 1, %s16
    $region7: #{biomime_forward.1} parent=1 // loop_footer_branch
      %15 = sbr.rel target = $region3
    $region8: #{biomime_forward.1} parent=1 // loop_exit
      _
    %5154 = vsyncpa [#allocation3], 1
    %s5155 = scalar_lea.sflag [#allocation3], 1
    %5156 = vsyncpa %s5155, 1
    %5157 = vsyncpa [#allocation5], 1
    %5158 = vsyncpa [#allocation8], 1

</llo_original>
